<compile_context>
chip_gen: v7x
topology: tpu7x:2x2x1
jax: 0.10.0
libtpu: 0.0.40
codegen_flags: <defaults>
</compile_context>

<pallas_src>
import jax
import jax.numpy as jnp
from jax.experimental import pallas as pl
from jax.experimental.pallas import tpu as pltpu

# ---- small, TPU-friendly hyper-parameters consistent with the module ----
VOCAB_SIZE = 64
N_EMBED = 128          # n_embed
BLOCK_SIZE = 16        # block_size (max sequence length)
N_HEADS = 4
HEAD_SIZE = N_EMBED // N_HEADS
N_LAYERS = 2
LN_EPS = 1e-5
V_PAD = 128            # lane-dense padded vocab for the lm_head output
NEG_BIAS = -1e9        # finite additive mask (NaN-safe, per review)


def _layernorm(x, g, b):
    mu = jnp.mean(x, axis=-1, keepdims=True)
    var = jnp.mean((x - mu) ** 2, axis=-1, keepdims=True)
    return (x - mu) * jax.lax.rsqrt(var + LN_EPS) * g + b


# ---------------------------------------------------------------------------
# Fused kernel: grid = (N_LAYERS,); one transformer block per grid step,
# final LN + lm_head on the last step. Residual stream stays in VMEM scratch.
# ---------------------------------------------------------------------------
def blm_kernel(x_ref, maskb_ref, wqkv_ref, wo_ref, bo_ref,
               ln1g_ref, ln1b_ref, ln2g_ref, ln2b_ref,
               w1_ref, b1_ref, w2_ref, b2_ref,
               lnfg_ref, lnfb_ref, lmw_ref, lmb_ref,
               out_ref, x_scr):
    l = pl.program_id(0)
    bf16, f32 = jnp.bfloat16, jnp.float32
    D = N_EMBED

    @pl.when(l == 0)
    def _():
        x_scr[...] = x_ref[...]

    x = x_scr[...]                            # (N, D) f32 residual, N = B*T
    mask_bias = maskb_ref[...]                # (N, N) f32 additive causal mask

    def mm(a, b):                             # bf16 MXU operands, f32 accumulation
        return jnp.dot(a, b, preferred_element_type=f32)

    def mm_nt(a, b):                          # a @ b.T (contract last dims)
        return jax.lax.dot_general(a, b, (((1,), (1,)), ((), ())),
                                   preferred_element_type=f32)

    # PyTorch code uses C**-0.5 with C = n_embed (not head_size).
    scale = 1.0 / jnp.sqrt(jnp.float32(D))

    # ---- pre-LN + causal multi-head attention (fused QKV, single out-proj) ----
    xn = _layernorm(x, ln1g_ref[...], ln1b_ref[...])
    qkv = mm(xn.astype(bf16), wqkv_ref[...])               # (N, 3D) f32
    q_bf = (qkv[:, :D] * scale).astype(bf16)               # scale folded pre-QK^T
    k_bf = qkv[:, D:2 * D].astype(bf16)
    v_bf = qkv[:, 2 * D:3 * D].astype(bf16)

    heads = []
    for h in range(N_HEADS):
        sl = slice(h * HEAD_SIZE, (h + 1) * HEAD_SIZE)
        wei = mm_nt(q_bf[:, sl], k_bf[:, sl]) + mask_bias  # (N, N) f32
        wei = wei - jnp.max(wei, axis=-1, keepdims=True)
        p = jnp.exp(wei)
        p = p * pl.reciprocal(jnp.sum(p, axis=-1, keepdims=True), approx=True)
        heads.append(mm(p.astype(bf16), v_bf[:, sl]))      # (N, hs)
    att = jnp.concatenate(heads, axis=-1)                  # (N, D) lane concat
    x = x + mm(att.astype(bf16), wo_ref[...]) + bo_ref[...]   # one K=D out-proj

    # ---- pre-LN + MLP ----
    xn2 = _layernorm(x, ln2g_ref[...], ln2b_ref[...])
    hid = jnp.maximum(mm(xn2.astype(bf16), w1_ref[...]) + b1_ref[...], 0.0)
    x = x + mm(hid.astype(bf16), w2_ref[...]) + b2_ref[...]
    x_scr[...] = x

    # ---- final LayerNorm + lm_head (lane-dense 128-wide output), last step ----
    @pl.when(l == pl.num_programs(0) - 1)
    def _():
        xf = _layernorm(x, lnfg_ref[...], lnfb_ref[...])
        out_ref[...] = mm(xf.astype(bf16), lmw_ref[...]) + lmb_ref[...]


def _layer_spec(arr):
    # (L, ...) stacked weight: one layer's slice per grid step, leading dim squeezed.
    nd = arr.ndim
    return pl.BlockSpec((None,) + arr.shape[1:],
                        lambda l, _n=nd: (l,) + (0,) * (_n - 1))


def _rep_spec(arr):
    # Full-array block, same block every step (loaded once, stays resident).
    nd = arr.ndim
    return pl.BlockSpec(arr.shape, lambda l, _n=nd: (0,) * _n)


def blm_forward(idx, params):
    B, T = idx.shape
    D = N_EMBED
    # Embedding gather stays as plain-JAX glue.
    tok = jnp.take(params["tok_emb"], idx, axis=0)               # (B, T, D)
    x = (tok + params["pos_emb"][:T][None]).reshape(B * T, D).astype(jnp.float32)
    n_rows = B * T

    # Block-diagonal causal ADDITIVE mask bias, computed once outside the kernel.
    row = jnp.arange(n_rows)[:, None]
    col = jnp.arange(n_rows)[None, :]
    keep = (row >= col) & ((row // T) == (col // T))
    mask_bias = jnp.where(keep, 0.0, NEG_BIAS).astype(jnp.float32)

    per_layer = (params["wqkv"], params["wo"], params["bo"],
                 params["ln1_g"], params["ln1_b"], params["ln2_g"], params["ln2_b"],
                 params["w1"], params["b1"], params["w2"], params["b2"])
    shared = (params["ln_f_g"], params["ln_f_b"], params["lm_w"], params["lm_b"])

    in_specs = ([_rep_spec(x), _rep_spec(mask_bias)]
                + [_layer_spec(a) for a in per_layer]
                + [_rep_spec(a) for a in shared])

    logits = pl.pallas_call(
        blm_kernel,
        out_shape=jax.ShapeDtypeStruct((n_rows, V_PAD), jnp.float32),
        grid=(N_LAYERS,),
        in_specs=in_specs,
        out_specs=pl.BlockSpec((n_rows, V_PAD), lambda l: (0, 0)),
        scratch_shapes=[pltpu.VMEM((n_rows, D), jnp.float32)],   # residual stream
        compiler_params=pltpu.CompilerParams(dimension_semantics=("arbitrary",)),
    )(x, mask_bias, *per_layer, *shared)

    return logits[:, :VOCAB_SIZE].reshape(B, T, VOCAB_SIZE)


# ---------------------------------------------------------------------------
# Parameter init (deterministic, synthetic); per-layer weights stacked (L, ...).
# ---------------------------------------------------------------------------
def init_params(key):
    f32, bf16 = jnp.float32, jnp.bfloat16
    D, H4, L = N_EMBED, 4 * N_EMBED, N_LAYERS

    def nrm(k, shape, dtype, std=0.02):
        return (std * jax.random.normal(k, shape, dtype=jnp.float32)).astype(dtype)

    ks = iter(jax.random.split(key, 16))

    lm_w = jnp.zeros((D, V_PAD), f32).at[:, :VOCAB_SIZE].set(
        nrm(next(ks), (D, VOCAB_SIZE), f32))
    lm_b = jnp.zeros((1, V_PAD), f32).at[:, :VOCAB_SIZE].set(
        nrm(next(ks), (1, VOCAB_SIZE), f32))

    return {
        "tok_emb": nrm(next(ks), (VOCAB_SIZE, D), f32),
        "pos_emb": nrm(next(ks), (BLOCK_SIZE, D), f32),
        # fused QKV weight (in, 3*out) = [Wq^T | Wk^T | Wv^T], bf16 MXU operands
        "wqkv": nrm(next(ks), (L, D, 3 * D), bf16),
        "wo": nrm(next(ks), (L, D, D), bf16),
        "bo": nrm(next(ks), (L, 1, D), f32),
        "w1": nrm(next(ks), (L, D, H4), bf16),
        "b1": nrm(next(ks), (L, 1, H4), f32),
        "w2": nrm(next(ks), (L, H4, D), bf16),
        "b2": nrm(next(ks), (L, 1, D), f32),
        "ln1_g": jnp.ones((L, 1, D), f32), "ln1_b": jnp.zeros((L, 1, D), f32),
        "ln2_g": jnp.ones((L, 1, D), f32), "ln2_b": jnp.zeros((L, 1, D), f32),
        "ln_f_g": jnp.ones((1, D), f32), "ln_f_b": jnp.zeros((1, D), f32),
        "lm_w": lm_w.astype(bf16), "lm_b": lm_b,
    }


# ---------------------------------------------------------------------------
# Pure-JAX reference (same bf16 matmul-operand precision) for correctness.
# ---------------------------------------------------------------------------
def _ref_ln(x, g, b):
    mu = x.mean(-1, keepdims=True)
    var = ((x - mu) ** 2).mean(-1, keepdims=True)
    return (x - mu) / jnp.sqrt(var + LN_EPS) * g + b


def blm_forward_ref(idx, params):
    B, T = idx.shape
    D = N_EMBED
    x = (jnp.take(params["tok_emb"], idx, axis=0)
         + params["pos_emb"][:T][None]).reshape(B * T, D).astype(jnp.float32)
    n = B * T
    row = jnp.arange(n)[:, None]
    col = jnp.arange(n)[None, :]
    mask = (row >= col) & ((row // T) == (col // T))
    scale = 1.0 / jnp.sqrt(jnp.float32(D))

    def mm(a, b):
        return jnp.dot(a.astype(jnp.bfloat16), b.astype(jnp.bfloat16),
                       preferred_element_type=jnp.float32)

    for l in range(N_LAYERS):
        xn = _ref_ln(x, params["ln1_g"][l], params["ln1_b"][l])
        qkv = mm(xn, params["wqkv"][l])
        q = qkv[:, :D] * scale
        k = qkv[:, D:2 * D]
        v = qkv[:, 2 * D:3 * D]
        heads = []
        for h in range(N_HEADS):
            sl = slice(h * HEAD_SIZE, (h + 1) * HEAD_SIZE)
            wei = mm(q[:, sl], k[:, sl].T)
            wei = jnp.where(mask, wei, -jnp.inf)
            p = jax.nn.softmax(wei, axis=-1)
            heads.append(mm(p, v[:, sl]))
        att = jnp.concatenate(heads, axis=-1)
        x = x + mm(att, params["wo"][l]) + params["bo"][l]
        xn2 = _ref_ln(x, params["ln2_g"][l], params["ln2_b"][l])
        hid = jnp.maximum(mm(xn2, params["w1"][l]) + params["b1"][l], 0.0)
        x = x + mm(hid, params["w2"][l]) + params["b2"][l]

    xf = _ref_ln(x, params["ln_f_g"], params["ln_f_b"])
    logits = mm(xf, params["lm_w"]) + params["lm_b"]
    return logits[:, :VOCAB_SIZE].reshape(B, T, VOCAB_SIZE)


if __name__ == "__main__":
    key = jax.random.PRNGKey(0)
    pkey, dkey = jax.random.split(key)
    params = init_params(pkey)

    B, T = 2, BLOCK_SIZE                   # (2, 16) token ids
    idx = jax.random.randint(dkey, (B, T), 0, VOCAB_SIZE, dtype=jnp.int32)

    logits = jax.block_until_ready(blm_forward(idx, params))
    ref = blm_forward_ref(idx, params)

    assert logits.shape == (B, T, VOCAB_SIZE)
    assert bool(jnp.all(jnp.isfinite(logits)))
    assert bool(jnp.allclose(logits, ref, rtol=5e-3, atol=5e-3)), "mismatch vs reference"

    print("KERNEL_OK")
</pallas_src>

<mosaic_0001>
module attributes {stable_mosaic.version = 11 : i64} {
  func.func @blm_kernel(%arg0: i32, %arg1: memref<32x128xf32, #tpu.memory_space<vmem>>, %arg2: memref<32x32xf32, #tpu.memory_space<vmem>>, %arg3: memref<1x128x384xbf16, #tpu.memory_space<vmem>>, %arg4: memref<1x128x128xbf16, #tpu.memory_space<vmem>>, %arg5: memref<1x1x128xf32, #tpu.memory_space<vmem>>, %arg6: memref<1x1x128xf32, #tpu.memory_space<vmem>>, %arg7: memref<1x1x128xf32, #tpu.memory_space<vmem>>, %arg8: memref<1x1x128xf32, #tpu.memory_space<vmem>>, %arg9: memref<1x1x128xf32, #tpu.memory_space<vmem>>, %arg10: memref<1x128x512xbf16, #tpu.memory_space<vmem>>, %arg11: memref<1x1x512xf32, #tpu.memory_space<vmem>>, %arg12: memref<1x512x128xbf16, #tpu.memory_space<vmem>>, %arg13: memref<1x1x128xf32, #tpu.memory_space<vmem>>, %arg14: memref<1x128xf32, #tpu.memory_space<vmem>>, %arg15: memref<1x128xf32, #tpu.memory_space<vmem>>, %arg16: memref<128x128xbf16, #tpu.memory_space<vmem>>, %arg17: memref<1x128xf32, #tpu.memory_space<vmem>>, %arg18: memref<32x128xf32, #tpu.memory_space<vmem>>, %arg19: memref<32x128xf32, #tpu.memory_space<vmem>>) attributes {dimension_semantics = [#tpu.dimension_semantics<arbitrary>], iteration_bounds = array<i64: 2>, scalar_prefetch = 0 : i64, scratch_operands = 1 : i64, tpu.core_type = #tpu.core_type<tc>, window_params = [{pipeline_mode = #tpu.pipeline_mode<synchronous>, transform_indices = @transform_0, window_bounds = array<i64: 32, 128>}, {pipeline_mode = #tpu.pipeline_mode<synchronous>, transform_indices = @transform_1, window_bounds = array<i64: 32, 32>}, {transform_indices = @transform_2, window_bounds = array<i64: 1, 128, 384>}, {transform_indices = @transform_3, window_bounds = array<i64: 1, 128, 128>}, {transform_indices = @transform_4, window_bounds = array<i64: 1, 1, 128>}, {transform_indices = @transform_5, window_bounds = array<i64: 1, 1, 128>}, {transform_indices = @transform_6, window_bounds = array<i64: 1, 1, 128>}, {transform_indices = @transform_7, window_bounds = array<i64: 1, 1, 128>}, {transform_indices = @transform_8, window_bounds = array<i64: 1, 1, 128>}, {transform_indices = @transform_9, window_bounds = array<i64: 1, 128, 512>}, {transform_indices = @transform_10, window_bounds = array<i64: 1, 1, 512>}, {transform_indices = @transform_11, window_bounds = array<i64: 1, 512, 128>}, {transform_indices = @transform_12, window_bounds = array<i64: 1, 1, 128>}, {pipeline_mode = #tpu.pipeline_mode<synchronous>, transform_indices = @transform_13, window_bounds = array<i64: 1, 128>}, {pipeline_mode = #tpu.pipeline_mode<synchronous>, transform_indices = @transform_14, window_bounds = array<i64: 1, 128>}, {pipeline_mode = #tpu.pipeline_mode<synchronous>, transform_indices = @transform_15, window_bounds = array<i64: 128, 128>}, {pipeline_mode = #tpu.pipeline_mode<synchronous>, transform_indices = @transform_16, window_bounds = array<i64: 1, 128>}, {pipeline_mode = #tpu.pipeline_mode<synchronous>, transform_indices = @transform_17, window_bounds = array<i64: 32, 128>}]} {
    %c0_i32 = arith.constant 0 : i32
    %0 = arith.cmpi eq, %arg0, %c0_i32 : i32
    %1 = arith.extui %0 : i1 to i32
    %c0_i32_0 = arith.constant 0 : i32
    %2 = arith.cmpi ne, %1, %c0_i32_0 : i32
    scf.if %2 {
      %c0_72 = arith.constant 0 : index
      %c0_73 = arith.constant 0 : index
      %172 = vector.load %arg1[%c0_72, %c0_73] : memref<32x128xf32, #tpu.memory_space<vmem>>, vector<32x128xf32>
      %c0_74 = arith.constant 0 : index
      %c0_75 = arith.constant 0 : index
      %173 = vector.load %arg19[%c0_74, %c0_75] : memref<32x128xf32, #tpu.memory_space<vmem>>, vector<32x128xf32>
      tpu.vector_store %arg19[%c0_74, %c0_75], %172 {strides = array<i32>} : memref<32x128xf32, #tpu.memory_space<vmem>>, vector<32x128xf32>,
    } else {
    }
    %c0 = arith.constant 0 : index
    %c0_1 = arith.constant 0 : index
    %3 = vector.load %arg19[%c0, %c0_1] : memref<32x128xf32, #tpu.memory_space<vmem>>, vector<32x128xf32>
    %c0_2 = arith.constant 0 : index
    %c0_3 = arith.constant 0 : index
    %4 = vector.load %arg2[%c0_2, %c0_3] : memref<32x32xf32, #tpu.memory_space<vmem>>, vector<32x32xf32>
    %cst = arith.constant 1.280000e+02 : f32
    %5 = math.sqrt %cst : f32
    %cst_4 = arith.constant 1.000000e+00 : f32
    %6 = arith.divf %cst_4, %5 : f32
    %c0_5 = arith.constant 0 : index
    %c0_6 = arith.constant 0 : index
    %c0_7 = arith.constant 0 : index
    %7 = vector.load %arg6[%c0_5, %c0_6, %c0_7] : memref<1x1x128xf32, #tpu.memory_space<vmem>>, vector<1x1x128xf32>
    %8 = vector.shape_cast %7 : vector<1x1x128xf32> to vector<1x128xf32>
    %c0_8 = arith.constant 0 : index
    %c0_9 = arith.constant 0 : index
    %c0_10 = arith.constant 0 : index
    %9 = vector.load %arg7[%c0_8, %c0_9, %c0_10] : memref<1x1x128xf32, #tpu.memory_space<vmem>>, vector<1x1x128xf32>
    %10 = vector.shape_cast %9 : vector<1x1x128xf32> to vector<1x128xf32>
    %cst_11 = arith.constant dense<0.000000e+00> : vector<32xf32>
    %11 = vector.multi_reduction <add>, %3, %cst_11 [1] : vector<32x128xf32> to vector<32xf32>
    %12 = vector.shape_cast %11 : vector<32xf32> to vector<32x1xf32>
    %cst_12 = arith.constant 1.280000e+02 : f32
    %13 = vector.broadcast %cst_12 : f32 to vector<32x1xf32>
    %14 = arith.divf %12, %13 : vector<32x1xf32>
    %15 = vector.broadcast %14 : vector<32x1xf32> to vector<32x128xf32>
    %16 = arith.subf %3, %15 : vector<32x128xf32>
    %17 = arith.mulf %16, %16 : vector<32x128xf32>
    %cst_13 = arith.constant dense<0.000000e+00> : vector<32xf32>
    %18 = vector.multi_reduction <add>, %17, %cst_13 [1] : vector<32x128xf32> to vector<32xf32>
    %19 = vector.shape_cast %18 : vector<32xf32> to vector<32x1xf32>
    %cst_14 = arith.constant 1.280000e+02 : f32
    %20 = vector.broadcast %cst_14 : f32 to vector<32x1xf32>
    %21 = arith.divf %19, %20 : vector<32x1xf32>
    %22 = vector.broadcast %14 : vector<32x1xf32> to vector<32x128xf32>
    %23 = arith.subf %3, %22 : vector<32x128xf32>
    %cst_15 = arith.constant 9.99999974E-6 : f32
    %24 = vector.broadcast %cst_15 : f32 to vector<32x1xf32>
    %25 = arith.addf %21, %24 : vector<32x1xf32>
    %26 = math.rsqrt %25 : vector<32x1xf32>
    %27 = vector.broadcast %26 : vector<32x1xf32> to vector<32x128xf32>
    %28 = arith.mulf %23, %27 : vector<32x128xf32>
    %29 = vector.broadcast %8 : vector<1x128xf32> to vector<32x128xf32>
    %30 = arith.mulf %28, %29 : vector<32x128xf32>
    %31 = vector.broadcast %10 : vector<1x128xf32> to vector<32x128xf32>
    %32 = arith.addf %30, %31 : vector<32x128xf32>
    %33 = arith.truncf %32 : vector<32x128xf32> to vector<32x128xbf16>
    %c0_16 = arith.constant 0 : index
    %c0_17 = arith.constant 0 : index
    %c0_18 = arith.constant 0 : index
    %34 = vector.load %arg3[%c0_16, %c0_17, %c0_18] : memref<1x128x384xbf16, #tpu.memory_space<vmem>>, vector<1x128x384xbf16>
    %35 = vector.shape_cast %34 : vector<1x128x384xbf16> to vector<128x384xbf16>
    %cst_19 = arith.constant dense<0.000000e+00> : vector<32x384xf32>
    %36 = tpu.matmul %33, %35, %cst_19 {dimension_numbers = #tpu.dot_dimension_numbers<[1], [0], [0], [1], [0, 0, 1, 1], [], []>} : vector<32x128xbf16>, vector<128x384xbf16>, vector<32x384xf32> -> vector<32x384xf32>
    %37 = vector.extract_strided_slice %36 {offsets = [0, 0], sizes = [32, 128], strides = [1, 1]} : vector<32x384xf32> to vector<32x128xf32>
    %38 = vector.broadcast %6 : f32 to vector<32x128xf32>
    %39 = arith.mulf %37, %38 : vector<32x128xf32>
    %40 = arith.truncf %39 : vector<32x128xf32> to vector<32x128xbf16>
    %41 = vector.extract_strided_slice %36 {offsets = [0, 128], sizes = [32, 128], strides = [1, 1]} : vector<32x384xf32> to vector<32x128xf32>
    %42 = arith.truncf %41 : vector<32x128xf32> to vector<32x128xbf16>
    %43 = vector.extract_strided_slice %36 {offsets = [0, 256], sizes = [32, 128], strides = [1, 1]} : vector<32x384xf32> to vector<32x128xf32>
    %44 = arith.truncf %43 : vector<32x128xf32> to vector<32x128xbf16>
    %45 = vector.extract_strided_slice %40 {offsets = [0, 0], sizes = [32, 32], strides = [1, 1]} : vector<32x128xbf16> to vector<32x32xbf16>
    %46 = vector.extract_strided_slice %42 {offsets = [0, 0], sizes = [32, 32], strides = [1, 1]} : vector<32x128xbf16> to vector<32x32xbf16>
    %cst_20 = arith.constant dense<0.000000e+00> : vector<32x32xf32>
    %47 = tpu.matmul %45, %46, %cst_20 {dimension_numbers = #tpu.dot_dimension_numbers<[1], [1], [0], [0], [0, 0, 1, 0], [], []>} : vector<32x32xbf16>, vector<32x32xbf16>, vector<32x32xf32> -> vector<32x32xf32>
    %48 = arith.addf %47, %4 : vector<32x32xf32>
    %cst_21 = arith.constant dense<0xFF800000> : vector<32xf32>
    %49 = vector.multi_reduction <maximumf>, %48, %cst_21 [1] : vector<32x32xf32> to vector<32xf32>
    %50 = vector.shape_cast %49 : vector<32xf32> to vector<32x1xf32>
    %51 = vector.broadcast %50 : vector<32x1xf32> to vector<32x32xf32>
    %52 = arith.subf %48, %51 : vector<32x32xf32>
    %53 = math.exp %52 : vector<32x32xf32>
    %cst_22 = arith.constant dense<0.000000e+00> : vector<32xf32>
    %54 = vector.multi_reduction <add>, %53, %cst_22 [1] : vector<32x32xf32> to vector<32xf32>
    %55 = vector.shape_cast %54 : vector<32xf32> to vector<32x1xf32>
    %56 = tpu.reciprocal %55 {approx = true} : vector<32x1xf32> -> vector<32x1xf32>
    %57 = vector.broadcast %56 : vector<32x1xf32> to vector<32x32xf32>
    %58 = arith.mulf %53, %57 : vector<32x32xf32>
    %59 = arith.truncf %58 : vector<32x32xf32> to vector<32x32xbf16>
    %60 = vector.extract_strided_slice %44 {offsets = [0, 0], sizes = [32, 32], strides = [1, 1]} : vector<32x128xbf16> to vector<32x32xbf16>
    %cst_23 = arith.constant dense<0.000000e+00> : vector<32x32xf32>
    %61 = tpu.matmul %59, %60, %cst_23 {dimension_numbers = #tpu.dot_dimension_numbers<[1], [0], [0], [1], [0, 0, 1, 1], [], []>} : vector<32x32xbf16>, vector<32x32xbf16>, vector<32x32xf32> -> vector<32x32xf32>
    %62 = vector.extract_strided_slice %40 {offsets = [0, 32], sizes = [32, 32], strides = [1, 1]} : vector<32x128xbf16> to vector<32x32xbf16>
    %63 = vector.extract_strided_slice %42 {offsets = [0, 32], sizes = [32, 32], strides = [1, 1]} : vector<32x128xbf16> to vector<32x32xbf16>
    %cst_24 = arith.constant dense<0.000000e+00> : vector<32x32xf32>
    %64 = tpu.matmul %62, %63, %cst_24 {dimension_numbers = #tpu.dot_dimension_numbers<[1], [1], [0], [0], [0, 0, 1, 0], [], []>} : vector<32x32xbf16>, vector<32x32xbf16>, vector<32x32xf32> -> vector<32x32xf32>
    %65 = arith.addf %64, %4 : vector<32x32xf32>
    %cst_25 = arith.constant dense<0xFF800000> : vector<32xf32>
    %66 = vector.multi_reduction <maximumf>, %65, %cst_25 [1] : vector<32x32xf32> to vector<32xf32>
    %67 = vector.shape_cast %66 : vector<32xf32> to vector<32x1xf32>
    %68 = vector.broadcast %67 : vector<32x1xf32> to vector<32x32xf32>
    %69 = arith.subf %65, %68 : vector<32x32xf32>
    %70 = math.exp %69 : vector<32x32xf32>
    %cst_26 = arith.constant dense<0.000000e+00> : vector<32xf32>
    %71 = vector.multi_reduction <add>, %70, %cst_26 [1] : vector<32x32xf32> to vector<32xf32>
    %72 = vector.shape_cast %71 : vector<32xf32> to vector<32x1xf32>
    %73 = tpu.reciprocal %72 {approx = true} : vector<32x1xf32> -> vector<32x1xf32>
    %74 = vector.broadcast %73 : vector<32x1xf32> to vector<32x32xf32>
    %75 = arith.mulf %70, %74 : vector<32x32xf32>
    %76 = arith.truncf %75 : vector<32x32xf32> to vector<32x32xbf16>
    %77 = vector.extract_strided_slice %44 {offsets = [0, 32], sizes = [32, 32], strides = [1, 1]} : vector<32x128xbf16> to vector<32x32xbf16>
    %cst_27 = arith.constant dense<0.000000e+00> : vector<32x32xf32>
    %78 = tpu.matmul %76, %77, %cst_27 {dimension_numbers = #tpu.dot_dimension_numbers<[1], [0], [0], [1], [0, 0, 1, 1], [], []>} : vector<32x32xbf16>, vector<32x32xbf16>, vector<32x32xf32> -> vector<32x32xf32>
    %79 = vector.extract_strided_slice %40 {offsets = [0, 64], sizes = [32, 32], strides = [1, 1]} : vector<32x128xbf16> to vector<32x32xbf16>
    %80 = vector.extract_strided_slice %42 {offsets = [0, 64], sizes = [32, 32], strides = [1, 1]} : vector<32x128xbf16> to vector<32x32xbf16>
    %cst_28 = arith.constant dense<0.000000e+00> : vector<32x32xf32>
    %81 = tpu.matmul %79, %80, %cst_28 {dimension_numbers = #tpu.dot_dimension_numbers<[1], [1], [0], [0], [0, 0, 1, 0], [], []>} : vector<32x32xbf16>, vector<32x32xbf16>, vector<32x32xf32> -> vector<32x32xf32>
    %82 = arith.addf %81, %4 : vector<32x32xf32>
    %cst_29 = arith.constant dense<0xFF800000> : vector<32xf32>
    %83 = vector.multi_reduction <maximumf>, %82, %cst_29 [1] : vector<32x32xf32> to vector<32xf32>
    %84 = vector.shape_cast %83 : vector<32xf32> to vector<32x1xf32>
    %85 = vector.broadcast %84 : vector<32x1xf32> to vector<32x32xf32>
    %86 = arith.subf %82, %85 : vector<32x32xf32>
    %87 = math.exp %86 : vector<32x32xf32>
    %cst_30 = arith.constant dense<0.000000e+00> : vector<32xf32>
    %88 = vector.multi_reduction <add>, %87, %cst_30 [1] : vector<32x32xf32> to vector<32xf32>
    %89 = vector.shape_cast %88 : vector<32xf32> to vector<32x1xf32>
    %90 = tpu.reciprocal %89 {approx = true} : vector<32x1xf32> -> vector<32x1xf32>
    %91 = vector.broadcast %90 : vector<32x1xf32> to vector<32x32xf32>
    %92 = arith.mulf %87, %91 : vector<32x32xf32>
    %93 = arith.truncf %92 : vector<32x32xf32> to vector<32x32xbf16>
    %94 = vector.extract_strided_slice %44 {offsets = [0, 64], sizes = [32, 32], strides = [1, 1]} : vector<32x128xbf16> to vector<32x32xbf16>
    %cst_31 = arith.constant dense<0.000000e+00> : vector<32x32xf32>
    %95 = tpu.matmul %93, %94, %cst_31 {dimension_numbers = #tpu.dot_dimension_numbers<[1], [0], [0], [1], [0, 0, 1, 1], [], []>} : vector<32x32xbf16>, vector<32x32xbf16>, vector<32x32xf32> -> vector<32x32xf32>
    %96 = vector.extract_strided_slice %40 {offsets = [0, 96], sizes = [32, 32], strides = [1, 1]} : vector<32x128xbf16> to vector<32x32xbf16>
    %97 = vector.extract_strided_slice %42 {offsets = [0, 96], sizes = [32, 32], strides = [1, 1]} : vector<32x128xbf16> to vector<32x32xbf16>
    %cst_32 = arith.constant dense<0.000000e+00> : vector<32x32xf32>
    %98 = tpu.matmul %96, %97, %cst_32 {dimension_numbers = #tpu.dot_dimension_numbers<[1], [1], [0], [0], [0, 0, 1, 0], [], []>} : vector<32x32xbf16>, vector<32x32xbf16>, vector<32x32xf32> -> vector<32x32xf32>
    %99 = arith.addf %98, %4 : vector<32x32xf32>
    %cst_33 = arith.constant dense<0xFF800000> : vector<32xf32>
    %100 = vector.multi_reduction <maximumf>, %99, %cst_33 [1] : vector<32x32xf32> to vector<32xf32>
    %101 = vector.shape_cast %100 : vector<32xf32> to vector<32x1xf32>
    %102 = vector.broadcast %101 : vector<32x1xf32> to vector<32x32xf32>
    %103 = arith.subf %99, %102 : vector<32x32xf32>
    %104 = math.exp %103 : vector<32x32xf32>
    %cst_34 = arith.constant dense<0.000000e+00> : vector<32xf32>
    %105 = vector.multi_reduction <add>, %104, %cst_34 [1] : vector<32x32xf32> to vector<32xf32>
    %106 = vector.shape_cast %105 : vector<32xf32> to vector<32x1xf32>
    %107 = tpu.reciprocal %106 {approx = true} : vector<32x1xf32> -> vector<32x1xf32>
    %108 = vector.broadcast %107 : vector<32x1xf32> to vector<32x32xf32>
    %109 = arith.mulf %104, %108 : vector<32x32xf32>
    %110 = arith.truncf %109 : vector<32x32xf32> to vector<32x32xbf16>
    %111 = vector.extract_strided_slice %44 {offsets = [0, 96], sizes = [32, 32], strides = [1, 1]} : vector<32x128xbf16> to vector<32x32xbf16>
    %cst_35 = arith.constant dense<0.000000e+00> : vector<32x32xf32>
    %112 = tpu.matmul %110, %111, %cst_35 {dimension_numbers = #tpu.dot_dimension_numbers<[1], [0], [0], [1], [0, 0, 1, 1], [], []>} : vector<32x32xbf16>, vector<32x32xbf16>, vector<32x32xf32> -> vector<32x32xf32>
    %113 = tpu.concatenate %61, %78, %95, %112 in 1 : vector<32x32xf32>, vector<32x32xf32>, vector<32x32xf32>, vector<32x32xf32> -> vector<32x128xf32>
    %114 = arith.truncf %113 : vector<32x128xf32> to vector<32x128xbf16>
    %c0_36 = arith.constant 0 : index
    %c0_37 = arith.constant 0 : index
    %c0_38 = arith.constant 0 : index
    %115 = vector.load %arg4[%c0_36, %c0_37, %c0_38] : memref<1x128x128xbf16, #tpu.memory_space<vmem>>, vector<1x128x128xbf16>
    %116 = vector.shape_cast %115 : vector<1x128x128xbf16> to vector<128x128xbf16>
    %cst_39 = arith.constant dense<0.000000e+00> : vector<32x128xf32>
    %117 = tpu.matmul %114, %116, %cst_39 {dimension_numbers = #tpu.dot_dimension_numbers<[1], [0], [0], [1], [0, 0, 1, 1], [], []>} : vector<32x128xbf16>, vector<128x128xbf16>, vector<32x128xf32> -> vector<32x128xf32>
    %118 = arith.addf %3, %117 : vector<32x128xf32>
    %c0_40 = arith.constant 0 : index
    %c0_41 = arith.constant 0 : index
    %c0_42 = arith.constant 0 : index
    %119 = vector.load %arg5[%c0_40, %c0_41, %c0_42] : memref<1x1x128xf32, #tpu.memory_space<vmem>>, vector<1x1x128xf32>
    %120 = vector.shape_cast %119 : vector<1x1x128xf32> to vector<1x128xf32>
    %121 = vector.broadcast %120 : vector<1x128xf32> to vector<32x128xf32>
    %122 = arith.addf %118, %121 : vector<32x128xf32>
    %c0_43 = arith.constant 0 : index
    %c0_44 = arith.constant 0 : index
    %c0_45 = arith.constant 0 : index
    %123 = vector.load %arg8[%c0_43, %c0_44, %c0_45] : memref<1x1x128xf32, #tpu.memory_space<vmem>>, vector<1x1x128xf32>
    %124 = vector.shape_cast %123 : vector<1x1x128xf32> to vector<1x128xf32>
    %c0_46 = arith.constant 0 : index
    %c0_47 = arith.constant 0 : index
    %c0_48 = arith.constant 0 : index
    %125 = vector.load %arg9[%c0_46, %c0_47, %c0_48] : memref<1x1x128xf32, #tpu.memory_space<vmem>>, vector<1x1x128xf32>
    %126 = vector.shape_cast %125 : vector<1x1x128xf32> to vector<1x128xf32>
    %cst_49 = arith.constant dense<0.000000e+00> : vector<32xf32>
    %127 = vector.multi_reduction <add>, %122, %cst_49 [1] : vector<32x128xf32> to vector<32xf32>
    %128 = vector.shape_cast %127 : vector<32xf32> to vector<32x1xf32>
    %cst_50 = arith.constant 1.280000e+02 : f32
    %129 = vector.broadcast %cst_50 : f32 to vector<32x1xf32>
    %130 = arith.divf %128, %129 : vector<32x1xf32>
    %131 = vector.broadcast %130 : vector<32x1xf32> to vector<32x128xf32>
    %132 = arith.subf %122, %131 : vector<32x128xf32>
    %133 = arith.mulf %132, %132 : vector<32x128xf32>
    %cst_51 = arith.constant dense<0.000000e+00> : vector<32xf32>
    %134 = vector.multi_reduction <add>, %133, %cst_51 [1] : vector<32x128xf32> to vector<32xf32>
    %135 = vector.shape_cast %134 : vector<32xf32> to vector<32x1xf32>
    %cst_52 = arith.constant 1.280000e+02 : f32
    %136 = vector.broadcast %cst_52 : f32 to vector<32x1xf32>
    %137 = arith.divf %135, %136 : vector<32x1xf32>
    %138 = vector.broadcast %130 : vector<32x1xf32> to vector<32x128xf32>
    %139 = arith.subf %122, %138 : vector<32x128xf32>
    %cst_53 = arith.constant 9.99999974E-6 : f32
    %140 = vector.broadcast %cst_53 : f32 to vector<32x1xf32>
    %141 = arith.addf %137, %140 : vector<32x1xf32>
    %142 = math.rsqrt %141 : vector<32x1xf32>
    %143 = vector.broadcast %142 : vector<32x1xf32> to vector<32x128xf32>
    %144 = arith.mulf %139, %143 : vector<32x128xf32>
    %145 = vector.broadcast %124 : vector<1x128xf32> to vector<32x128xf32>
    %146 = arith.mulf %144, %145 : vector<32x128xf32>
    %147 = vector.broadcast %126 : vector<1x128xf32> to vector<32x128xf32>
    %148 = arith.addf %146, %147 : vector<32x128xf32>
    %149 = arith.truncf %148 : vector<32x128xf32> to vector<32x128xbf16>
    %c0_54 = arith.constant 0 : index
    %c0_55 = arith.constant 0 : index
    %c0_56 = arith.constant 0 : index
    %150 = vector.load %arg10[%c0_54, %c0_55, %c0_56] : memref<1x128x512xbf16, #tpu.memory_space<vmem>>, vector<1x128x512xbf16>
    %151 = vector.shape_cast %150 : vector<1x128x512xbf16> to vector<128x512xbf16>
    %cst_57 = arith.constant dense<0.000000e+00> : vector<32x512xf32>
    %152 = tpu.matmul %149, %151, %cst_57 {dimension_numbers = #tpu.dot_dimension_numbers<[1], [0], [0], [1], [0, 0, 1, 1], [], []>} : vector<32x128xbf16>, vector<128x512xbf16>, vector<32x512xf32> -> vector<32x512xf32>
    %c0_58 = arith.constant 0 : index
    %c0_59 = arith.constant 0 : index
    %c0_60 = arith.constant 0 : index
    %153 = vector.load %arg11[%c0_58, %c0_59, %c0_60] : memref<1x1x512xf32, #tpu.memory_space<vmem>>, vector<1x1x512xf32>
    %154 = vector.shape_cast %153 : vector<1x1x512xf32> to vector<1x512xf32>
    %155 = vector.broadcast %154 : vector<1x512xf32> to vector<32x512xf32>
    %156 = arith.addf %152, %155 : vector<32x512xf32>
    %cst_61 = arith.constant 0.000000e+00 : f32
    %157 = vector.broadcast %cst_61 : f32 to vector<32x512xf32>
    %158 = arith.maximumf %156, %157 : vector<32x512xf32>
    %159 = arith.truncf %158 : vector<32x512xf32> to vector<32x512xbf16>
    %c0_62 = arith.constant 0 : index
    %c0_63 = arith.constant 0 : index
    %c0_64 = arith.constant 0 : index
    %160 = vector.load %arg12[%c0_62, %c0_63, %c0_64] : memref<1x512x128xbf16, #tpu.memory_space<vmem>>, vector<1x512x128xbf16>
    %161 = vector.shape_cast %160 : vector<1x512x128xbf16> to vector<512x128xbf16>
    %cst_65 = arith.constant dense<0.000000e+00> : vector<32x128xf32>
    %162 = tpu.matmul %159, %161, %cst_65 {dimension_numbers = #tpu.dot_dimension_numbers<[1], [0], [0], [1], [0, 0, 1, 1], [], []>} : vector<32x512xbf16>, vector<512x128xbf16>, vector<32x128xf32> -> vector<32x128xf32>
    %163 = arith.addf %122, %162 : vector<32x128xf32>
    %c0_66 = arith.constant 0 : index
    %c0_67 = arith.constant 0 : index
    %c0_68 = arith.constant 0 : index
    %164 = vector.load %arg13[%c0_66, %c0_67, %c0_68] : memref<1x1x128xf32, #tpu.memory_space<vmem>>, vector<1x1x128xf32>
    %165 = vector.shape_cast %164 : vector<1x1x128xf32> to vector<1x128xf32>
    %166 = vector.broadcast %165 : vector<1x128xf32> to vector<32x128xf32>
    %167 = arith.addf %163, %166 : vector<32x128xf32>
    %c0_69 = arith.constant 0 : index
    %c0_70 = arith.constant 0 : index
    %168 = vector.load %arg19[%c0_69, %c0_70] : memref<32x128xf32, #tpu.memory_space<vmem>>, vector<32x128xf32>
    tpu.vector_store %arg19[%c0_69, %c0_70], %167 {strides = array<i32>} : memref<32x128xf32, #tpu.memory_space<vmem>>, vector<32x128xf32>,
    %c1_i32 = arith.constant 1 : i32
    %169 = arith.cmpi eq, %arg0, %c1_i32 : i32
    %170 = arith.extui %169 : i1 to i32
    %c0_i32_71 = arith.constant 0 : i32
    %171 = arith.cmpi ne, %170, %c0_i32_71 : i32
    scf.if %171 {
      %c0_72 = arith.constant 0 : index
      %c0_73 = arith.constant 0 : index
      %172 = vector.load %arg14[%c0_72, %c0_73] : memref<1x128xf32, #tpu.memory_space<vmem>>, vector<1x128xf32>
      %c0_74 = arith.constant 0 : index
      %c0_75 = arith.constant 0 : index
      %173 = vector.load %arg15[%c0_74, %c0_75] : memref<1x128xf32, #tpu.memory_space<vmem>>, vector<1x128xf32>
      %cst_76 = arith.constant dense<0.000000e+00> : vector<32xf32>
      %174 = vector.multi_reduction <add>, %167, %cst_76 [1] : vector<32x128xf32> to vector<32xf32>
      %175 = vector.shape_cast %174 : vector<32xf32> to vector<32x1xf32>
      %cst_77 = arith.constant 1.280000e+02 : f32
      %176 = vector.broadcast %cst_77 : f32 to vector<32x1xf32>
      %177 = arith.divf %175, %176 : vector<32x1xf32>
      %178 = vector.broadcast %177 : vector<32x1xf32> to vector<32x128xf32>
      %179 = arith.subf %167, %178 : vector<32x128xf32>
      %180 = arith.mulf %179, %179 : vector<32x128xf32>
      %cst_78 = arith.constant dense<0.000000e+00> : vector<32xf32>
      %181 = vector.multi_reduction <add>, %180, %cst_78 [1] : vector<32x128xf32> to vector<32xf32>
      %182 = vector.shape_cast %181 : vector<32xf32> to vector<32x1xf32>
      %cst_79 = arith.constant 1.280000e+02 : f32
      %183 = vector.broadcast %cst_79 : f32 to vector<32x1xf32>
      %184 = arith.divf %182, %183 : vector<32x1xf32>
      %185 = vector.broadcast %177 : vector<32x1xf32> to vector<32x128xf32>
      %186 = arith.subf %167, %185 : vector<32x128xf32>
      %cst_80 = arith.constant 9.99999974E-6 : f32
      %187 = vector.broadcast %cst_80 : f32 to vector<32x1xf32>
      %188 = arith.addf %184, %187 : vector<32x1xf32>
      %189 = math.rsqrt %188 : vector<32x1xf32>
      %190 = vector.broadcast %189 : vector<32x1xf32> to vector<32x128xf32>
      %191 = arith.mulf %186, %190 : vector<32x128xf32>
      %192 = vector.broadcast %172 : vector<1x128xf32> to vector<32x128xf32>
      %193 = arith.mulf %191, %192 : vector<32x128xf32>
      %194 = vector.broadcast %173 : vector<1x128xf32> to vector<32x128xf32>
      %195 = arith.addf %193, %194 : vector<32x128xf32>
      %196 = arith.truncf %195 : vector<32x128xf32> to vector<32x128xbf16>
      %c0_81 = arith.constant 0 : index
      %c0_82 = arith.constant 0 : index
      %197 = vector.load %arg16[%c0_81, %c0_82] : memref<128x128xbf16, #tpu.memory_space<vmem>>, vector<128x128xbf16>
      %cst_83 = arith.constant dense<0.000000e+00> : vector<32x128xf32>
      %198 = tpu.matmul %196, %197, %cst_83 {dimension_numbers = #tpu.dot_dimension_numbers<[1], [0], [0], [1], [0, 0, 1, 1], [], []>} : vector<32x128xbf16>, vector<128x128xbf16>, vector<32x128xf32> -> vector<32x128xf32>
      %c0_84 = arith.constant 0 : index
      %c0_85 = arith.constant 0 : index
      %199 = vector.load %arg17[%c0_84, %c0_85] : memref<1x128xf32, #tpu.memory_space<vmem>>, vector<1x128xf32>
      %200 = vector.broadcast %199 : vector<1x128xf32> to vector<32x128xf32>
      %201 = arith.addf %198, %200 : vector<32x128xf32>
      %c0_86 = arith.constant 0 : index
      %c0_87 = arith.constant 0 : index
      %202 = vector.load %arg18[%c0_86, %c0_87] : memref<32x128xf32, #tpu.memory_space<vmem>>, vector<32x128xf32>
      tpu.vector_store %arg18[%c0_86, %c0_87], %201 {strides = array<i32>} : memref<32x128xf32, #tpu.memory_space<vmem>>, vector<32x128xf32>,
    } else {
    }
    return
  }
  func.func @transform_0(%arg0: i32) -> (i32, i32) {
    %c0_i32 = arith.constant 0 : i32
    %c0_i32_0 = arith.constant 0 : i32
    %c0_i32_1 = arith.constant 0 : i32
    return %c0_i32, %c0_i32_0 : i32, i32
  }
  func.func @transform_1(%arg0: i32) -> (i32, i32) {
    %c0_i32 = arith.constant 0 : i32
    %c0_i32_0 = arith.constant 0 : i32
    %c0_i32_1 = arith.constant 0 : i32
    return %c0_i32, %c0_i32_0 : i32, i32
  }
  func.func @transform_2(%arg0: i32) -> (i32, i32, i32) {
    %c0_i32 = arith.constant 0 : i32
    %c0_i32_0 = arith.constant 0 : i32
    %c0_i32_1 = arith.constant 0 : i32
    return %arg0, %c0_i32, %c0_i32_0 : i32, i32, i32
  }
  func.func @transform_3(%arg0: i32) -> (i32, i32, i32) {
    %c0_i32 = arith.constant 0 : i32
    %c0_i32_0 = arith.constant 0 : i32
    %c0_i32_1 = arith.constant 0 : i32
    return %arg0, %c0_i32, %c0_i32_0 : i32, i32, i32
  }
  func.func @transform_4(%arg0: i32) -> (i32, i32, i32) {
    %c0_i32 = arith.constant 0 : i32
    %c0_i32_0 = arith.constant 0 : i32
    %c0_i32_1 = arith.constant 0 : i32
    return %arg0, %c0_i32, %c0_i32_0 : i32, i32, i32
  }
  func.func @transform_5(%arg0: i32) -> (i32, i32, i32) {
    %c0_i32 = arith.constant 0 : i32
    %c0_i32_0 = arith.constant 0 : i32
    %c0_i32_1 = arith.constant 0 : i32
    return %arg0, %c0_i32, %c0_i32_0 : i32, i32, i32
  }
  func.func @transform_6(%arg0: i32) -> (i32, i32, i32) {
    %c0_i32 = arith.constant 0 : i32
    %c0_i32_0 = arith.constant 0 : i32
    %c0_i32_1 = arith.constant 0 : i32
    return %arg0, %c0_i32, %c0_i32_0 : i32, i32, i32
  }
  func.func @transform_7(%arg0: i32) -> (i32, i32, i32) {
    %c0_i32 = arith.constant 0 : i32
    %c0_i32_0 = arith.constant 0 : i32
    %c0_i32_1 = arith.constant 0 : i32
    return %arg0, %c0_i32, %c0_i32_0 : i32, i32, i32
  }
  func.func @transform_8(%arg0: i32) -> (i32, i32, i32) {
    %c0_i32 = arith.constant 0 : i32
    %c0_i32_0 = arith.constant 0 : i32
    %c0_i32_1 = arith.constant 0 : i32
    return %arg0, %c0_i32, %c0_i32_0 : i32, i32, i32
  }
  func.func @transform_9(%arg0: i32) -> (i32, i32, i32) {
    %c0_i32 = arith.constant 0 : i32
    %c0_i32_0 = arith.constant 0 : i32
    %c0_i32_1 = arith.constant 0 : i32
    return %arg0, %c0_i32, %c0_i32_0 : i32, i32, i32
  }
  func.func @transform_10(%arg0: i32) -> (i32, i32, i32) {
    %c0_i32 = arith.constant 0 : i32
    %c0_i32_0 = arith.constant 0 : i32
    %c0_i32_1 = arith.constant 0 : i32
    return %arg0, %c0_i32, %c0_i32_0 : i32, i32, i32
  }
  func.func @transform_11(%arg0: i32) -> (i32, i32, i32) {
    %c0_i32 = arith.constant 0 : i32
    %c0_i32_0 = arith.constant 0 : i32
    %c0_i32_1 = arith.constant 0 : i32
    return %arg0, %c0_i32, %c0_i32_0 : i32, i32, i32
  }
  func.func @transform_12(%arg0: i32) -> (i32, i32, i32) {
    %c0_i32 = arith.constant 0 : i32
    %c0_i32_0 = arith.constant 0 : i32
    %c0_i32_1 = arith.constant 0 : i32
    return %arg0, %c0_i32, %c0_i32_0 : i32, i32, i32
  }
  func.func @transform_13(%arg0: i32) -> (i32, i32) {
    %c0_i32 = arith.constant 0 : i32
    %c0_i32_0 = arith.constant 0 : i32
    %c0_i32_1 = arith.constant 0 : i32
    return %c0_i32, %c0_i32_0 : i32, i32
  }
  func.func @transform_14(%arg0: i32) -> (i32, i32) {
    %c0_i32 = arith.constant 0 : i32
    %c0_i32_0 = arith.constant 0 : i32
    %c0_i32_1 = arith.constant 0 : i32
    return %c0_i32, %c0_i32_0 : i32, i32
  }
  func.func @transform_15(%arg0: i32) -> (i32, i32) {
    %c0_i32 = arith.constant 0 : i32
    %c0_i32_0 = arith.constant 0 : i32
    %c0_i32_1 = arith.constant 0 : i32
    return %c0_i32, %c0_i32_0 : i32, i32
  }
  func.func @transform_16(%arg0: i32) -> (i32, i32) {
    %c0_i32 = arith.constant 0 : i32
    %c0_i32_0 = arith.constant 0 : i32
    %c0_i32_1 = arith.constant 0 : i32
    return %c0_i32, %c0_i32_0 : i32, i32
  }
  func.func @transform_17(%arg0: i32) -> (i32, i32) {
    %c0_i32 = arith.constant 0 : i32
    %c0_i32_0 = arith.constant 0 : i32
    %c0_i32_1 = arith.constant 0 : i32
    return %c0_i32, %c0_i32_0 : i32, i32
  }
}

</mosaic_0001>

<llo_original>
// kernel: tpu_custom_call.1
$region0: #{tpu_custom_call.1}
  #allocation0 [shape = 'u32[]', space=smem, size = 0x4, offset = 0x4, fixed_abs, tag = 'smem constant byte address 0x4 - core index']
  #allocation1 [shape = 'u32[144,128]{1,0:T(1,128)}', space=vmem, size = 0x12000, scoped, tag = 'internal scratch']
  #allocation2 [shape = 'f32[32,128]{1,0:T(8,128)}', space=vmem, size = 0x4000, scoped, tag = 'scratch operand']
  %s0 = inlined_call_operand.hbm [shape: f32[32,128], index: 0, kind: input, shape index: {}]
  %s1 = inlined_call_operand.hbm [shape: f32[32,32], index: 1, kind: input, shape index: {}]
  %s2 = inlined_call_operand.hbm [shape: bf16[2,128,384], index: 2, kind: input, shape index: {}]
  %s3 = inlined_call_operand.hbm [shape: bf16[2,128,128], index: 3, kind: input, shape index: {}]
  %s4 = inlined_call_operand.vmem [shape: f32[2,1,128], index: 4, kind: input, shape index: {}]
  %s5 = inlined_call_operand.vmem [shape: f32[2,1,128], index: 5, kind: input, shape index: {}]
  %s6 = inlined_call_operand.vmem [shape: f32[2,1,128], index: 6, kind: input, shape index: {}]
  %s7 = inlined_call_operand.vmem [shape: f32[2,1,128], index: 7, kind: input, shape index: {}]
  %s8 = inlined_call_operand.vmem [shape: f32[2,1,128], index: 8, kind: input, shape index: {}]
  %s9 = inlined_call_operand.hbm [shape: bf16[2,128,512], index: 9, kind: input, shape index: {}]
  %s10 = inlined_call_operand.vmem [shape: f32[2,1,512], index: 10, kind: input, shape index: {}]
  %s11 = inlined_call_operand.hbm [shape: bf16[2,512,128], index: 11, kind: input, shape index: {}]
  %s12 = inlined_call_operand.vmem [shape: f32[2,1,128], index: 12, kind: input, shape index: {}]
  %s13 = inlined_call_operand.vmem [shape: f32[1,128], index: 13, kind: input, shape index: {}]
  %s14 = inlined_call_operand.vmem [shape: f32[1,128], index: 14, kind: input, shape index: {}]
  %s15 = inlined_call_operand.hbm [shape: bf16[128,128], index: 15, kind: input, shape index: {}]
  %s16 = inlined_call_operand.vmem [shape: f32[1,128], index: 16, kind: input, shape index: {}]
  %s17 = inlined_call_operand.hbm [shape: f32[32,128], index: 17, kind: output, shape index: {}]
  %s18 = sld [smem:[#allocation0]]
  $region137: #{tpu_custom_call.1} parent=0
    _
  %s20 = ssub.s32 1, %s18
  %s21 = scalar_select 0, %s20, %s18
  $region1: #{tpu_custom_call.1} parent=0
    #allocation3 [shape = 'u8[16384]{0}', space=vmem, size = 0x4000, scoped, tag = 'input window, operand 0, single buffered']
    #allocation4 [shape = 's32[2]{0}', space=sflag, size = 0x8, scoped, tag = 'scoped memory for tpu_custom_call.1']
    #allocation5 [shape = 's32[2]{0}', space=sflag, size = 0x8, scoped, tag = 'scoped memory for tpu_custom_call.1']
    #allocation6 [shape = 'u8[16384]{0}', space=vmem, size = 0x4000, scoped, tag = 'input window, operand 1, single buffered']
    #allocation7 [shape = 's32[1]{0}', space=sflag, size = 0x4, scoped, tag = 'scoped memory for tpu_custom_call.1']
    #allocation8 [shape = 'u8[196608]{0}', space=vmem, size = 0x30000, scoped, tag = 'input window, operand 2']
    #allocation9 [shape = 'u8[65536]{0}', space=vmem, size = 0x10000, scoped, tag = 'input window, operand 3']
    #allocation10 [shape = 'u8[262144]{0}', space=vmem, size = 0x40000, scoped, tag = 'input window, operand 9']
    #allocation11 [shape = 'u8[262144]{0}', space=vmem, size = 0x40000, scoped, tag = 'input window, operand 11']
    #allocation12 [shape = 'u8[32768]{0}', space=vmem, size = 0x8000, scoped, tag = 'input window, operand 15, single buffered']
    #allocation13 [shape = 'u8[16384]{0}', space=vmem, size = 0x4000, scoped, tag = 'output window, operand 0, single buffered']
    %22 = vsyncpa [#allocation4], 0
    %23 = vsyncpa [#allocation7], 0
    %24 = vsyncpa [#allocation5], 0
    loop: start=0, step=1, limit=4
    $region2: #{tpu_custom_call.1} parent=1 // loop_pre_header
      _
    $region3: #{tpu_custom_call.1} parent=1 // loop_header
      %s26 = sphi 0, %s30
      %p27 = scmp.ge.s32.totalorder %s26, 4
      %s34 = sphi 0, %s34
      %s36 = sphi 0, %s34
      %s37 = sphi 0, %s36
      %s51 = sphi 0, %s37
      %s55 = sphi 0, %s55
      %s57 = sphi 0, %s55
      %s58 = sphi 0, %s57
      %s72 = sphi 0, %s58
      %s78 = sphi 0, %s80
      %s81 = sphi 0, %s78
      %s82 = sphi 0, %s81
      %s98 = sphi 0, %s82
      %s104 = sphi 0, %s106
      %s107 = sphi 0, %s104
      %s108 = sphi 0, %s107
      %s124 = sphi 0, %s108
      %s130 = sphi 0, %s132
      %s133 = sphi 0, %s130
      %s134 = sphi 0, %s133
      %s150 = sphi 0, %s134
      %s156 = sphi 0, %s158
      %s159 = sphi 0, %s156
      %s160 = sphi 0, %s159
      %s176 = sphi 0, %s160
      %s182 = sphi 0, %s184
      %s185 = sphi 0, %s182
      %s186 = sphi 0, %s185
      %s202 = sphi 0, %s186
      %s208 = sphi 0, %s210
      %s211 = sphi 0, %s208
      %s212 = sphi 0, %s211
      %s228 = sphi 0, %s212
      %s234 = sphi 0, %s236
      %s237 = sphi 0, %s234
      %s238 = sphi 0, %s237
      %s254 = sphi 0, %s238
      %s260 = sphi 0, %s262
      %s263 = sphi 0, %s260
      %s264 = sphi 0, %s263
      %s280 = sphi 0, %s264
      %s286 = sphi 0, %s288
      %s289 = sphi 0, %s286
      %s290 = sphi 0, %s289
      %s306 = sphi 0, %s290
      %s312 = sphi 0, %s314
      %s315 = sphi 0, %s312
      %s316 = sphi 0, %s315
      %s332 = sphi 0, %s316
      %s338 = sphi 0, %s340
      %s341 = sphi 0, %s338
      %s342 = sphi 0, %s341
      %s358 = sphi 0, %s342
      %s362 = sphi 0, %s362
      %s364 = sphi 0, %s362
      %s365 = sphi 0, %s364
      %s379 = sphi 0, %s365
      %s383 = sphi 0, %s383
      %s385 = sphi 0, %s383
      %s386 = sphi 0, %s385
      %s400 = sphi 0, %s386
      %s404 = sphi 0, %s404
      %s406 = sphi 0, %s404
      %s407 = sphi 0, %s406
      %s421 = sphi 0, %s407
      %s425 = sphi 0, %s425
      %s427 = sphi 0, %s425
      %s428 = sphi 0, %s427
      %s442 = sphi 0, %s428
      %s446 = sphi 0, %s446
      %s448 = sphi 0, %s446
      %s449 = sphi 0, %s448
      %s463 = sphi 0, %s449
    $region4: #{tpu_custom_call.1} parent=1 // loop_header_branch
      %29 = sbr.rel (%p27) target = $region8
    $region5: #{tpu_custom_call.1} parent=1 // loop_body
      %s31 = ssub.s32 %s26, 1
      %s32 = ssub.s32 %s26, 2
      %s33 = sadd.s32 %s26, 1
      %s35 = sadd.s32 %s34, 1
      %p38 = scmp.eq.s32.totalorder %s26, 1
      %p39 = scmp.ne.s32.totalorder %s34, %s36
      %p40 = scmp.eq.s32.totalorder %s26, 0
      %p41 = por %p39, %p40
      %p42 = scmp.ne.s32.totalorder %s34, %s36
      %p43 = scmp.eq.s32.totalorder %s31, 1
      %p44 = por %p42, %p43
      %p45 = scmp.ne.s32.totalorder %s36, %s37
      %p46 = scmp.eq.s32.totalorder %s31, 0
      %p47 = por %p45, %p46
      %p48 = scmp.ne.s32.totalorder %s36, %s37
      %p49 = scmp.eq.s32.totalorder %s32, 1
      %p50 = por %p48, %p49
      %p52 = scmp.ne.s32.totalorder %s37, %s51
      %p53 = scmp.eq.s32.totalorder %s32, 0
      %p54 = por %p52, %p53
      %s56 = sadd.s32 %s55, 1
      %p59 = scmp.eq.s32.totalorder %s26, 1
      %p60 = scmp.ne.s32.totalorder %s55, %s57
      %p61 = scmp.eq.s32.totalorder %s26, 0
      %p62 = por %p60, %p61
      %p63 = scmp.ne.s32.totalorder %s55, %s57
      %p64 = scmp.eq.s32.totalorder %s31, 1
      %p65 = por %p63, %p64
      %p66 = scmp.ne.s32.totalorder %s57, %s58
      %p67 = scmp.eq.s32.totalorder %s31, 0
      %p68 = por %p66, %p67
      %p69 = scmp.ne.s32.totalorder %s57, %s58
      %p70 = scmp.eq.s32.totalorder %s32, 1
      %p71 = por %p69, %p70
      %p73 = scmp.ne.s32.totalorder %s58, %s72
      %p74 = scmp.eq.s32.totalorder %s32, 0
      %p75 = por %p73, %p74
      %s76 = ssub.s32 %s26, %s33
      %p77 = scmp.eq.s32.totalorder %s76, 0
      %s79 = sadd.s32 %s78, 1
      %s80 = scalar_select %p77, %s78, %s79
      %p83 = pneg %p77
      %p84 = scmp.eq.s32.totalorder %s26, 1
      %p85 = por %p83, %p84
      %p86 = scmp.ne.s32.totalorder %s78, %s81
      %p87 = scmp.eq.s32.totalorder %s26, 0
      %p88 = por %p86, %p87
      %p89 = scmp.ne.s32.totalorder %s78, %s81
      %p90 = scmp.eq.s32.totalorder %s31, 1
      %p91 = por %p89, %p90
      %p92 = scmp.ne.s32.totalorder %s81, %s82
      %p93 = scmp.eq.s32.totalorder %s31, 0
      %p94 = por %p92, %p93
      %p95 = scmp.ne.s32.totalorder %s81, %s82
      %p96 = scmp.eq.s32.totalorder %s32, 1
      %p97 = por %p95, %p96
      %p99 = scmp.ne.s32.totalorder %s82, %s98
      %p100 = scmp.eq.s32.totalorder %s32, 0
      %p101 = por %p99, %p100
      %s102 = ssub.s32 %s26, %s33
      %p103 = scmp.eq.s32.totalorder %s102, 0
      %s105 = sadd.s32 %s104, 1
      %s106 = scalar_select %p103, %s104, %s105
      %p109 = pneg %p103
      %p110 = scmp.eq.s32.totalorder %s26, 1
      %p111 = por %p109, %p110
      %p112 = scmp.ne.s32.totalorder %s104, %s107
      %p113 = scmp.eq.s32.totalorder %s26, 0
      %p114 = por %p112, %p113
      %p115 = scmp.ne.s32.totalorder %s104, %s107
      %p116 = scmp.eq.s32.totalorder %s31, 1
      %p117 = por %p115, %p116
      %p118 = scmp.ne.s32.totalorder %s107, %s108
      %p119 = scmp.eq.s32.totalorder %s31, 0
      %p120 = por %p118, %p119
      %p121 = scmp.ne.s32.totalorder %s107, %s108
      %p122 = scmp.eq.s32.totalorder %s32, 1
      %p123 = por %p121, %p122
      %p125 = scmp.ne.s32.totalorder %s108, %s124
      %p126 = scmp.eq.s32.totalorder %s32, 0
      %p127 = por %p125, %p126
      %s128 = ssub.s32 %s26, %s33
      %p129 = scmp.eq.s32.totalorder %s128, 0
      %s131 = sadd.s32 %s130, 1
      %s132 = scalar_select %p129, %s130, %s131
      %p135 = pneg %p129
      %p136 = scmp.eq.s32.totalorder %s26, 1
      %p137 = por %p135, %p136
      %p138 = scmp.ne.s32.totalorder %s130, %s133
      %p139 = scmp.eq.s32.totalorder %s26, 0
      %p140 = por %p138, %p139
      %p141 = scmp.ne.s32.totalorder %s130, %s133
      %p142 = scmp.eq.s32.totalorder %s31, 1
      %p143 = por %p141, %p142
      %p144 = scmp.ne.s32.totalorder %s133, %s134
      %p145 = scmp.eq.s32.totalorder %s31, 0
      %p146 = por %p144, %p145
      %p147 = scmp.ne.s32.totalorder %s133, %s134
      %p148 = scmp.eq.s32.totalorder %s32, 1
      %p149 = por %p147, %p148
      %p151 = scmp.ne.s32.totalorder %s134, %s150
      %p152 = scmp.eq.s32.totalorder %s32, 0
      %p153 = por %p151, %p152
      %s154 = ssub.s32 %s26, %s33
      %p155 = scmp.eq.s32.totalorder %s154, 0
      %s157 = sadd.s32 %s156, 1
      %s158 = scalar_select %p155, %s156, %s157
      %p161 = pneg %p155
      %p162 = scmp.eq.s32.totalorder %s26, 1
      %p163 = por %p161, %p162
      %p164 = scmp.ne.s32.totalorder %s156, %s159
      %p165 = scmp.eq.s32.totalorder %s26, 0
      %p166 = por %p164, %p165
      %p167 = scmp.ne.s32.totalorder %s156, %s159
      %p168 = scmp.eq.s32.totalorder %s31, 1
      %p169 = por %p167, %p168
      %p170 = scmp.ne.s32.totalorder %s159, %s160
      %p171 = scmp.eq.s32.totalorder %s31, 0
      %p172 = por %p170, %p171
      %p173 = scmp.ne.s32.totalorder %s159, %s160
      %p174 = scmp.eq.s32.totalorder %s32, 1
      %p175 = por %p173, %p174
      %p177 = scmp.ne.s32.totalorder %s160, %s176
      %p178 = scmp.eq.s32.totalorder %s32, 0
      %p179 = por %p177, %p178
      %s180 = ssub.s32 %s26, %s33
      %p181 = scmp.eq.s32.totalorder %s180, 0
      %s183 = sadd.s32 %s182, 1
      %s184 = scalar_select %p181, %s182, %s183
      %p187 = pneg %p181
      %p188 = scmp.eq.s32.totalorder %s26, 1
      %p189 = por %p187, %p188
      %p190 = scmp.ne.s32.totalorder %s182, %s185
      %p191 = scmp.eq.s32.totalorder %s26, 0
      %p192 = por %p190, %p191
      %p193 = scmp.ne.s32.totalorder %s182, %s185
      %p194 = scmp.eq.s32.totalorder %s31, 1
      %p195 = por %p193, %p194
      %p196 = scmp.ne.s32.totalorder %s185, %s186
      %p197 = scmp.eq.s32.totalorder %s31, 0
      %p198 = por %p196, %p197
      %p199 = scmp.ne.s32.totalorder %s185, %s186
      %p200 = scmp.eq.s32.totalorder %s32, 1
      %p201 = por %p199, %p200
      %p203 = scmp.ne.s32.totalorder %s186, %s202
      %p204 = scmp.eq.s32.totalorder %s32, 0
      %p205 = por %p203, %p204
      %s206 = ssub.s32 %s26, %s33
      %p207 = scmp.eq.s32.totalorder %s206, 0
      %s209 = sadd.s32 %s208, 1
      %s210 = scalar_select %p207, %s208, %s209
      %p213 = pneg %p207
      %p214 = scmp.eq.s32.totalorder %s26, 1
      %p215 = por %p213, %p214
      %p216 = scmp.ne.s32.totalorder %s208, %s211
      %p217 = scmp.eq.s32.totalorder %s26, 0
      %p218 = por %p216, %p217
      %p219 = scmp.ne.s32.totalorder %s208, %s211
      %p220 = scmp.eq.s32.totalorder %s31, 1
      %p221 = por %p219, %p220
      %p222 = scmp.ne.s32.totalorder %s211, %s212
      %p223 = scmp.eq.s32.totalorder %s31, 0
      %p224 = por %p222, %p223
      %p225 = scmp.ne.s32.totalorder %s211, %s212
      %p226 = scmp.eq.s32.totalorder %s32, 1
      %p227 = por %p225, %p226
      %p229 = scmp.ne.s32.totalorder %s212, %s228
      %p230 = scmp.eq.s32.totalorder %s32, 0
      %p231 = por %p229, %p230
      %s232 = ssub.s32 %s26, %s33
      %p233 = scmp.eq.s32.totalorder %s232, 0
      %s235 = sadd.s32 %s234, 1
      %s236 = scalar_select %p233, %s234, %s235
      %p239 = pneg %p233
      %p240 = scmp.eq.s32.totalorder %s26, 1
      %p241 = por %p239, %p240
      %p242 = scmp.ne.s32.totalorder %s234, %s237
      %p243 = scmp.eq.s32.totalorder %s26, 0
      %p244 = por %p242, %p243
      %p245 = scmp.ne.s32.totalorder %s234, %s237
      %p246 = scmp.eq.s32.totalorder %s31, 1
      %p247 = por %p245, %p246
      %p248 = scmp.ne.s32.totalorder %s237, %s238
      %p249 = scmp.eq.s32.totalorder %s31, 0
      %p250 = por %p248, %p249
      %p251 = scmp.ne.s32.totalorder %s237, %s238
      %p252 = scmp.eq.s32.totalorder %s32, 1
      %p253 = por %p251, %p252
      %p255 = scmp.ne.s32.totalorder %s238, %s254
      %p256 = scmp.eq.s32.totalorder %s32, 0
      %p257 = por %p255, %p256
      %s258 = ssub.s32 %s26, %s33
      %p259 = scmp.eq.s32.totalorder %s258, 0
      %s261 = sadd.s32 %s260, 1
      %s262 = scalar_select %p259, %s260, %s261
      %p265 = pneg %p259
      %p266 = scmp.eq.s32.totalorder %s26, 1
      %p267 = por %p265, %p266
      %p268 = scmp.ne.s32.totalorder %s260, %s263
      %p269 = scmp.eq.s32.totalorder %s26, 0
      %p270 = por %p268, %p269
      %p271 = scmp.ne.s32.totalorder %s260, %s263
      %p272 = scmp.eq.s32.totalorder %s31, 1
      %p273 = por %p271, %p272
      %p274 = scmp.ne.s32.totalorder %s263, %s264
      %p275 = scmp.eq.s32.totalorder %s31, 0
      %p276 = por %p274, %p275
      %p277 = scmp.ne.s32.totalorder %s263, %s264
      %p278 = scmp.eq.s32.totalorder %s32, 1
      %p279 = por %p277, %p278
      %p281 = scmp.ne.s32.totalorder %s264, %s280
      %p282 = scmp.eq.s32.totalorder %s32, 0
      %p283 = por %p281, %p282
      %s284 = ssub.s32 %s26, %s33
      %p285 = scmp.eq.s32.totalorder %s284, 0
      %s287 = sadd.s32 %s286, 1
      %s288 = scalar_select %p285, %s286, %s287
      %p291 = pneg %p285
      %p292 = scmp.eq.s32.totalorder %s26, 1
      %p293 = por %p291, %p292
      %p294 = scmp.ne.s32.totalorder %s286, %s289
      %p295 = scmp.eq.s32.totalorder %s26, 0
      %p296 = por %p294, %p295
      %p297 = scmp.ne.s32.totalorder %s286, %s289
      %p298 = scmp.eq.s32.totalorder %s31, 1
      %p299 = por %p297, %p298
      %p300 = scmp.ne.s32.totalorder %s289, %s290
      %p301 = scmp.eq.s32.totalorder %s31, 0
      %p302 = por %p300, %p301
      %p303 = scmp.ne.s32.totalorder %s289, %s290
      %p304 = scmp.eq.s32.totalorder %s32, 1
      %p305 = por %p303, %p304
      %p307 = scmp.ne.s32.totalorder %s290, %s306
      %p308 = scmp.eq.s32.totalorder %s32, 0
      %p309 = por %p307, %p308
      %s310 = ssub.s32 %s26, %s33
      %p311 = scmp.eq.s32.totalorder %s310, 0
      %s313 = sadd.s32 %s312, 1
      %s314 = scalar_select %p311, %s312, %s313
      %p317 = pneg %p311
      %p318 = scmp.eq.s32.totalorder %s26, 1
      %p319 = por %p317, %p318
      %p320 = scmp.ne.s32.totalorder %s312, %s315
      %p321 = scmp.eq.s32.totalorder %s26, 0
      %p322 = por %p320, %p321
      %p323 = scmp.ne.s32.totalorder %s312, %s315
      %p324 = scmp.eq.s32.totalorder %s31, 1
      %p325 = por %p323, %p324
      %p326 = scmp.ne.s32.totalorder %s315, %s316
      %p327 = scmp.eq.s32.totalorder %s31, 0
      %p328 = por %p326, %p327
      %p329 = scmp.ne.s32.totalorder %s315, %s316
      %p330 = scmp.eq.s32.totalorder %s32, 1
      %p331 = por %p329, %p330
      %p333 = scmp.ne.s32.totalorder %s316, %s332
      %p334 = scmp.eq.s32.totalorder %s32, 0
      %p335 = por %p333, %p334
      %s336 = ssub.s32 %s26, %s33
      %p337 = scmp.eq.s32.totalorder %s336, 0
      %s339 = sadd.s32 %s338, 1
      %s340 = scalar_select %p337, %s338, %s339
      %p343 = pneg %p337
      %p344 = scmp.eq.s32.totalorder %s26, 1
      %p345 = por %p343, %p344
      %p346 = scmp.ne.s32.totalorder %s338, %s341
      %p347 = scmp.eq.s32.totalorder %s26, 0
      %p348 = por %p346, %p347
      %p349 = scmp.ne.s32.totalorder %s338, %s341
      %p350 = scmp.eq.s32.totalorder %s31, 1
      %p351 = por %p349, %p350
      %p352 = scmp.ne.s32.totalorder %s341, %s342
      %p353 = scmp.eq.s32.totalorder %s31, 0
      %p354 = por %p352, %p353
      %p355 = scmp.ne.s32.totalorder %s341, %s342
      %p356 = scmp.eq.s32.totalorder %s32, 1
      %p357 = por %p355, %p356
      %p359 = scmp.ne.s32.totalorder %s342, %s358
      %p360 = scmp.eq.s32.totalorder %s32, 0
      %p361 = por %p359, %p360
      %s363 = sadd.s32 %s362, 1
      %p366 = scmp.eq.s32.totalorder %s26, 1
      %p367 = scmp.ne.s32.totalorder %s362, %s364
      %p368 = scmp.eq.s32.totalorder %s26, 0
      %p369 = por %p367, %p368
      %p370 = scmp.ne.s32.totalorder %s362, %s364
      %p371 = scmp.eq.s32.totalorder %s31, 1
      %p372 = por %p370, %p371
      %p373 = scmp.ne.s32.totalorder %s364, %s365
      %p374 = scmp.eq.s32.totalorder %s31, 0
      %p375 = por %p373, %p374
      %p376 = scmp.ne.s32.totalorder %s364, %s365
      %p377 = scmp.eq.s32.totalorder %s32, 1
      %p378 = por %p376, %p377
      %p380 = scmp.ne.s32.totalorder %s365, %s379
      %p381 = scmp.eq.s32.totalorder %s32, 0
      %p382 = por %p380, %p381
      %s384 = sadd.s32 %s383, 1
      %p387 = scmp.eq.s32.totalorder %s26, 1
      %p388 = scmp.ne.s32.totalorder %s383, %s385
      %p389 = scmp.eq.s32.totalorder %s26, 0
      %p390 = por %p388, %p389
      %p391 = scmp.ne.s32.totalorder %s383, %s385
      %p392 = scmp.eq.s32.totalorder %s31, 1
      %p393 = por %p391, %p392
      %p394 = scmp.ne.s32.totalorder %s385, %s386
      %p395 = scmp.eq.s32.totalorder %s31, 0
      %p396 = por %p394, %p395
      %p397 = scmp.ne.s32.totalorder %s385, %s386
      %p398 = scmp.eq.s32.totalorder %s32, 1
      %p399 = por %p397, %p398
      %p401 = scmp.ne.s32.totalorder %s386, %s400
      %p402 = scmp.eq.s32.totalorder %s32, 0
      %p403 = por %p401, %p402
      %s405 = sadd.s32 %s404, 1
      %p408 = scmp.eq.s32.totalorder %s26, 1
      %p409 = scmp.ne.s32.totalorder %s404, %s406
      %p410 = scmp.eq.s32.totalorder %s26, 0
      %p411 = por %p409, %p410
      %p412 = scmp.ne.s32.totalorder %s404, %s406
      %p413 = scmp.eq.s32.totalorder %s31, 1
      %p414 = por %p412, %p413
      %p415 = scmp.ne.s32.totalorder %s406, %s407
      %p416 = scmp.eq.s32.totalorder %s31, 0
      %p417 = por %p415, %p416
      %p418 = scmp.ne.s32.totalorder %s406, %s407
      %p419 = scmp.eq.s32.totalorder %s32, 1
      %p420 = por %p418, %p419
      %p422 = scmp.ne.s32.totalorder %s407, %s421
      %p423 = scmp.eq.s32.totalorder %s32, 0
      %p424 = por %p422, %p423
      %s426 = sadd.s32 %s425, 1
      %p429 = scmp.eq.s32.totalorder %s26, 1
      %p430 = scmp.ne.s32.totalorder %s425, %s427
      %p431 = scmp.eq.s32.totalorder %s26, 0
      %p432 = por %p430, %p431
      %p433 = scmp.ne.s32.totalorder %s425, %s427
      %p434 = scmp.eq.s32.totalorder %s31, 1
      %p435 = por %p433, %p434
      %p436 = scmp.ne.s32.totalorder %s427, %s428
      %p437 = scmp.eq.s32.totalorder %s31, 0
      %p438 = por %p436, %p437
      %p439 = scmp.ne.s32.totalorder %s427, %s428
      %p440 = scmp.eq.s32.totalorder %s32, 1
      %p441 = por %p439, %p440
      %p443 = scmp.ne.s32.totalorder %s428, %s442
      %p444 = scmp.eq.s32.totalorder %s32, 0
      %p445 = por %p443, %p444
      %s447 = sadd.s32 %s446, 1
      %p450 = scmp.eq.s32.totalorder %s26, 1
      %p451 = scmp.ne.s32.totalorder %s446, %s448
      %p452 = scmp.eq.s32.totalorder %s26, 0
      %p453 = por %p451, %p452
      %p454 = scmp.ne.s32.totalorder %s446, %s448
      %p455 = scmp.eq.s32.totalorder %s31, 1
      %p456 = por %p454, %p455
      %p457 = scmp.ne.s32.totalorder %s448, %s449
      %p458 = scmp.eq.s32.totalorder %s31, 0
      %p459 = por %p457, %p458
      %p460 = scmp.ne.s32.totalorder %s448, %s449
      %p461 = scmp.eq.s32.totalorder %s32, 1
      %p462 = por %p460, %p461
      %p464 = scmp.ne.s32.totalorder %s449, %s463
      %p465 = scmp.eq.s32.totalorder %s32, 0
      %p466 = por %p464, %p465
      %p467 = scmp.le.s32.totalorder 1, %s26
      %p468 = scmp.lt.s32.totalorder %s26, 3
      %p469 = pnand %p467, %p468
      %p470 = pneg %p469
      // Predicated region
      $region9: #{tpu_custom_call.1} parent=5 // pred_check
        _
      $region10: #{tpu_custom_call.1} parent=5 // pred_check_branch
        %472 = sbr.rel (%p469) target = $region12
      $region11: #{tpu_custom_call.1} parent=5 // pred_region
        %s473 = ssub.s32 %s26, 1
        // Predicated region
        $region13: #{tpu_custom_call.1} parent=11 // pred_check
          %p474 = pneg %p47
        $region14: #{tpu_custom_call.1} parent=11 // pred_check_branch
          %476 = sbr.rel (%p474) target = $region16
        $region15: #{tpu_custom_call.1} parent=11 // pred_region
          %s478 = ssub.s32 512, 512
          %479 = vsyncadd [#allocation4], %s478
          %s480 = sshll.u32 [#allocation3], 4
          %s481 = int_to_ptr.vmem [resolvable:$true] %s480
          %486 = dma.hbm_to_vmem [thread:$0]  %s0, 512, %s481, [#allocation4], 128, 128, 8
        $region16: #{tpu_custom_call.1} parent=11 // pred_fallthru
          _
        // Predicated region
        $region17: #{tpu_custom_call.1} parent=11 // pred_check
          %p487 = pneg %p68
        $region18: #{tpu_custom_call.1} parent=11 // pred_check_branch
          %489 = sbr.rel (%p487) target = $region20
        $region19: #{tpu_custom_call.1} parent=11 // pred_region
          %s491 = ssub.s32 512, 512
          %492 = vsyncadd [#allocation7], %s491
          %s493 = sshll.u32 [#allocation6], 4
          %s494 = int_to_ptr.vmem [resolvable:$true] %s493
          %499 = dma.hbm_to_vmem [thread:$0]  %s1, 512, %s494, [#allocation7], 128, 128, 8
        $region20: #{tpu_custom_call.1} parent=11 // pred_fallthru
          _
        // Predicated region
        $region21: #{tpu_custom_call.1} parent=11 // pred_check
          %p500 = pneg %p375
        $region22: #{tpu_custom_call.1} parent=11 // pred_check_branch
          %502 = sbr.rel (%p500) target = $region24
        $region23: #{tpu_custom_call.1} parent=11 // pred_region
          _
        $region24: #{tpu_custom_call.1} parent=11 // pred_fallthru
          _
        // Predicated region
        $region25: #{tpu_custom_call.1} parent=11 // pred_check
          %p503 = pneg %p396
        $region26: #{tpu_custom_call.1} parent=11 // pred_check_branch
          %505 = sbr.rel (%p503) target = $region28
        $region27: #{tpu_custom_call.1} parent=11 // pred_region
          _
        $region28: #{tpu_custom_call.1} parent=11 // pred_fallthru
          _
        // Predicated region
        $region29: #{tpu_custom_call.1} parent=11 // pred_check
          %p506 = pneg %p417
        $region30: #{tpu_custom_call.1} parent=11 // pred_check_branch
          %508 = sbr.rel (%p506) target = $region32
        $region31: #{tpu_custom_call.1} parent=11 // pred_region
          %s510 = ssub.s32 1024, 1024
          %511 = vsyncadd [#allocation7], %s510
          %s512 = sshll.u32 [#allocation12], 4
          %s513 = int_to_ptr.vmem [resolvable:$true] %s512
          %518 = dma.hbm_to_vmem [thread:$0]  %s15, 1024, %s513, [#allocation7], 64, 64, 4
        $region32: #{tpu_custom_call.1} parent=11 // pred_fallthru
          _
        // Predicated region
        $region33: #{tpu_custom_call.1} parent=11 // pred_check
          %p519 = pneg %p438
        $region34: #{tpu_custom_call.1} parent=11 // pred_check_branch
          %521 = sbr.rel (%p519) target = $region36
        $region35: #{tpu_custom_call.1} parent=11 // pred_region
          _
        $region36: #{tpu_custom_call.1} parent=11 // pred_fallthru
          _
      $region12: #{tpu_custom_call.1} parent=5 // pred_fallthru
        _
      %p522 = scmp.lt.s32.totalorder %s26, 2
      // Predicated region
      $region37: #{tpu_custom_call.1} parent=5 // pred_check
        %p523 = pneg %p522
      $region38: #{tpu_custom_call.1} parent=5 // pred_check_branch
        %525 = sbr.rel (%p523) target = $region40
      $region39: #{tpu_custom_call.1} parent=5 // pred_region
        // Predicated region
        $region41: #{tpu_custom_call.1} parent=39 // pred_check
          %p526 = pneg %p88
        $region42: #{tpu_custom_call.1} parent=39 // pred_check_branch
          %528 = sbr.rel (%p526) target = $region44
        $region43: #{tpu_custom_call.1} parent=39 // pred_region
          %s529 = sand.u32 %s26, 1
          %s530 = scalar_lea.sflag [#allocation4], %s529
          %s531 = sand.u32 %s78, 1
          %s532 = smul.addr %s531, 192
          %s533 = scalar_lea.vmem [#allocation8], %s532
          %s535 = ssub.s32 3072, 3072
          %536 = vsyncadd %s530, %s535
          %s537 = smul.addr %s26, 48
          %s538 = smul.addr %s537, 64
          %s539 = scalar_lea.hbm %s2, %s538
          %s540 = sshll.u32 %s533, 4
          %s541 = int_to_ptr.vmem [resolvable:$true] %s540
          %546 = dma.hbm_to_vmem [thread:$0]  %s539, 3072, %s541, %s530, 192, 192, 12
        $region44: #{tpu_custom_call.1} parent=39 // pred_fallthru
          _
        // Predicated region
        $region45: #{tpu_custom_call.1} parent=39 // pred_check
          %p547 = pneg %p114
        $region46: #{tpu_custom_call.1} parent=39 // pred_check_branch
          %549 = sbr.rel (%p547) target = $region48
        $region47: #{tpu_custom_call.1} parent=39 // pred_region
          %s550 = sand.u32 %s26, 1
          %s551 = scalar_lea.sflag [#allocation4], %s550
          %s552 = sand.u32 %s104, 1
          %s553 = smul.addr %s552, 64
          %s554 = scalar_lea.vmem [#allocation9], %s553
          %s556 = ssub.s32 1024, 1024
          %557 = vsyncadd %s551, %s556
          %s558 = smul.addr %s26, 16
          %s559 = smul.addr %s558, 64
          %s560 = scalar_lea.hbm %s3, %s559
          %s561 = sshll.u32 %s554, 4
          %s562 = int_to_ptr.vmem [resolvable:$true] %s561
          %567 = dma.hbm_to_vmem [thread:$0]  %s560, 1024, %s562, %s551, 64, 64, 4
        $region48: #{tpu_custom_call.1} parent=39 // pred_fallthru
          _
        // Predicated region
        $region49: #{tpu_custom_call.1} parent=39 // pred_check
          %p568 = pneg %p140
        $region50: #{tpu_custom_call.1} parent=39 // pred_check_branch
          %570 = sbr.rel (%p568) target = $region52
        $region51: #{tpu_custom_call.1} parent=39 // pred_region
          %p571 = scmp.lt.s32.totalorder %s26, 1
          %s572 = scalar_select %p571, %s26, 1
          %s573 = scalar_lea.vmem %s4, %s572
        $region52: #{tpu_custom_call.1} parent=39 // pred_fallthru
          _
        // Predicated region
        $region53: #{tpu_custom_call.1} parent=39 // pred_check
          %p574 = pneg %p166
        $region54: #{tpu_custom_call.1} parent=39 // pred_check_branch
          %576 = sbr.rel (%p574) target = $region56
        $region55: #{tpu_custom_call.1} parent=39 // pred_region
          %p577 = scmp.lt.s32.totalorder %s26, 1
          %s578 = scalar_select %p577, %s26, 1
          %s579 = scalar_lea.vmem %s5, %s578
        $region56: #{tpu_custom_call.1} parent=39 // pred_fallthru
          _
        // Predicated region
        $region57: #{tpu_custom_call.1} parent=39 // pred_check
          %p580 = pneg %p192
        $region58: #{tpu_custom_call.1} parent=39 // pred_check_branch
          %582 = sbr.rel (%p580) target = $region60
        $region59: #{tpu_custom_call.1} parent=39 // pred_region
          %p583 = scmp.lt.s32.totalorder %s26, 1
          %s584 = scalar_select %p583, %s26, 1
          %s585 = scalar_lea.vmem %s6, %s584
        $region60: #{tpu_custom_call.1} parent=39 // pred_fallthru
          _
        // Predicated region
        $region61: #{tpu_custom_call.1} parent=39 // pred_check
          %p586 = pneg %p218
        $region62: #{tpu_custom_call.1} parent=39 // pred_check_branch
          %588 = sbr.rel (%p586) target = $region64
        $region63: #{tpu_custom_call.1} parent=39 // pred_region
          %p589 = scmp.lt.s32.totalorder %s26, 1
          %s590 = scalar_select %p589, %s26, 1
          %s591 = scalar_lea.vmem %s7, %s590
        $region64: #{tpu_custom_call.1} parent=39 // pred_fallthru
          _
        // Predicated region
        $region65: #{tpu_custom_call.1} parent=39 // pred_check
          %p592 = pneg %p244
        $region66: #{tpu_custom_call.1} parent=39 // pred_check_branch
          %594 = sbr.rel (%p592) target = $region68
        $region67: #{tpu_custom_call.1} parent=39 // pred_region
          %p595 = scmp.lt.s32.totalorder %s26, 1
          %s596 = scalar_select %p595, %s26, 1
          %s597 = scalar_lea.vmem %s8, %s596
        $region68: #{tpu_custom_call.1} parent=39 // pred_fallthru
          _
        // Predicated region
        $region69: #{tpu_custom_call.1} parent=39 // pred_check
          %p598 = pneg %p270
        $region70: #{tpu_custom_call.1} parent=39 // pred_check_branch
          %600 = sbr.rel (%p598) target = $region72
        $region71: #{tpu_custom_call.1} parent=39 // pred_region
          %s601 = sand.u32 %s26, 1
          %s602 = scalar_lea.sflag [#allocation4], %s601
          %s603 = sand.u32 %s260, 1
          %s604 = smul.addr %s603, 256
          %s605 = scalar_lea.vmem [#allocation10], %s604
          %s607 = ssub.s32 4096, 4096
          %608 = vsyncadd %s602, %s607
          %s609 = smul.addr %s26, 64
          %s610 = smul.addr %s609, 64
          %s611 = scalar_lea.hbm %s9, %s610
          %s612 = sshll.u32 %s605, 4
          %s613 = int_to_ptr.vmem [resolvable:$true] %s612
          %618 = dma.hbm_to_vmem [thread:$0]  %s611, 4096, %s613, %s602, 256, 256, 16
        $region72: #{tpu_custom_call.1} parent=39 // pred_fallthru
          _
        // Predicated region
        $region73: #{tpu_custom_call.1} parent=39 // pred_check
          %p619 = pneg %p296
        $region74: #{tpu_custom_call.1} parent=39 // pred_check_branch
          %621 = sbr.rel (%p619) target = $region76
        $region75: #{tpu_custom_call.1} parent=39 // pred_region
          %p622 = scmp.lt.s32.totalorder %s26, 1
          %s623 = scalar_select %p622, %s26, 1
          %s624 = smul.addr %s623, 4
          %s625 = scalar_lea.vmem %s10, %s624
        $region76: #{tpu_custom_call.1} parent=39 // pred_fallthru
          _
        // Predicated region
        $region77: #{tpu_custom_call.1} parent=39 // pred_check
          %p626 = pneg %p322
        $region78: #{tpu_custom_call.1} parent=39 // pred_check_branch
          %628 = sbr.rel (%p626) target = $region80
        $region79: #{tpu_custom_call.1} parent=39 // pred_region
          %s629 = sand.u32 %s26, 1
          %s630 = scalar_lea.sflag [#allocation4], %s629
          %s631 = sand.u32 %s312, 1
          %s632 = smul.addr %s631, 256
          %s633 = scalar_lea.vmem [#allocation11], %s632
          %s635 = ssub.s32 4096, 4096
          %636 = vsyncadd %s630, %s635
          %s637 = smul.addr %s26, 64
          %s638 = smul.addr %s637, 64
          %s639 = scalar_lea.hbm %s11, %s638
          %s640 = sshll.u32 %s633, 4
          %s641 = int_to_ptr.vmem [resolvable:$true] %s640
          %646 = dma.hbm_to_vmem [thread:$0]  %s639, 4096, %s641, %s630, 64, 64, 4
        $region80: #{tpu_custom_call.1} parent=39 // pred_fallthru
          _
        // Predicated region
        $region81: #{tpu_custom_call.1} parent=39 // pred_check
          %p647 = pneg %p348
        $region82: #{tpu_custom_call.1} parent=39 // pred_check_branch
          %649 = sbr.rel (%p647) target = $region84
        $region83: #{tpu_custom_call.1} parent=39 // pred_region
          %p650 = scmp.lt.s32.totalorder %s26, 1
          %s651 = scalar_select %p650, %s26, 1
          %s652 = scalar_lea.vmem %s12, %s651
        $region84: #{tpu_custom_call.1} parent=39 // pred_fallthru
          _
      $region40: #{tpu_custom_call.1} parent=5 // pred_fallthru
        _
      %p653 = scmp.le.s32.totalorder 1, %s26
      %p654 = scmp.lt.s32.totalorder %s26, 3
      %p655 = pnand %p653, %p654
      %p656 = pneg %p655
      // Predicated region
      $region85: #{tpu_custom_call.1} parent=5 // pred_check
        _
      $region86: #{tpu_custom_call.1} parent=5 // pred_check_branch
        %658 = sbr.rel (%p655) target = $region88
      $region87: #{tpu_custom_call.1} parent=5 // pred_region
        %s659 = ssub.s32 %s26, 1
        // Predicated region
        $region89: #{tpu_custom_call.1} parent=87 // pred_check
          %p660 = pneg %p47
        $region90: #{tpu_custom_call.1} parent=87 // pred_check_branch
          %662 = sbr.rel (%p660) target = $region92
        $region91: #{tpu_custom_call.1} parent=87 // pred_region
          %663 = dma.done [#allocation4], 512
        $region92: #{tpu_custom_call.1} parent=87 // pred_fallthru
          _
        // Predicated region
        $region93: #{tpu_custom_call.1} parent=87 // pred_check
          %p664 = pneg %p68
        $region94: #{tpu_custom_call.1} parent=87 // pred_check_branch
          %666 = sbr.rel (%p664) target = $region96
        $region95: #{tpu_custom_call.1} parent=87 // pred_region
          %667 = dma.done [#allocation7], 512
        $region96: #{tpu_custom_call.1} parent=87 // pred_fallthru
          _
        %s668 = sand.u32 %s31, 1
        %s669 = scalar_lea.sflag [#allocation4], %s668
        %s670 = sand.u32 %s81, 1
        %s671 = smul.addr %s670, 192
        %s672 = scalar_lea.vmem [#allocation8], %s671
        // Predicated region
        $region97: #{tpu_custom_call.1} parent=87 // pred_check
          %p673 = pneg %p94
        $region98: #{tpu_custom_call.1} parent=87 // pred_check_branch
          %675 = sbr.rel (%p673) target = $region100
        $region99: #{tpu_custom_call.1} parent=87 // pred_region
          %676 = dma.done %s669, 3072
        $region100: #{tpu_custom_call.1} parent=87 // pred_fallthru
          _
        %s677 = sand.u32 %s31, 1
        %s678 = scalar_lea.sflag [#allocation4], %s677
        %s679 = sand.u32 %s107, 1
        %s680 = smul.addr %s679, 64
        %s681 = scalar_lea.vmem [#allocation9], %s680
        // Predicated region
        $region101: #{tpu_custom_call.1} parent=87 // pred_check
          %p682 = pneg %p120
        $region102: #{tpu_custom_call.1} parent=87 // pred_check_branch
          %684 = sbr.rel (%p682) target = $region104
        $region103: #{tpu_custom_call.1} parent=87 // pred_region
          %685 = dma.done %s678, 1024
        $region104: #{tpu_custom_call.1} parent=87 // pred_fallthru
          _
        %s686 = sand.u32 %s31, 1
        %s687 = scalar_lea.sflag [#allocation4], %s686
        %s688 = sand.u32 %s263, 1
        %s689 = smul.addr %s688, 256
        %s690 = scalar_lea.vmem [#allocation10], %s689
        // Predicated region
        $region105: #{tpu_custom_call.1} parent=87 // pred_check
          %p691 = pneg %p276
        $region106: #{tpu_custom_call.1} parent=87 // pred_check_branch
          %693 = sbr.rel (%p691) target = $region108
        $region107: #{tpu_custom_call.1} parent=87 // pred_region
          %694 = dma.done %s687, 4096
        $region108: #{tpu_custom_call.1} parent=87 // pred_fallthru
          _
        %s695 = sand.u32 %s31, 1
        %s696 = scalar_lea.sflag [#allocation4], %s695
        %s697 = sand.u32 %s315, 1
        %s698 = smul.addr %s697, 256
        %s699 = scalar_lea.vmem [#allocation11], %s698
        // Predicated region
        $region109: #{tpu_custom_call.1} parent=87 // pred_check
          %p700 = pneg %p328
        $region110: #{tpu_custom_call.1} parent=87 // pred_check_branch
          %702 = sbr.rel (%p700) target = $region112
        $region111: #{tpu_custom_call.1} parent=87 // pred_region
          %703 = dma.done %s696, 4096
        $region112: #{tpu_custom_call.1} parent=87 // pred_fallthru
          _
        // Predicated region
        $region113: #{tpu_custom_call.1} parent=87 // pred_check
          %p704 = pneg %p417
        $region114: #{tpu_custom_call.1} parent=87 // pred_check_branch
          %706 = sbr.rel (%p704) target = $region116
        $region115: #{tpu_custom_call.1} parent=87 // pred_region
          %707 = dma.done [#allocation7], 1024
        $region116: #{tpu_custom_call.1} parent=87 // pred_fallthru
          _
        %p708 = pneg %p47
        %p709 = pneg %p44
        %p710 = pneg %p68
        %p711 = pneg %p65
        %s712 = sand.u32 %s31, 1
        %s713 = scalar_lea.sflag [#allocation4], %s712
        %s714 = sand.u32 %s81, 1
        %s715 = smul.addr %s714, 192
        %s716 = scalar_lea.vmem [#allocation8], %s715
        %p717 = pneg %p94
        %p718 = pneg %p91
        %s719 = sand.u32 %s31, 1
        %s720 = scalar_lea.sflag [#allocation4], %s719
        %s721 = sand.u32 %s107, 1
        %s722 = smul.addr %s721, 64
        %s723 = scalar_lea.vmem [#allocation9], %s722
        %p724 = pneg %p120
        %p725 = pneg %p117
        %p726 = scmp.lt.s32.totalorder %s31, 1
        %s727 = scalar_select %p726, %s31, 1
        %s728 = scalar_lea.vmem %s4, %s727
        %p729 = pneg %p146
        %p730 = pneg %p143
        %p731 = scmp.lt.s32.totalorder %s31, 1
        %s732 = scalar_select %p731, %s31, 1
        %s733 = scalar_lea.vmem %s5, %s732
        %p734 = pneg %p172
        %p735 = pneg %p169
        %p736 = scmp.lt.s32.totalorder %s31, 1
        %s737 = scalar_select %p736, %s31, 1
        %s738 = scalar_lea.vmem %s6, %s737
        %p739 = pneg %p198
        %p740 = pneg %p195
        %p741 = scmp.lt.s32.totalorder %s31, 1
        %s742 = scalar_select %p741, %s31, 1
        %s743 = scalar_lea.vmem %s7, %s742
        %p744 = pneg %p224
        %p745 = pneg %p221
        %p746 = scmp.lt.s32.totalorder %s31, 1
        %s747 = scalar_select %p746, %s31, 1
        %s748 = scalar_lea.vmem %s8, %s747
        %p749 = pneg %p250
        %p750 = pneg %p247
        %s751 = sand.u32 %s31, 1
        %s752 = scalar_lea.sflag [#allocation4], %s751
        %s753 = sand.u32 %s263, 1
        %s754 = smul.addr %s753, 256
        %s755 = scalar_lea.vmem [#allocation10], %s754
        %p756 = pneg %p276
        %p757 = pneg %p273
        %p758 = scmp.lt.s32.totalorder %s31, 1
        %s759 = scalar_select %p758, %s31, 1
        %s760 = smul.addr %s759, 4
        %s761 = scalar_lea.vmem %s10, %s760
        %p762 = pneg %p302
        %p763 = pneg %p299
        %s764 = sand.u32 %s31, 1
        %s765 = scalar_lea.sflag [#allocation4], %s764
        %s766 = sand.u32 %s315, 1
        %s767 = smul.addr %s766, 256
        %s768 = scalar_lea.vmem [#allocation11], %s767
        %p769 = pneg %p328
        %p770 = pneg %p325
        %p771 = scmp.lt.s32.totalorder %s31, 1
        %s772 = scalar_select %p771, %s31, 1
        %s773 = scalar_lea.vmem %s12, %s772
        %p774 = pneg %p354
        %p775 = pneg %p351
        %p776 = pneg %p375
        %p777 = pneg %p372
        %p778 = pneg %p396
        %p779 = pneg %p393
        %p780 = pneg %p417
        %p781 = pneg %p414
        %p782 = pneg %p438
        %p783 = pneg %p435
        %p784 = pneg %p459
        %p785 = pneg %p456
        %p786 = scmp.lt.s32.totalorder %s31, 1
        %s787 = scalar_select %p786, %s31, 1
        %s788 = scalar_lea.vmem %s4, %s787
        %p789 = scmp.lt.s32.totalorder %s31, 1
        %s790 = scalar_select %p789, %s31, 1
        %s791 = scalar_lea.vmem %s5, %s790
        %p792 = scmp.lt.s32.totalorder %s31, 1
        %s793 = scalar_select %p792, %s31, 1
        %s794 = scalar_lea.vmem %s6, %s793
        %p795 = scmp.lt.s32.totalorder %s31, 1
        %s796 = scalar_select %p795, %s31, 1
        %s797 = scalar_lea.vmem %s7, %s796
        %p798 = scmp.lt.s32.totalorder %s31, 1
        %s799 = scalar_select %p798, %s31, 1
        %s800 = scalar_lea.vmem %s8, %s799
        %p801 = scmp.lt.s32.totalorder %s31, 1
        %s802 = scalar_select %p801, %s31, 1
        %s803 = smul.addr %s802, 4
        %s804 = scalar_lea.vmem %s10, %s803
        %p805 = scmp.lt.s32.totalorder %s31, 1
        %s806 = scalar_select %p805, %s31, 1
        %s807 = scalar_lea.vmem %s12, %s806
        %p809 = scmp.eq.s32.totalorder %s31, 0
        // Predicated region
        $region117: #{tpu_custom_call.1} parent=87 // pred_check
          %p810 = pneg %p809
        $region118: #{tpu_custom_call.1} parent=87 // pred_check_branch
          %812 = sbr.rel (%p810) target = $region120
        $region119: #{tpu_custom_call.1} parent=87 // pred_region
          %v813 = vld [vmem:[#allocation3] sm:$0xff]
          %v814 = vld [vmem:[#allocation3 + $0x8] sm:$0xff]
          %v815 = vld [vmem:[#allocation3 + $0x10] sm:$0xff]
          %v816 = vld [vmem:[#allocation3 + $0x18] sm:$0xff]
          %817 = vst [vmem:[#allocation2] sm:$0xff] %v813
          %818 = vst [vmem:[#allocation2 + $0x8] sm:$0xff] %v814
          %819 = vst [vmem:[#allocation2 + $0x10] sm:$0xff] %v815
          %820 = vst [vmem:[#allocation2 + $0x18] sm:$0xff] %v816
        $region120: #{tpu_custom_call.1} parent=87 // pred_fallthru
          _
        %v821 = vld [vmem:[#allocation2] sm:$0xff]
        %v822 = vld [vmem:[#allocation2 + $0x8] sm:$0xff]
        %v823 = vld [vmem:[#allocation2 + $0x10] sm:$0xff]
        %v824 = vld [vmem:[#allocation2 + $0x18] sm:$0xff]
        %v825 = vld [vmem:[#allocation6] sm:$0xff]
        %v826 = vld [vmem:[#allocation6 + $0x8] sm:$0xff]
        %v827 = vld [vmem:[#allocation6 + $0x10] sm:$0xff]
        %v828 = vld [vmem:[#allocation6 + $0x18] sm:$0xff]
        %v829 = vld [vmem:[%s791] sm:$0x1]
        %v830 = vld [vmem:[%s794] sm:$0x1]
        %831 = vadd.xlane.f32.xlu0 %v821
        %v832 = vpop.xlane.xlu0 %831
        %833 = vadd.xlane.f32.xlu0 %v822
        %v834 = vpop.xlane.xlu0 %833
        %835 = vadd.xlane.f32.xlu0 %v823
        %v836 = vpop.xlane.xlu0 %835
        %837 = vadd.xlane.f32.xlu0 %v824
        %v838 = vpop.xlane.xlu0 %837
        %v839 = vrcp.pop 128.0
        %v840 = vmul.f32 %v832, %v839
        %v841 = vmul.f32 %v834, %v839
        %v842 = vmul.f32 %v836, %v839
        %v843 = vmul.f32 %v838, %v839
        %v844 = vsub.f32 %v821, %v840
        %v845 = vsub.f32 %v822, %v841
        %v846 = vsub.f32 %v823, %v842
        %v847 = vsub.f32 %v824, %v843
        %v848 = vmul.f32 %v844, %v844
        %v849 = vmul.f32 %v845, %v845
        %v850 = vmul.f32 %v846, %v846
        %v851 = vmul.f32 %v847, %v847
        %852 = vadd.xlane.f32.xlu0 %v848
        %v853 = vpop.xlane.xlu0 %852
        %854 = vadd.xlane.f32.xlu0 %v849
        %v855 = vpop.xlane.xlu0 %854
        %856 = vadd.xlane.f32.xlu0 %v850
        %v857 = vpop.xlane.xlu0 %856
        %858 = vadd.xlane.f32.xlu0 %v851
        %v859 = vpop.xlane.xlu0 %858
        %v860 = vmul.f32 %v853, %v839
        %v861 = vmul.f32 %v855, %v839
        %v862 = vmul.f32 %v857, %v839
        %v863 = vmul.f32 %v859, %v839
        %v864 = vadd.f32 %v860, 1e-05
        %v865 = vadd.f32 %v861, 1e-05
        %v866 = vadd.f32 %v862, 1e-05
        %v867 = vadd.f32 %v863, 1e-05
        %v868 = vrsqrt.pop %v864
        %v869 = vrsqrt.pop %v865
        %v870 = vrsqrt.pop %v866
        %v871 = vrsqrt.pop %v867
        %v872 = vmul.f32 %v844, %v868
        %v873 = vmul.f32 %v845, %v869
        %v874 = vmul.f32 %v846, %v870
        %v875 = vmul.f32 %v847, %v871
        %v877 = vlaneseq
        %v878 = vshrl.u32 %v877, 7
        %v879 = vsub.s32 0, %v878
        %v880 = vrot.slane %v829, %v879
        %v882 = vmul.f32 %v872, %v880
        %v883 = vmul.f32 %v873, %v880
        %v884 = vmul.f32 %v874, %v880
        %v885 = vmul.f32 %v875, %v880
        %v887 = vlaneseq
        %v888 = vshrl.u32 %v887, 7
        %v889 = vsub.s32 0, %v888
        %v890 = vrot.slane %v830, %v889
        %v892 = vadd.f32 %v882, %v890
        %v893 = vadd.f32 %v883, %v890
        %v894 = vadd.f32 %v884, %v890
        %v895 = vadd.f32 %v885, %v890
        %v896 = vpack.c.bf16 %v893, %v892
        %v897 = vpack.c.bf16 %v895, %v894
        %v898 = vld [vmem:[%s672] sm:$0xff]
        %v899 = vld [vmem:[%s672 + $0x8] sm:$0xf]
        %v900 = vld [vmem:[%s672 + $0xc] sm:$0xff]
        %v901 = vld [vmem:[%s672 + $0x14] sm:$0xf]
        %v902 = vld [vmem:[%s672 + $0x18] sm:$0xff]
        %v903 = vld [vmem:[%s672 + $0x20] sm:$0xf]
        %v904 = vld [vmem:[%s672 + $0x24] sm:$0xff]
        %v905 = vld [vmem:[%s672 + $0x2c] sm:$0xf]
        %v906 = vld [vmem:[%s672 + $0x30] sm:$0xff]
        %v907 = vld [vmem:[%s672 + $0x38] sm:$0xf]
        %v908 = vld [vmem:[%s672 + $0x3c] sm:$0xff]
        %v909 = vld [vmem:[%s672 + $0x44] sm:$0xf]
        %v910 = vld [vmem:[%s672 + $0x48] sm:$0xff]
        %v911 = vld [vmem:[%s672 + $0x50] sm:$0xf]
        %v912 = vld [vmem:[%s672 + $0x54] sm:$0xff]
        %v913 = vld [vmem:[%s672 + $0x5c] sm:$0xf]
        %v914 = vld [vmem:[%s672 + $0x60] sm:$0xff]
        %v915 = vld [vmem:[%s672 + $0x68] sm:$0xf]
        %v916 = vld [vmem:[%s672 + $0x6c] sm:$0xff]
        %v917 = vld [vmem:[%s672 + $0x74] sm:$0xf]
        %v918 = vld [vmem:[%s672 + $0x78] sm:$0xff]
        %v919 = vld [vmem:[%s672 + $0x80] sm:$0xf]
        %v920 = vld [vmem:[%s672 + $0x84] sm:$0xff]
        %v921 = vld [vmem:[%s672 + $0x8c] sm:$0xf]
        %v922 = vld [vmem:[%s672 + $0x90] sm:$0xff]
        %v923 = vld [vmem:[%s672 + $0x98] sm:$0xf]
        %v924 = vld [vmem:[%s672 + $0x9c] sm:$0xff]
        %v925 = vld [vmem:[%s672 + $0xa4] sm:$0xf]
        %v926 = vld [vmem:[%s672 + $0xa8] sm:$0xff]
        %v927 = vld [vmem:[%s672 + $0xb0] sm:$0xf]
        %v928 = vld [vmem:[%s672 + $0xb4] sm:$0xff]
        %v929 = vld [vmem:[%s672 + $0xbc] sm:$0xf]
        %v962 = vunpack.c.l.b16 %v898
        %v963 = vunpack.c.h.b16 %v898
        %v964 = vunpack.c.l.b16 %v899
        %v965 = vunpack.c.l.b16 %v900
        %v966 = vunpack.c.h.b16 %v900
        %v967 = vunpack.c.l.b16 %v901
        %v968 = vunpack.c.l.b16 %v902
        %v969 = vunpack.c.h.b16 %v902
        %v970 = vunpack.c.l.b16 %v903
        %v971 = vunpack.c.l.b16 %v904
        %v972 = vunpack.c.h.b16 %v904
        %v973 = vunpack.c.l.b16 %v905
        %v974 = vunpack.c.l.b16 %v906
        %v975 = vunpack.c.h.b16 %v906
        %v976 = vunpack.c.l.b16 %v907
        %v977 = vunpack.c.l.b16 %v908
        %v978 = vunpack.c.h.b16 %v908
        %v979 = vunpack.c.l.b16 %v909
        %v980 = vunpack.c.l.b16 %v910
        %v981 = vunpack.c.h.b16 %v910
        %v982 = vunpack.c.l.b16 %v911
        %v983 = vunpack.c.l.b16 %v912
        %v984 = vunpack.c.h.b16 %v912
        %v985 = vunpack.c.l.b16 %v913
        %v986 = vunpack.c.l.b16 %v914
        %v987 = vunpack.c.h.b16 %v914
        %v988 = vunpack.c.l.b16 %v915
        %v989 = vunpack.c.l.b16 %v916
        %v990 = vunpack.c.h.b16 %v916
        %v991 = vunpack.c.l.b16 %v917
        %v992 = vunpack.c.l.b16 %v918
        %v993 = vunpack.c.h.b16 %v918
        %v994 = vunpack.c.l.b16 %v919
        %v995 = vunpack.c.l.b16 %v920
        %v996 = vunpack.c.h.b16 %v920
        %v997 = vunpack.c.l.b16 %v921
        %v998 = vunpack.c.l.b16 %v922
        %v999 = vunpack.c.h.b16 %v922
        %v1000 = vunpack.c.l.b16 %v923
        %v1001 = vunpack.c.l.b16 %v924
        %v1002 = vunpack.c.h.b16 %v924
        %v1003 = vunpack.c.l.b16 %v925
        %v1004 = vunpack.c.l.b16 %v926
        %v1005 = vunpack.c.h.b16 %v926
        %v1006 = vunpack.c.l.b16 %v927
        %v1007 = vunpack.c.l.b16 %v928
        %v1008 = vunpack.c.h.b16 %v928
        %v1009 = vunpack.c.l.b16 %v929
        %v1010 = vpack.c.b16 %v965, %v962
        %v1011 = vpack.c.b16 %v966, %v963
        %v1012 = vpack.c.b16 %v967, %v964
        %v1013 = vpack.c.b16 %v971, %v968
        %v1014 = vpack.c.b16 %v972, %v969
        %v1015 = vpack.c.b16 %v973, %v970
        %v1016 = vpack.c.b16 %v977, %v974
        %v1017 = vpack.c.b16 %v978, %v975
        %v1018 = vpack.c.b16 %v979, %v976
        %v1019 = vpack.c.b16 %v983, %v980
        %v1020 = vpack.c.b16 %v984, %v981
        %v1021 = vpack.c.b16 %v985, %v982
        %v1022 = vpack.c.b16 %v989, %v986
        %v1023 = vpack.c.b16 %v990, %v987
        %v1024 = vpack.c.b16 %v991, %v988
        %v1025 = vpack.c.b16 %v995, %v992
        %v1026 = vpack.c.b16 %v996, %v993
        %v1027 = vpack.c.b16 %v997, %v994
        %v1028 = vpack.c.b16 %v1001, %v998
        %v1029 = vpack.c.b16 %v1002, %v999
        %v1030 = vpack.c.b16 %v1003, %v1000
        %v1031 = vpack.c.b16 %v1007, %v1004
        %v1032 = vpack.c.b16 %v1008, %v1005
        %v1033 = vpack.c.b16 %v1009, %v1006
        %1058 = vmatprep.subr.bf16.mxu0 %v1011
        %1059 = vmatpush1.bf16.msra.mxu0 %v1010
        %1060 = vmatprep.subr.bf16.mxu0 %v1014
        %1061 = vmatpush1.bf16.msra.mxu0 %v1013
        %1062 = vmatprep.subr.bf16.mxu0 %v1017
        %1063 = vmatpush1.bf16.msra.mxu0 %v1016
        %1064 = vmatprep.subr.bf16.mxu0 %v1020
        %1065 = vmatpush1.bf16.msra.mxu0 %v1019
        %1066 = vmatprep.subr.bf16.mxu0 %v1023
        %1067 = vmatpush1.bf16.msra.mxu0 %v1022
        %1068 = vmatprep.subr.bf16.mxu0 %v1026
        %1069 = vmatpush1.bf16.msra.mxu0 %v1025
        %1070 = vmatprep.subr.bf16.mxu0 %v1029
        %1071 = vmatpush1.bf16.msra.mxu0 %v1028
        %1072 = vmatprep.subr.bf16.mxu0 %v1032
        %1073 = vmatpush1.bf16.msra.mxu0 %v1031
        %1074 = vmatprep.subr.bf16.mxu0 0
        %1075 = vmatpush1.bf16.msra.mxu0 0
        %1076 = vmatprep.subr.bf16.mxu0 0
        %1077 = vmatpush1.bf16.msra.mxu0 0
        %1078 = vmatprep.subr.bf16.mxu0 0
        %1079 = vmatpush1.bf16.msra.mxu0 0
        %1080 = vmatprep.subr.bf16.mxu0 0
        %1081 = vmatpush1.bf16.msra.mxu0 0
        %1082 = vmatprep.subr.bf16.mxu0 0
        %1083 = vmatpush1.bf16.msra.mxu0 0
        %1084 = vmatprep.subr.bf16.mxu0 0
        %1085 = vmatpush1.bf16.msra.mxu0 0
        %1086 = vmatprep.subr.bf16.mxu0 0
        %1087 = vmatpush1.bf16.msra.mxu0 0
        %1088 = vmatprep.subr.bf16.mxu0 0
        %1089 = vmatpush1.bf16.msra.mxu0 0
        %1090 = vmatprep.mubr.bf16.mxu0 0
        %1091 = vmatmul.mubr.bf16.gmra.mrb[0].mxu0 %v896
        %v1092 = vpop.f32.mrb[0].mxu0
        %v1093 = vadd.f32 0.0, %v1092
        %v1094 = vpop.f32.mrb[0].mxu0
        %v1095 = vadd.f32 0.0, %v1094
        %v1096 = vpop.f32.mrb[0].mxu0
        %v1097 = vadd.f32 0.0, %v1096
        %v1098 = vpop.f32.mrb[0].mxu0
        %v1099 = vadd.f32 0.0, %v1098
        %1100 = vmatprep.mubr.bf16.mxu0 0
        %1101 = vmatmul.mubr.bf16.gmra.mrb[0].mxu0 %v897
        %v1102 = vpop.f32.mrb[0].mxu0
        %v1103 = vadd.f32 0.0, %v1102
        %v1104 = vpop.f32.mrb[0].mxu0
        %v1105 = vadd.f32 0.0, %v1104
        %v1106 = vpop.f32.mrb[0].mxu0
        %v1107 = vadd.f32 0.0, %v1106
        %v1108 = vpop.f32.mrb[0].mxu0
        %v1109 = vadd.f32 0.0, %v1108
        %1110 = vdwg.mxu0
        %1111 = vmatprep.subr.bf16.mxu0 0
        %1112 = vmatpush1.bf16.msra.mxu0 %v1012
        %1113 = vmatprep.subr.bf16.mxu0 0
        %1114 = vmatpush1.bf16.msra.mxu0 %v1015
        %1115 = vmatprep.subr.bf16.mxu0 0
        %1116 = vmatpush1.bf16.msra.mxu0 %v1018
        %1117 = vmatprep.subr.bf16.mxu0 0
        %1118 = vmatpush1.bf16.msra.mxu0 %v1021
        %1119 = vmatprep.subr.bf16.mxu0 0
        %1120 = vmatpush1.bf16.msra.mxu0 %v1024
        %1121 = vmatprep.subr.bf16.mxu0 0
        %1122 = vmatpush1.bf16.msra.mxu0 %v1027
        %1123 = vmatprep.subr.bf16.mxu0 0
        %1124 = vmatpush1.bf16.msra.mxu0 %v1030
        %1125 = vmatprep.subr.bf16.mxu0 0
        %1126 = vmatpush1.bf16.msra.mxu0 %v1033
        %1127 = vmatprep.subr.bf16.mxu0 0
        %1128 = vmatpush1.bf16.msra.mxu0 0
        %1129 = vmatprep.subr.bf16.mxu0 0
        %1130 = vmatpush1.bf16.msra.mxu0 0
        %1131 = vmatprep.subr.bf16.mxu0 0
        %1132 = vmatpush1.bf16.msra.mxu0 0
        %1133 = vmatprep.subr.bf16.mxu0 0
        %1134 = vmatpush1.bf16.msra.mxu0 0
        %1135 = vmatprep.subr.bf16.mxu0 0
        %1136 = vmatpush1.bf16.msra.mxu0 0
        %1137 = vmatprep.subr.bf16.mxu0 0
        %1138 = vmatpush1.bf16.msra.mxu0 0
        %1139 = vmatprep.subr.bf16.mxu0 0
        %1140 = vmatpush1.bf16.msra.mxu0 0
        %1141 = vmatprep.subr.bf16.mxu0 0
        %1142 = vmatpush1.bf16.msra.mxu0 0
        %1143 = vmatprep.mubr.bf16.mxu0 0
        %1144 = vmatmul.mubr.bf16.gmra.mrb[0].mxu0 %v896
        %v1145 = vpop.f32.mrb[0].mxu0
        %v1146 = vadd.f32 0.0, %v1145
        %v1147 = vpop.f32.mrb[0].mxu0
        %v1148 = vpop.f32.mrb[0].mxu0
        %v1149 = vadd.f32 0.0, %v1148
        %v1150 = vpop.f32.mrb[0].mxu0
        %1151 = vmatprep.mubr.bf16.mxu0 0
        %1152 = vmatmul.mubr.bf16.gmra.mrb[0].mxu0 %v897
        %v1153 = vpop.f32.mrb[0].mxu0
        %v1154 = vadd.f32 0.0, %v1153
        %v1155 = vpop.f32.mrb[0].mxu0
        %v1156 = vpop.f32.mrb[0].mxu0
        %v1157 = vadd.f32 0.0, %v1156
        %v1158 = vpop.f32.mrb[0].mxu0
        %1159 = vdwg.mxu0
        %v1160 = vmul.f32 %v1093, 0.088388346
        %v1161 = vmul.f32 %v1097, 0.088388346
        %v1162 = vmul.f32 %v1103, 0.088388346
        %v1163 = vmul.f32 %v1107, 0.088388346
        %v1164 = vpack.c.bf16 %v1161, %v1160
        %v1165 = vpack.c.bf16 %v1163, %v1162
        %v1166 = vpack.c.bf16 %v1099, %v1095
        %v1167 = vpack.c.bf16 %v1109, %v1105
        %v1168 = vpack.c.bf16 %v1149, %v1146
        %v1169 = vpack.c.bf16 %v1157, %v1154
        %vm1170 = vcmask 261120
        %v1172 = vsel %vm1170, %v1164, 0
        %v1175 = vsel %vm1170, %v1165, 0
        %v1178 = vsel %vm1170, %v1166, 0
        %v1181 = vsel %vm1170, %v1167, 0
        %1183 = vmatprep.subr.bf16.mxu0 0
        %1184 = vmatpush1.bf16.xpose.msra.mxu0 %v1178
        %1185 = vmatprep.subr.bf16.mxu0 0
        %1186 = vmatpush1.bf16.xpose.msra.mxu0 %v1181
        %1187 = vmatprep.subr.bf16.mxu0 0
        %1188 = vmatpush1.bf16.xpose.msra.mxu0 0
        %1189 = vmatprep.subr.bf16.mxu0 0
        %1190 = vmatpush1.bf16.xpose.msra.mxu0 0
        %1191 = vmatprep.subr.bf16.mxu0 0
        %1192 = vmatpush1.bf16.xpose.msra.mxu0 0
        %1193 = vmatprep.subr.bf16.mxu0 0
        %1194 = vmatpush1.bf16.xpose.msra.mxu0 0
        %1195 = vmatprep.subr.bf16.mxu0 0
        %1196 = vmatpush1.bf16.xpose.msra.mxu0 0
        %1197 = vmatprep.subr.bf16.mxu0 0
        %1198 = vmatpush1.bf16.xpose.msra.mxu0 0
        %1199 = vmatprep.subr.bf16.mxu0 0
        %1200 = vmatpush1.bf16.xpose.msra.mxu0 0
        %1201 = vmatprep.subr.bf16.mxu0 0
        %1202 = vmatpush1.bf16.xpose.msra.mxu0 0
        %1203 = vmatprep.subr.bf16.mxu0 0
        %1204 = vmatpush1.bf16.xpose.msra.mxu0 0
        %1205 = vmatprep.subr.bf16.mxu0 0
        %1206 = vmatpush1.bf16.xpose.msra.mxu0 0
        %1207 = vmatprep.subr.bf16.mxu0 0
        %1208 = vmatpush1.bf16.xpose.msra.mxu0 0
        %1209 = vmatprep.subr.bf16.mxu0 0
        %1210 = vmatpush1.bf16.xpose.msra.mxu0 0
        %1211 = vmatprep.subr.bf16.mxu0 0
        %1212 = vmatpush1.bf16.xpose.msra.mxu0 0
        %1213 = vmatprep.subr.bf16.mxu0 0
        %1214 = vmatpush1.bf16.xpose.msra.mxu0 0
        %1215 = vmatprep.mubr.bf16.mxu0 0
        %1216 = vmatmul.mubr.bf16.gmra.mrb[0].mxu0 %v1172
        %v1217 = vpop.f32.mrb[0].mxu0
        %v1218 = vadd.f32 %v825, %v1217
        %v1219 = vpop.f32.mrb[0].mxu0
        %v1220 = vpop.f32.mrb[0].mxu0
        %v1221 = vadd.f32 %v826, %v1220
        %v1222 = vpop.f32.mrb[0].mxu0
        %1223 = vmatprep.mubr.bf16.mxu0 0
        %1224 = vmatmul.mubr.bf16.gmra.mrb[0].mxu0 %v1175
        %v1225 = vpop.f32.mrb[0].mxu0
        %v1226 = vadd.f32 %v827, %v1225
        %v1227 = vpop.f32.mrb[0].mxu0
        %v1228 = vpop.f32.mrb[0].mxu0
        %v1229 = vadd.f32 %v828, %v1228
        %v1230 = vpop.f32.mrb[0].mxu0
        %1231 = vdwg.mxu0
        %v1232 = vsel %vm1170, %v1218, -inf
        %1233 = vmax.xlane.f32.xlu0 %v1232
        %v1234 = vpop.xlane.xlu0 %1233
        %v1235 = vsel %vm1170, %v1221, -inf
        %1236 = vmax.xlane.f32.xlu0 %v1235
        %v1237 = vpop.xlane.xlu0 %1236
        %v1238 = vsel %vm1170, %v1226, -inf
        %1239 = vmax.xlane.f32.xlu0 %v1238
        %v1240 = vpop.xlane.xlu0 %1239
        %v1241 = vsel %vm1170, %v1229, -inf
        %1242 = vmax.xlane.f32.xlu0 %v1241
        %v1243 = vpop.xlane.xlu0 %1242
        %v1244 = vsub.f32 %v1218, %v1234
        %v1245 = vsub.f32 %v1221, %v1237
        %v1246 = vsub.f32 %v1226, %v1240
        %v1247 = vsub.f32 %v1229, %v1243
        %v1248 = vmul.f32 %v1244, 1.442695
        %v1249 = vpow.pop %v1248
        %v1250 = vmul.f32 %v1245, 1.442695
        %v1251 = vpow.pop %v1250
        %v1252 = vmul.f32 %v1246, 1.442695
        %v1253 = vpow.pop %v1252
        %v1254 = vmul.f32 %v1247, 1.442695
        %v1255 = vpow.pop %v1254
        %v1256 = vsel %vm1170, %v1249, 0.0
        %1257 = vadd.xlane.f32.xlu0 %v1256
        %v1258 = vpop.xlane.xlu0 %1257
        %v1259 = vsel %vm1170, %v1251, 0.0
        %1260 = vadd.xlane.f32.xlu0 %v1259
        %v1261 = vpop.xlane.xlu0 %1260
        %v1262 = vsel %vm1170, %v1253, 0.0
        %1263 = vadd.xlane.f32.xlu0 %v1262
        %v1264 = vpop.xlane.xlu0 %1263
        %v1265 = vsel %vm1170, %v1255, 0.0
        %1266 = vadd.xlane.f32.xlu0 %v1265
        %v1267 = vpop.xlane.xlu0 %1266
        %v1268 = vrcp.pop %v1258
        %v1269 = vrcp.pop %v1261
        %v1270 = vrcp.pop %v1264
        %v1271 = vrcp.pop %v1267
        %v1272 = vmul.f32 %v1249, %v1268
        %v1273 = vmul.f32 %v1251, %v1269
        %v1274 = vmul.f32 %v1253, %v1270
        %v1275 = vmul.f32 %v1255, %v1271
        %v1276 = vpack.c.bf16 %v1273, %v1272
        %v1277 = vpack.c.bf16 %v1275, %v1274
        %v1279 = vsel %vm1170, %v1276, 0
        %v1282 = vsel %vm1170, %v1277, 0
        %1284 = vmatprep.subr.bf16.mxu0 0
        %1285 = vmatpush1.bf16.msra.mxu0 %v1168
        %1286 = vmatprep.subr.bf16.mxu0 0
        %1287 = vmatpush1.bf16.msra.mxu0 %v1169
        %1288 = vmatprep.subr.bf16.mxu0 0
        %1289 = vmatpush1.bf16.msra.mxu0 0
        %1290 = vmatprep.subr.bf16.mxu0 0
        %1291 = vmatpush1.bf16.msra.mxu0 0
        %1292 = vmatprep.subr.bf16.mxu0 0
        %1293 = vmatpush1.bf16.msra.mxu0 0
        %1294 = vmatprep.subr.bf16.mxu0 0
        %1295 = vmatpush1.bf16.msra.mxu0 0
        %1296 = vmatprep.subr.bf16.mxu0 0
        %1297 = vmatpush1.bf16.msra.mxu0 0
        %1298 = vmatprep.subr.bf16.mxu0 0
        %1299 = vmatpush1.bf16.msra.mxu0 0
        %1300 = vmatprep.subr.bf16.mxu0 0
        %1301 = vmatpush1.bf16.msra.mxu0 0
        %1302 = vmatprep.subr.bf16.mxu0 0
        %1303 = vmatpush1.bf16.msra.mxu0 0
        %1304 = vmatprep.subr.bf16.mxu0 0
        %1305 = vmatpush1.bf16.msra.mxu0 0
        %1306 = vmatprep.subr.bf16.mxu0 0
        %1307 = vmatpush1.bf16.msra.mxu0 0
        %1308 = vmatprep.subr.bf16.mxu0 0
        %1309 = vmatpush1.bf16.msra.mxu0 0
        %1310 = vmatprep.subr.bf16.mxu0 0
        %1311 = vmatpush1.bf16.msra.mxu0 0
        %1312 = vmatprep.subr.bf16.mxu0 0
        %1313 = vmatpush1.bf16.msra.mxu0 0
        %1314 = vmatprep.subr.bf16.mxu0 0
        %1315 = vmatpush1.bf16.msra.mxu0 0
        %1316 = vmatprep.mubr.bf16.mxu0 0
        %1317 = vmatmul.mubr.bf16.gmra.mrb[0].mxu0 %v1279
        %v1318 = vpop.f32.mrb[0].mxu0
        %v1319 = vadd.f32 0.0, %v1318
        %v1320 = vpop.f32.mrb[0].mxu0
        %v1321 = vpop.f32.mrb[0].mxu0
        %v1322 = vadd.f32 0.0, %v1321
        %v1323 = vpop.f32.mrb[0].mxu0
        %1324 = vmatprep.mubr.bf16.mxu0 0
        %1325 = vmatmul.mubr.bf16.gmra.mrb[0].mxu0 %v1282
        %v1326 = vpop.f32.mrb[0].mxu0
        %v1327 = vadd.f32 0.0, %v1326
        %v1328 = vpop.f32.mrb[0].mxu0
        %v1329 = vpop.f32.mrb[0].mxu0
        %v1330 = vadd.f32 0.0, %v1329
        %v1331 = vpop.f32.mrb[0].mxu0
        %1332 = vdwg.mxu0
        %1335 = vrot.lane.b32.xlu0 %v1164, 96
        %v1336 = vpop.permute.xlu0 %1335
        %1337 = vrot.lane.b32.xlu0 %v1165, 96
        %v1338 = vpop.permute.xlu0 %1337
        %1341 = vrot.lane.b32.xlu0 %v1166, 96
        %v1342 = vpop.permute.xlu0 %1341
        %1343 = vrot.lane.b32.xlu0 %v1167, 96
        %v1344 = vpop.permute.xlu0 %1343
        %v1346 = vsel %vm1170, %v1336, 0
        %v1349 = vsel %vm1170, %v1338, 0
        %v1352 = vsel %vm1170, %v1342, 0
        %v1355 = vsel %vm1170, %v1344, 0
        %1357 = vmatprep.subr.bf16.mxu0 0
        %1358 = vmatpush1.bf16.xpose.msra.mxu0 %v1352
        %1359 = vmatprep.subr.bf16.mxu0 0
        %1360 = vmatpush1.bf16.xpose.msra.mxu0 %v1355
        %1361 = vmatprep.subr.bf16.mxu0 0
        %1362 = vmatpush1.bf16.xpose.msra.mxu0 0
        %1363 = vmatprep.subr.bf16.mxu0 0
        %1364 = vmatpush1.bf16.xpose.msra.mxu0 0
        %1365 = vmatprep.subr.bf16.mxu0 0
        %1366 = vmatpush1.bf16.xpose.msra.mxu0 0
        %1367 = vmatprep.subr.bf16.mxu0 0
        %1368 = vmatpush1.bf16.xpose.msra.mxu0 0
        %1369 = vmatprep.subr.bf16.mxu0 0
        %1370 = vmatpush1.bf16.xpose.msra.mxu0 0
        %1371 = vmatprep.subr.bf16.mxu0 0
        %1372 = vmatpush1.bf16.xpose.msra.mxu0 0
        %1373 = vmatprep.subr.bf16.mxu0 0
        %1374 = vmatpush1.bf16.xpose.msra.mxu0 0
        %1375 = vmatprep.subr.bf16.mxu0 0
        %1376 = vmatpush1.bf16.xpose.msra.mxu0 0
        %1377 = vmatprep.subr.bf16.mxu0 0
        %1378 = vmatpush1.bf16.xpose.msra.mxu0 0
        %1379 = vmatprep.subr.bf16.mxu0 0
        %1380 = vmatpush1.bf16.xpose.msra.mxu0 0
        %1381 = vmatprep.subr.bf16.mxu0 0
        %1382 = vmatpush1.bf16.xpose.msra.mxu0 0
        %1383 = vmatprep.subr.bf16.mxu0 0
        %1384 = vmatpush1.bf16.xpose.msra.mxu0 0
        %1385 = vmatprep.subr.bf16.mxu0 0
        %1386 = vmatpush1.bf16.xpose.msra.mxu0 0
        %1387 = vmatprep.subr.bf16.mxu0 0
        %1388 = vmatpush1.bf16.xpose.msra.mxu0 0
        %1389 = vmatprep.mubr.bf16.mxu0 0
        %1390 = vmatmul.mubr.bf16.gmra.mrb[0].mxu0 %v1346
        %v1391 = vpop.f32.mrb[0].mxu0
        %v1392 = vadd.f32 %v825, %v1391
        %v1393 = vpop.f32.mrb[0].mxu0
        %v1394 = vpop.f32.mrb[0].mxu0
        %v1395 = vadd.f32 %v826, %v1394
        %v1396 = vpop.f32.mrb[0].mxu0
        %1397 = vmatprep.mubr.bf16.mxu0 0
        %1398 = vmatmul.mubr.bf16.gmra.mrb[0].mxu0 %v1349
        %v1399 = vpop.f32.mrb[0].mxu0
        %v1400 = vadd.f32 %v827, %v1399
        %v1401 = vpop.f32.mrb[0].mxu0
        %v1402 = vpop.f32.mrb[0].mxu0
        %v1403 = vadd.f32 %v828, %v1402
        %v1404 = vpop.f32.mrb[0].mxu0
        %1405 = vdwg.mxu0
        %v1406 = vsel %vm1170, %v1392, -inf
        %1407 = vmax.xlane.f32.xlu0 %v1406
        %v1408 = vpop.xlane.xlu0 %1407
        %v1409 = vsel %vm1170, %v1395, -inf
        %1410 = vmax.xlane.f32.xlu0 %v1409
        %v1411 = vpop.xlane.xlu0 %1410
        %v1412 = vsel %vm1170, %v1400, -inf
        %1413 = vmax.xlane.f32.xlu0 %v1412
        %v1414 = vpop.xlane.xlu0 %1413
        %v1415 = vsel %vm1170, %v1403, -inf
        %1416 = vmax.xlane.f32.xlu0 %v1415
        %v1417 = vpop.xlane.xlu0 %1416
        %v1418 = vsub.f32 %v1392, %v1408
        %v1419 = vsub.f32 %v1395, %v1411
        %v1420 = vsub.f32 %v1400, %v1414
        %v1421 = vsub.f32 %v1403, %v1417
        %v1422 = vmul.f32 %v1418, 1.442695
        %v1423 = vpow.pop %v1422
        %v1424 = vmul.f32 %v1419, 1.442695
        %v1425 = vpow.pop %v1424
        %v1426 = vmul.f32 %v1420, 1.442695
        %v1427 = vpow.pop %v1426
        %v1428 = vmul.f32 %v1421, 1.442695
        %v1429 = vpow.pop %v1428
        %v1430 = vsel %vm1170, %v1423, 0.0
        %1431 = vadd.xlane.f32.xlu0 %v1430
        %v1432 = vpop.xlane.xlu0 %1431
        %v1433 = vsel %vm1170, %v1425, 0.0
        %1434 = vadd.xlane.f32.xlu0 %v1433
        %v1435 = vpop.xlane.xlu0 %1434
        %v1436 = vsel %vm1170, %v1427, 0.0
        %1437 = vadd.xlane.f32.xlu0 %v1436
        %v1438 = vpop.xlane.xlu0 %1437
        %v1439 = vsel %vm1170, %v1429, 0.0
        %1440 = vadd.xlane.f32.xlu0 %v1439
        %v1441 = vpop.xlane.xlu0 %1440
        %v1442 = vrcp.pop %v1432
        %v1443 = vrcp.pop %v1435
        %v1444 = vrcp.pop %v1438
        %v1445 = vrcp.pop %v1441
        %v1446 = vmul.f32 %v1423, %v1442
        %v1447 = vmul.f32 %v1425, %v1443
        %v1448 = vmul.f32 %v1427, %v1444
        %v1449 = vmul.f32 %v1429, %v1445
        %v1450 = vpack.c.bf16 %v1447, %v1446
        %v1451 = vpack.c.bf16 %v1449, %v1448
        %1454 = vrot.lane.b32.xlu0 %v1168, 96
        %v1455 = vpop.permute.xlu0 %1454
        %1456 = vrot.lane.b32.xlu0 %v1169, 96
        %v1457 = vpop.permute.xlu0 %1456
        %v1461 = vsel %vm1170, %v1450, 0
        %v1464 = vsel %vm1170, %v1451, 0
        %1466 = vmatprep.subr.bf16.mxu0 0
        %1467 = vmatpush1.bf16.msra.mxu0 %v1455
        %1468 = vmatprep.subr.bf16.mxu0 0
        %1469 = vmatpush1.bf16.msra.mxu0 %v1457
        %1470 = vmatprep.subr.bf16.mxu0 0
        %1471 = vmatpush1.bf16.msra.mxu0 0
        %1472 = vmatprep.subr.bf16.mxu0 0
        %1473 = vmatpush1.bf16.msra.mxu0 0
        %1474 = vmatprep.subr.bf16.mxu0 0
        %1475 = vmatpush1.bf16.msra.mxu0 0
        %1476 = vmatprep.subr.bf16.mxu0 0
        %1477 = vmatpush1.bf16.msra.mxu0 0
        %1478 = vmatprep.subr.bf16.mxu0 0
        %1479 = vmatpush1.bf16.msra.mxu0 0
        %1480 = vmatprep.subr.bf16.mxu0 0
        %1481 = vmatpush1.bf16.msra.mxu0 0
        %1482 = vmatprep.subr.bf16.mxu0 0
        %1483 = vmatpush1.bf16.msra.mxu0 0
        %1484 = vmatprep.subr.bf16.mxu0 0
        %1485 = vmatpush1.bf16.msra.mxu0 0
        %1486 = vmatprep.subr.bf16.mxu0 0
        %1487 = vmatpush1.bf16.msra.mxu0 0
        %1488 = vmatprep.subr.bf16.mxu0 0
        %1489 = vmatpush1.bf16.msra.mxu0 0
        %1490 = vmatprep.subr.bf16.mxu0 0
        %1491 = vmatpush1.bf16.msra.mxu0 0
        %1492 = vmatprep.subr.bf16.mxu0 0
        %1493 = vmatpush1.bf16.msra.mxu0 0
        %1494 = vmatprep.subr.bf16.mxu0 0
        %1495 = vmatpush1.bf16.msra.mxu0 0
        %1496 = vmatprep.subr.bf16.mxu0 0
        %1497 = vmatpush1.bf16.msra.mxu0 0
        %1498 = vmatprep.mubr.bf16.mxu0 0
        %1499 = vmatmul.mubr.bf16.gmra.mrb[0].mxu0 %v1461
        %v1500 = vpop.f32.mrb[0].mxu0
        %v1501 = vadd.f32 0.0, %v1500
        %v1502 = vpop.f32.mrb[0].mxu0
        %v1503 = vpop.f32.mrb[0].mxu0
        %v1504 = vadd.f32 0.0, %v1503
        %v1505 = vpop.f32.mrb[0].mxu0
        %1506 = vmatprep.mubr.bf16.mxu0 0
        %1507 = vmatmul.mubr.bf16.gmra.mrb[0].mxu0 %v1464
        %v1508 = vpop.f32.mrb[0].mxu0
        %v1509 = vadd.f32 0.0, %v1508
        %v1510 = vpop.f32.mrb[0].mxu0
        %v1511 = vpop.f32.mrb[0].mxu0
        %v1512 = vadd.f32 0.0, %v1511
        %v1513 = vpop.f32.mrb[0].mxu0
        %1514 = vdwg.mxu0
        %1515 = vrot.lane.b32.xlu0 %v1164, 64
        %v1516 = vpop.permute.xlu0 %1515
        %1517 = vrot.lane.b32.xlu0 %v1165, 64
        %v1518 = vpop.permute.xlu0 %1517
        %1519 = vrot.lane.b32.xlu0 %v1166, 64
        %v1520 = vpop.permute.xlu0 %1519
        %1521 = vrot.lane.b32.xlu0 %v1167, 64
        %v1522 = vpop.permute.xlu0 %1521
        %v1524 = vsel %vm1170, %v1516, 0
        %v1527 = vsel %vm1170, %v1518, 0
        %v1530 = vsel %vm1170, %v1520, 0
        %v1533 = vsel %vm1170, %v1522, 0
        %1535 = vmatprep.subr.bf16.mxu0 0
        %1536 = vmatpush1.bf16.xpose.msra.mxu0 %v1530
        %1537 = vmatprep.subr.bf16.mxu0 0
        %1538 = vmatpush1.bf16.xpose.msra.mxu0 %v1533
        %1539 = vmatprep.subr.bf16.mxu0 0
        %1540 = vmatpush1.bf16.xpose.msra.mxu0 0
        %1541 = vmatprep.subr.bf16.mxu0 0
        %1542 = vmatpush1.bf16.xpose.msra.mxu0 0
        %1543 = vmatprep.subr.bf16.mxu0 0
        %1544 = vmatpush1.bf16.xpose.msra.mxu0 0
        %1545 = vmatprep.subr.bf16.mxu0 0
        %1546 = vmatpush1.bf16.xpose.msra.mxu0 0
        %1547 = vmatprep.subr.bf16.mxu0 0
        %1548 = vmatpush1.bf16.xpose.msra.mxu0 0
        %1549 = vmatprep.subr.bf16.mxu0 0
        %1550 = vmatpush1.bf16.xpose.msra.mxu0 0
        %1551 = vmatprep.subr.bf16.mxu0 0
        %1552 = vmatpush1.bf16.xpose.msra.mxu0 0
        %1553 = vmatprep.subr.bf16.mxu0 0
        %1554 = vmatpush1.bf16.xpose.msra.mxu0 0
        %1555 = vmatprep.subr.bf16.mxu0 0
        %1556 = vmatpush1.bf16.xpose.msra.mxu0 0
        %1557 = vmatprep.subr.bf16.mxu0 0
        %1558 = vmatpush1.bf16.xpose.msra.mxu0 0
        %1559 = vmatprep.subr.bf16.mxu0 0
        %1560 = vmatpush1.bf16.xpose.msra.mxu0 0
        %1561 = vmatprep.subr.bf16.mxu0 0
        %1562 = vmatpush1.bf16.xpose.msra.mxu0 0
        %1563 = vmatprep.subr.bf16.mxu0 0
        %1564 = vmatpush1.bf16.xpose.msra.mxu0 0
        %1565 = vmatprep.subr.bf16.mxu0 0
        %1566 = vmatpush1.bf16.xpose.msra.mxu0 0
        %1567 = vmatprep.mubr.bf16.mxu0 0
        %1568 = vmatmul.mubr.bf16.gmra.mrb[0].mxu0 %v1524
        %v1569 = vpop.f32.mrb[0].mxu0
        %v1570 = vadd.f32 %v825, %v1569
        %v1571 = vpop.f32.mrb[0].mxu0
        %v1572 = vpop.f32.mrb[0].mxu0
        %v1573 = vadd.f32 %v826, %v1572
        %v1574 = vpop.f32.mrb[0].mxu0
        %1575 = vmatprep.mubr.bf16.mxu0 0
        %1576 = vmatmul.mubr.bf16.gmra.mrb[0].mxu0 %v1527
        %v1577 = vpop.f32.mrb[0].mxu0
        %v1578 = vadd.f32 %v827, %v1577
        %v1579 = vpop.f32.mrb[0].mxu0
        %v1580 = vpop.f32.mrb[0].mxu0
        %v1581 = vadd.f32 %v828, %v1580
        %v1582 = vpop.f32.mrb[0].mxu0
        %1583 = vdwg.mxu0
        %v1584 = vsel %vm1170, %v1570, -inf
        %1585 = vmax.xlane.f32.xlu0 %v1584
        %v1586 = vpop.xlane.xlu0 %1585
        %v1587 = vsel %vm1170, %v1573, -inf
        %1588 = vmax.xlane.f32.xlu0 %v1587
        %v1589 = vpop.xlane.xlu0 %1588
        %v1590 = vsel %vm1170, %v1578, -inf
        %1591 = vmax.xlane.f32.xlu0 %v1590
        %v1592 = vpop.xlane.xlu0 %1591
        %v1593 = vsel %vm1170, %v1581, -inf
        %1594 = vmax.xlane.f32.xlu0 %v1593
        %v1595 = vpop.xlane.xlu0 %1594
        %v1596 = vsub.f32 %v1570, %v1586
        %v1597 = vsub.f32 %v1573, %v1589
        %v1598 = vsub.f32 %v1578, %v1592
        %v1599 = vsub.f32 %v1581, %v1595
        %v1600 = vmul.f32 %v1596, 1.442695
        %v1601 = vpow.pop %v1600
        %v1602 = vmul.f32 %v1597, 1.442695
        %v1603 = vpow.pop %v1602
        %v1604 = vmul.f32 %v1598, 1.442695
        %v1605 = vpow.pop %v1604
        %v1606 = vmul.f32 %v1599, 1.442695
        %v1607 = vpow.pop %v1606
        %v1608 = vsel %vm1170, %v1601, 0.0
        %1609 = vadd.xlane.f32.xlu0 %v1608
        %v1610 = vpop.xlane.xlu0 %1609
        %v1611 = vsel %vm1170, %v1603, 0.0
        %1612 = vadd.xlane.f32.xlu0 %v1611
        %v1613 = vpop.xlane.xlu0 %1612
        %v1614 = vsel %vm1170, %v1605, 0.0
        %1615 = vadd.xlane.f32.xlu0 %v1614
        %v1616 = vpop.xlane.xlu0 %1615
        %v1617 = vsel %vm1170, %v1607, 0.0
        %1618 = vadd.xlane.f32.xlu0 %v1617
        %v1619 = vpop.xlane.xlu0 %1618
        %v1620 = vrcp.pop %v1610
        %v1621 = vrcp.pop %v1613
        %v1622 = vrcp.pop %v1616
        %v1623 = vrcp.pop %v1619
        %v1624 = vmul.f32 %v1601, %v1620
        %v1625 = vmul.f32 %v1603, %v1621
        %v1626 = vmul.f32 %v1605, %v1622
        %v1627 = vmul.f32 %v1607, %v1623
        %v1628 = vpack.c.bf16 %v1625, %v1624
        %v1629 = vpack.c.bf16 %v1627, %v1626
        %1630 = vrot.lane.b32.xlu0 %v1168, 64
        %v1631 = vpop.permute.xlu0 %1630
        %1632 = vrot.lane.b32.xlu0 %v1169, 64
        %v1633 = vpop.permute.xlu0 %1632
        %v1637 = vsel %vm1170, %v1628, 0
        %v1640 = vsel %vm1170, %v1629, 0
        %1642 = vmatprep.subr.bf16.mxu0 0
        %1643 = vmatpush1.bf16.msra.mxu0 %v1631
        %1644 = vmatprep.subr.bf16.mxu0 0
        %1645 = vmatpush1.bf16.msra.mxu0 %v1633
        %1646 = vmatprep.subr.bf16.mxu0 0
        %1647 = vmatpush1.bf16.msra.mxu0 0
        %1648 = vmatprep.subr.bf16.mxu0 0
        %1649 = vmatpush1.bf16.msra.mxu0 0
        %1650 = vmatprep.subr.bf16.mxu0 0
        %1651 = vmatpush1.bf16.msra.mxu0 0
        %1652 = vmatprep.subr.bf16.mxu0 0
        %1653 = vmatpush1.bf16.msra.mxu0 0
        %1654 = vmatprep.subr.bf16.mxu0 0
        %1655 = vmatpush1.bf16.msra.mxu0 0
        %1656 = vmatprep.subr.bf16.mxu0 0
        %1657 = vmatpush1.bf16.msra.mxu0 0
        %1658 = vmatprep.subr.bf16.mxu0 0
        %1659 = vmatpush1.bf16.msra.mxu0 0
        %1660 = vmatprep.subr.bf16.mxu0 0
        %1661 = vmatpush1.bf16.msra.mxu0 0
        %1662 = vmatprep.subr.bf16.mxu0 0
        %1663 = vmatpush1.bf16.msra.mxu0 0
        %1664 = vmatprep.subr.bf16.mxu0 0
        %1665 = vmatpush1.bf16.msra.mxu0 0
        %1666 = vmatprep.subr.bf16.mxu0 0
        %1667 = vmatpush1.bf16.msra.mxu0 0
        %1668 = vmatprep.subr.bf16.mxu0 0
        %1669 = vmatpush1.bf16.msra.mxu0 0
        %1670 = vmatprep.subr.bf16.mxu0 0
        %1671 = vmatpush1.bf16.msra.mxu0 0
        %1672 = vmatprep.subr.bf16.mxu0 0
        %1673 = vmatpush1.bf16.msra.mxu0 0
        %1674 = vmatprep.mubr.bf16.mxu0 0
        %1675 = vmatmul.mubr.bf16.gmra.mrb[0].mxu0 %v1637
        %v1676 = vpop.f32.mrb[0].mxu0
        %v1677 = vadd.f32 0.0, %v1676
        %v1678 = vpop.f32.mrb[0].mxu0
        %v1679 = vpop.f32.mrb[0].mxu0
        %v1680 = vadd.f32 0.0, %v1679
        %v1681 = vpop.f32.mrb[0].mxu0
        %1682 = vmatprep.mubr.bf16.mxu0 0
        %1683 = vmatmul.mubr.bf16.gmra.mrb[0].mxu0 %v1640
        %v1684 = vpop.f32.mrb[0].mxu0
        %v1685 = vadd.f32 0.0, %v1684
        %v1686 = vpop.f32.mrb[0].mxu0
        %v1687 = vpop.f32.mrb[0].mxu0
        %v1688 = vadd.f32 0.0, %v1687
        %v1689 = vpop.f32.mrb[0].mxu0
        %1690 = vdwg.mxu0
        %1691 = vrot.lane.b32.xlu0 %v1164, 32
        %v1692 = vpop.permute.xlu0 %1691
        %1693 = vrot.lane.b32.xlu0 %v1165, 32
        %v1694 = vpop.permute.xlu0 %1693
        %1695 = vrot.lane.b32.xlu0 %v1166, 32
        %v1696 = vpop.permute.xlu0 %1695
        %1697 = vrot.lane.b32.xlu0 %v1167, 32
        %v1698 = vpop.permute.xlu0 %1697
        %v1700 = vsel %vm1170, %v1692, 0
        %v1703 = vsel %vm1170, %v1694, 0
        %v1706 = vsel %vm1170, %v1696, 0
        %v1709 = vsel %vm1170, %v1698, 0
        %1711 = vmatprep.subr.bf16.mxu0 0
        %1712 = vmatpush1.bf16.xpose.msra.mxu0 %v1706
        %1713 = vmatprep.subr.bf16.mxu0 0
        %1714 = vmatpush1.bf16.xpose.msra.mxu0 %v1709
        %1715 = vmatprep.subr.bf16.mxu0 0
        %1716 = vmatpush1.bf16.xpose.msra.mxu0 0
        %1717 = vmatprep.subr.bf16.mxu0 0
        %1718 = vmatpush1.bf16.xpose.msra.mxu0 0
        %1719 = vmatprep.subr.bf16.mxu0 0
        %1720 = vmatpush1.bf16.xpose.msra.mxu0 0
        %1721 = vmatprep.subr.bf16.mxu0 0
        %1722 = vmatpush1.bf16.xpose.msra.mxu0 0
        %1723 = vmatprep.subr.bf16.mxu0 0
        %1724 = vmatpush1.bf16.xpose.msra.mxu0 0
        %1725 = vmatprep.subr.bf16.mxu0 0
        %1726 = vmatpush1.bf16.xpose.msra.mxu0 0
        %1727 = vmatprep.subr.bf16.mxu0 0
        %1728 = vmatpush1.bf16.xpose.msra.mxu0 0
        %1729 = vmatprep.subr.bf16.mxu0 0
        %1730 = vmatpush1.bf16.xpose.msra.mxu0 0
        %1731 = vmatprep.subr.bf16.mxu0 0
        %1732 = vmatpush1.bf16.xpose.msra.mxu0 0
        %1733 = vmatprep.subr.bf16.mxu0 0
        %1734 = vmatpush1.bf16.xpose.msra.mxu0 0
        %1735 = vmatprep.subr.bf16.mxu0 0
        %1736 = vmatpush1.bf16.xpose.msra.mxu0 0
        %1737 = vmatprep.subr.bf16.mxu0 0
        %1738 = vmatpush1.bf16.xpose.msra.mxu0 0
        %1739 = vmatprep.subr.bf16.mxu0 0
        %1740 = vmatpush1.bf16.xpose.msra.mxu0 0
        %1741 = vmatprep.subr.bf16.mxu0 0
        %1742 = vmatpush1.bf16.xpose.msra.mxu0 0
        %1743 = vmatprep.mubr.bf16.mxu0 0
        %1744 = vmatmul.mubr.bf16.gmra.mrb[0].mxu0 %v1700
        %v1745 = vpop.f32.mrb[0].mxu0
        %v1746 = vadd.f32 %v825, %v1745
        %v1747 = vpop.f32.mrb[0].mxu0
        %v1748 = vpop.f32.mrb[0].mxu0
        %v1749 = vadd.f32 %v826, %v1748
        %v1750 = vpop.f32.mrb[0].mxu0
        %1751 = vmatprep.mubr.bf16.mxu0 0
        %1752 = vmatmul.mubr.bf16.gmra.mrb[0].mxu0 %v1703
        %v1753 = vpop.f32.mrb[0].mxu0
        %v1754 = vadd.f32 %v827, %v1753
        %v1755 = vpop.f32.mrb[0].mxu0
        %v1756 = vpop.f32.mrb[0].mxu0
        %v1757 = vadd.f32 %v828, %v1756
        %v1758 = vpop.f32.mrb[0].mxu0
        %1759 = vdwg.mxu0
        %v1760 = vsel %vm1170, %v1746, -inf
        %1761 = vmax.xlane.f32.xlu0 %v1760
        %v1762 = vpop.xlane.xlu0 %1761
        %v1763 = vsel %vm1170, %v1749, -inf
        %1764 = vmax.xlane.f32.xlu0 %v1763
        %v1765 = vpop.xlane.xlu0 %1764
        %v1766 = vsel %vm1170, %v1754, -inf
        %1767 = vmax.xlane.f32.xlu0 %v1766
        %v1768 = vpop.xlane.xlu0 %1767
        %v1769 = vsel %vm1170, %v1757, -inf
        %1770 = vmax.xlane.f32.xlu0 %v1769
        %v1771 = vpop.xlane.xlu0 %1770
        %v1772 = vsub.f32 %v1746, %v1762
        %v1773 = vsub.f32 %v1749, %v1765
        %v1774 = vsub.f32 %v1754, %v1768
        %v1775 = vsub.f32 %v1757, %v1771
        %v1776 = vmul.f32 %v1772, 1.442695
        %v1777 = vpow.pop %v1776
        %v1778 = vmul.f32 %v1773, 1.442695
        %v1779 = vpow.pop %v1778
        %v1780 = vmul.f32 %v1774, 1.442695
        %v1781 = vpow.pop %v1780
        %v1782 = vmul.f32 %v1775, 1.442695
        %v1783 = vpow.pop %v1782
        %v1784 = vsel %vm1170, %v1777, 0.0
        %1785 = vadd.xlane.f32.xlu0 %v1784
        %v1786 = vpop.xlane.xlu0 %1785
        %v1787 = vsel %vm1170, %v1779, 0.0
        %1788 = vadd.xlane.f32.xlu0 %v1787
        %v1789 = vpop.xlane.xlu0 %1788
        %v1790 = vsel %vm1170, %v1781, 0.0
        %1791 = vadd.xlane.f32.xlu0 %v1790
        %v1792 = vpop.xlane.xlu0 %1791
        %v1793 = vsel %vm1170, %v1783, 0.0
        %1794 = vadd.xlane.f32.xlu0 %v1793
        %v1795 = vpop.xlane.xlu0 %1794
        %v1796 = vrcp.pop %v1786
        %v1797 = vrcp.pop %v1789
        %v1798 = vrcp.pop %v1792
        %v1799 = vrcp.pop %v1795
        %v1800 = vmul.f32 %v1777, %v1796
        %v1801 = vmul.f32 %v1779, %v1797
        %v1802 = vmul.f32 %v1781, %v1798
        %v1803 = vmul.f32 %v1783, %v1799
        %v1804 = vpack.c.bf16 %v1801, %v1800
        %v1805 = vpack.c.bf16 %v1803, %v1802
        %1806 = vrot.lane.b32.xlu0 %v1168, 32
        %v1807 = vpop.permute.xlu0 %1806
        %1808 = vrot.lane.b32.xlu0 %v1169, 32
        %v1809 = vpop.permute.xlu0 %1808
        %v1813 = vsel %vm1170, %v1804, 0
        %v1816 = vsel %vm1170, %v1805, 0
        %1818 = vmatprep.subr.bf16.mxu0 0
        %1819 = vmatpush1.bf16.msra.mxu0 %v1807
        %1820 = vmatprep.subr.bf16.mxu0 0
        %1821 = vmatpush1.bf16.msra.mxu0 %v1809
        %1822 = vmatprep.subr.bf16.mxu0 0
        %1823 = vmatpush1.bf16.msra.mxu0 0
        %1824 = vmatprep.subr.bf16.mxu0 0
        %1825 = vmatpush1.bf16.msra.mxu0 0
        %1826 = vmatprep.subr.bf16.mxu0 0
        %1827 = vmatpush1.bf16.msra.mxu0 0
        %1828 = vmatprep.subr.bf16.mxu0 0
        %1829 = vmatpush1.bf16.msra.mxu0 0
        %1830 = vmatprep.subr.bf16.mxu0 0
        %1831 = vmatpush1.bf16.msra.mxu0 0
        %1832 = vmatprep.subr.bf16.mxu0 0
        %1833 = vmatpush1.bf16.msra.mxu0 0
        %1834 = vmatprep.subr.bf16.mxu0 0
        %1835 = vmatpush1.bf16.msra.mxu0 0
        %1836 = vmatprep.subr.bf16.mxu0 0
        %1837 = vmatpush1.bf16.msra.mxu0 0
        %1838 = vmatprep.subr.bf16.mxu0 0
        %1839 = vmatpush1.bf16.msra.mxu0 0
        %1840 = vmatprep.subr.bf16.mxu0 0
        %1841 = vmatpush1.bf16.msra.mxu0 0
        %1842 = vmatprep.subr.bf16.mxu0 0
        %1843 = vmatpush1.bf16.msra.mxu0 0
        %1844 = vmatprep.subr.bf16.mxu0 0
        %1845 = vmatpush1.bf16.msra.mxu0 0
        %1846 = vmatprep.subr.bf16.mxu0 0
        %1847 = vmatpush1.bf16.msra.mxu0 0
        %1848 = vmatprep.subr.bf16.mxu0 0
        %1849 = vmatpush1.bf16.msra.mxu0 0
        %1850 = vmatprep.mubr.bf16.mxu0 0
        %1851 = vmatmul.mubr.bf16.gmra.mrb[0].mxu0 %v1813
        %v1852 = vpop.f32.mrb[0].mxu0
        %v1853 = vadd.f32 0.0, %v1852
        %v1854 = vpop.f32.mrb[0].mxu0
        %v1855 = vpop.f32.mrb[0].mxu0
        %v1856 = vadd.f32 0.0, %v1855
        %v1857 = vpop.f32.mrb[0].mxu0
        %1858 = vmatprep.mubr.bf16.mxu0 0
        %1859 = vmatmul.mubr.bf16.gmra.mrb[0].mxu0 %v1816
        %v1860 = vpop.f32.mrb[0].mxu0
        %v1861 = vadd.f32 0.0, %v1860
        %v1862 = vpop.f32.mrb[0].mxu0
        %v1863 = vpop.f32.mrb[0].mxu0
        %v1864 = vadd.f32 0.0, %v1863
        %v1865 = vpop.f32.mrb[0].mxu0
        %1866 = vdwg.mxu0
        %1871 = vrot.lane.b32.xlu0 %v1501, 32
        %v1872 = vpop.permute.xlu0 %1871
        %1873 = vrot.lane.b32.xlu0 %v1504, 32
        %v1874 = vpop.permute.xlu0 %1873
        %1875 = vrot.lane.b32.xlu0 %v1509, 32
        %v1876 = vpop.permute.xlu0 %1875
        %1877 = vrot.lane.b32.xlu0 %v1512, 32
        %v1878 = vpop.permute.xlu0 %1877
        %1887 = vrot.lane.b32.xlu0 %v1677, 64
        %v1888 = vpop.permute.xlu0 %1887
        %1889 = vrot.lane.b32.xlu0 %v1680, 64
        %v1890 = vpop.permute.xlu0 %1889
        %1891 = vrot.lane.b32.xlu0 %v1685, 64
        %v1892 = vpop.permute.xlu0 %1891
        %1893 = vrot.lane.b32.xlu0 %v1688, 64
        %v1894 = vpop.permute.xlu0 %1893
        %1903 = vrot.lane.b32.xlu0 %v1853, 96
        %v1904 = vpop.permute.xlu0 %1903
        %1905 = vrot.lane.b32.xlu0 %v1856, 96
        %v1906 = vpop.permute.xlu0 %1905
        %1907 = vrot.lane.b32.xlu0 %v1861, 96
        %v1908 = vpop.permute.xlu0 %1907
        %1909 = vrot.lane.b32.xlu0 %v1864, 96
        %v1910 = vpop.permute.xlu0 %1909
        %v1915 = vsel %vm1170, %v1319, %v1872
        %v1916 = vsel %vm1170, %v1322, %v1874
        %v1917 = vsel %vm1170, %v1327, %v1876
        %v1918 = vsel %vm1170, %v1330, %v1878
        %vm1919 = vcmask 523264
        %v1920 = vsel %vm1919, %v1915, %v1888
        %v1921 = vsel %vm1919, %v1916, %v1890
        %v1922 = vsel %vm1919, %v1917, %v1892
        %v1923 = vsel %vm1919, %v1918, %v1894
        %vm1924 = vcmask 785408
        %v1925 = vsel %vm1924, %v1920, %v1904
        %v1926 = vsel %vm1924, %v1921, %v1906
        %v1927 = vsel %vm1924, %v1922, %v1908
        %v1928 = vsel %vm1924, %v1923, %v1910
        %v1929 = vpack.c.bf16 %v1926, %v1925
        %v1930 = vpack.c.bf16 %v1928, %v1927
        %v1931 = vld [vmem:[%s681] sm:$0xf]
        %v1932 = vld [vmem:[%s681 + $0x4] sm:$0xf]
        %v1933 = vld [vmem:[%s681 + $0x8] sm:$0xf]
        %v1934 = vld [vmem:[%s681 + $0xc] sm:$0xf]
        %v1935 = vld [vmem:[%s681 + $0x10] sm:$0xf]
        %v1936 = vld [vmem:[%s681 + $0x14] sm:$0xf]
        %v1937 = vld [vmem:[%s681 + $0x18] sm:$0xf]
        %v1938 = vld [vmem:[%s681 + $0x1c] sm:$0xf]
        %v1939 = vld [vmem:[%s681 + $0x20] sm:$0xf]
        %v1940 = vld [vmem:[%s681 + $0x24] sm:$0xf]
        %v1941 = vld [vmem:[%s681 + $0x28] sm:$0xf]
        %v1942 = vld [vmem:[%s681 + $0x2c] sm:$0xf]
        %v1943 = vld [vmem:[%s681 + $0x30] sm:$0xf]
        %v1944 = vld [vmem:[%s681 + $0x34] sm:$0xf]
        %v1945 = vld [vmem:[%s681 + $0x38] sm:$0xf]
        %v1946 = vld [vmem:[%s681 + $0x3c] sm:$0xf]
        %v1963 = vunpack.c.l.b16 %v1931
        %v1964 = vunpack.c.l.b16 %v1932
        %v1965 = vunpack.c.l.b16 %v1933
        %v1966 = vunpack.c.l.b16 %v1934
        %v1967 = vunpack.c.l.b16 %v1935
        %v1968 = vunpack.c.l.b16 %v1936
        %v1969 = vunpack.c.l.b16 %v1937
        %v1970 = vunpack.c.l.b16 %v1938
        %v1971 = vunpack.c.l.b16 %v1939
        %v1972 = vunpack.c.l.b16 %v1940
        %v1973 = vunpack.c.l.b16 %v1941
        %v1974 = vunpack.c.l.b16 %v1942
        %v1975 = vunpack.c.l.b16 %v1943
        %v1976 = vunpack.c.l.b16 %v1944
        %v1977 = vunpack.c.l.b16 %v1945
        %v1978 = vunpack.c.l.b16 %v1946
        %v1979 = vpack.c.b16 %v1964, %v1963
        %v1980 = vpack.c.b16 %v1966, %v1965
        %v1981 = vpack.c.b16 %v1968, %v1967
        %v1982 = vpack.c.b16 %v1970, %v1969
        %v1983 = vpack.c.b16 %v1972, %v1971
        %v1984 = vpack.c.b16 %v1974, %v1973
        %v1985 = vpack.c.b16 %v1976, %v1975
        %v1986 = vpack.c.b16 %v1978, %v1977
        %1995 = vmatprep.subr.bf16.mxu0 0
        %1996 = vmatpush1.bf16.msra.mxu0 %v1979
        %1997 = vmatprep.subr.bf16.mxu0 0
        %1998 = vmatpush1.bf16.msra.mxu0 %v1980
        %1999 = vmatprep.subr.bf16.mxu0 0
        %2000 = vmatpush1.bf16.msra.mxu0 %v1981
        %2001 = vmatprep.subr.bf16.mxu0 0
        %2002 = vmatpush1.bf16.msra.mxu0 %v1982
        %2003 = vmatprep.subr.bf16.mxu0 0
        %2004 = vmatpush1.bf16.msra.mxu0 %v1983
        %2005 = vmatprep.subr.bf16.mxu0 0
        %2006 = vmatpush1.bf16.msra.mxu0 %v1984
        %2007 = vmatprep.subr.bf16.mxu0 0
        %2008 = vmatpush1.bf16.msra.mxu0 %v1985
        %2009 = vmatprep.subr.bf16.mxu0 0
        %2010 = vmatpush1.bf16.msra.mxu0 %v1986
        %2011 = vmatprep.subr.bf16.mxu0 0
        %2012 = vmatpush1.bf16.msra.mxu0 0
        %2013 = vmatprep.subr.bf16.mxu0 0
        %2014 = vmatpush1.bf16.msra.mxu0 0
        %2015 = vmatprep.subr.bf16.mxu0 0
        %2016 = vmatpush1.bf16.msra.mxu0 0
        %2017 = vmatprep.subr.bf16.mxu0 0
        %2018 = vmatpush1.bf16.msra.mxu0 0
        %2019 = vmatprep.subr.bf16.mxu0 0
        %2020 = vmatpush1.bf16.msra.mxu0 0
        %2021 = vmatprep.subr.bf16.mxu0 0
        %2022 = vmatpush1.bf16.msra.mxu0 0
        %2023 = vmatprep.subr.bf16.mxu0 0
        %2024 = vmatpush1.bf16.msra.mxu0 0
        %2025 = vmatprep.subr.bf16.mxu0 0
        %2026 = vmatpush1.bf16.msra.mxu0 0
        %2027 = vmatprep.mubr.bf16.mxu0 0
        %2028 = vmatmul.mubr.bf16.gmra.mrb[0].mxu0 %v1929
        %v2029 = vpop.f32.mrb[0].mxu0
        %v2030 = vadd.f32 0.0, %v2029
        %v2031 = vpop.f32.mrb[0].mxu0
        %v2032 = vpop.f32.mrb[0].mxu0
        %v2033 = vadd.f32 0.0, %v2032
        %v2034 = vpop.f32.mrb[0].mxu0
        %2035 = vmatprep.mubr.bf16.mxu0 0
        %2036 = vmatmul.mubr.bf16.gmra.mrb[0].mxu0 %v1930
        %v2037 = vpop.f32.mrb[0].mxu0
        %v2038 = vadd.f32 0.0, %v2037
        %v2039 = vpop.f32.mrb[0].mxu0
        %v2040 = vpop.f32.mrb[0].mxu0
        %v2041 = vadd.f32 0.0, %v2040
        %v2042 = vpop.f32.mrb[0].mxu0
        %2043 = vdwg.mxu0
        %v2044 = vadd.f32 %v821, %v2030
        %v2045 = vadd.f32 %v822, %v2033
        %v2046 = vadd.f32 %v823, %v2038
        %v2047 = vadd.f32 %v824, %v2041
        %v2048 = vld [vmem:[%s788] sm:$0x1]
        %v2050 = vlaneseq
        %v2051 = vshrl.u32 %v2050, 7
        %v2052 = vsub.s32 0, %v2051
        %v2053 = vrot.slane %v2048, %v2052
        %v2055 = vadd.f32 %v2044, %v2053
        %v2056 = vadd.f32 %v2045, %v2053
        %v2057 = vadd.f32 %v2046, %v2053
        %v2058 = vadd.f32 %v2047, %v2053
        %v2059 = vld [vmem:[%s797] sm:$0x1]
        %v2060 = vld [vmem:[%s800] sm:$0x1]
        %2061 = vadd.xlane.f32.xlu0 %v2055
        %v2062 = vpop.xlane.xlu0 %2061
        %2063 = vadd.xlane.f32.xlu0 %v2056
        %v2064 = vpop.xlane.xlu0 %2063
        %2065 = vadd.xlane.f32.xlu0 %v2057
        %v2066 = vpop.xlane.xlu0 %2065
        %2067 = vadd.xlane.f32.xlu0 %v2058
        %v2068 = vpop.xlane.xlu0 %2067
        %v2069 = vmul.f32 %v2062, %v839
        %v2070 = vmul.f32 %v2064, %v839
        %v2071 = vmul.f32 %v2066, %v839
        %v2072 = vmul.f32 %v2068, %v839
        %v2073 = vsub.f32 %v2055, %v2069
        %v2074 = vsub.f32 %v2056, %v2070
        %v2075 = vsub.f32 %v2057, %v2071
        %v2076 = vsub.f32 %v2058, %v2072
        %v2077 = vmul.f32 %v2073, %v2073
        %v2078 = vmul.f32 %v2074, %v2074
        %v2079 = vmul.f32 %v2075, %v2075
        %v2080 = vmul.f32 %v2076, %v2076
        %2081 = vadd.xlane.f32.xlu0 %v2077
        %v2082 = vpop.xlane.xlu0 %2081
        %2083 = vadd.xlane.f32.xlu0 %v2078
        %v2084 = vpop.xlane.xlu0 %2083
        %2085 = vadd.xlane.f32.xlu0 %v2079
        %v2086 = vpop.xlane.xlu0 %2085
        %2087 = vadd.xlane.f32.xlu0 %v2080
        %v2088 = vpop.xlane.xlu0 %2087
        %v2089 = vmul.f32 %v2082, %v839
        %v2090 = vmul.f32 %v2084, %v839
        %v2091 = vmul.f32 %v2086, %v839
        %v2092 = vmul.f32 %v2088, %v839
        %v2093 = vadd.f32 %v2089, 1e-05
        %v2094 = vadd.f32 %v2090, 1e-05
        %v2095 = vadd.f32 %v2091, 1e-05
        %v2096 = vadd.f32 %v2092, 1e-05
        %v2097 = vrsqrt.pop %v2093
        %v2098 = vrsqrt.pop %v2094
        %v2099 = vrsqrt.pop %v2095
        %v2100 = vrsqrt.pop %v2096
        %v2101 = vmul.f32 %v2073, %v2097
        %v2102 = vmul.f32 %v2074, %v2098
        %v2103 = vmul.f32 %v2075, %v2099
        %v2104 = vmul.f32 %v2076, %v2100
        %v2106 = vlaneseq
        %v2107 = vshrl.u32 %v2106, 7
        %v2108 = vsub.s32 0, %v2107
        %v2109 = vrot.slane %v2059, %v2108
        %v2111 = vmul.f32 %v2101, %v2109
        %v2112 = vmul.f32 %v2102, %v2109
        %v2113 = vmul.f32 %v2103, %v2109
        %v2114 = vmul.f32 %v2104, %v2109
        %v2116 = vlaneseq
        %v2117 = vshrl.u32 %v2116, 7
        %v2118 = vsub.s32 0, %v2117
        %v2119 = vrot.slane %v2060, %v2118
        %v2121 = vadd.f32 %v2111, %v2119
        %v2122 = vadd.f32 %v2112, %v2119
        %v2123 = vadd.f32 %v2113, %v2119
        %v2124 = vadd.f32 %v2114, %v2119
        %v2125 = vpack.c.bf16 %v2122, %v2121
        %v2126 = vpack.c.bf16 %v2124, %v2123
        %v2127 = vld [vmem:[%s690] sm:$0xff]
        %v2128 = vld [vmem:[%s690 + $0x8] sm:$0xff]
        %v2129 = vld [vmem:[%s690 + $0x10] sm:$0xff]
        %v2130 = vld [vmem:[%s690 + $0x18] sm:$0xff]
        %v2131 = vld [vmem:[%s690 + $0x20] sm:$0xff]
        %v2132 = vld [vmem:[%s690 + $0x28] sm:$0xff]
        %v2133 = vld [vmem:[%s690 + $0x30] sm:$0xff]
        %v2134 = vld [vmem:[%s690 + $0x38] sm:$0xff]
        %v2135 = vld [vmem:[%s690 + $0x40] sm:$0xff]
        %v2136 = vld [vmem:[%s690 + $0x48] sm:$0xff]
        %v2137 = vld [vmem:[%s690 + $0x50] sm:$0xff]
        %v2138 = vld [vmem:[%s690 + $0x58] sm:$0xff]
        %v2139 = vld [vmem:[%s690 + $0x60] sm:$0xff]
        %v2140 = vld [vmem:[%s690 + $0x68] sm:$0xff]
        %v2141 = vld [vmem:[%s690 + $0x70] sm:$0xff]
        %v2142 = vld [vmem:[%s690 + $0x78] sm:$0xff]
        %v2143 = vld [vmem:[%s690 + $0x80] sm:$0xff]
        %v2144 = vld [vmem:[%s690 + $0x88] sm:$0xff]
        %v2145 = vld [vmem:[%s690 + $0x90] sm:$0xff]
        %v2146 = vld [vmem:[%s690 + $0x98] sm:$0xff]
        %v2147 = vld [vmem:[%s690 + $0xa0] sm:$0xff]
        %v2148 = vld [vmem:[%s690 + $0xa8] sm:$0xff]
        %v2149 = vld [vmem:[%s690 + $0xb0] sm:$0xff]
        %v2150 = vld [vmem:[%s690 + $0xb8] sm:$0xff]
        %v2151 = vld [vmem:[%s690 + $0xc0] sm:$0xff]
        %v2152 = vld [vmem:[%s690 + $0xc8] sm:$0xff]
        %v2153 = vld [vmem:[%s690 + $0xd0] sm:$0xff]
        %v2154 = vld [vmem:[%s690 + $0xd8] sm:$0xff]
        %v2155 = vld [vmem:[%s690 + $0xe0] sm:$0xff]
        %v2156 = vld [vmem:[%s690 + $0xe8] sm:$0xff]
        %v2157 = vld [vmem:[%s690 + $0xf0] sm:$0xff]
        %v2158 = vld [vmem:[%s690 + $0xf8] sm:$0xff]
        %v2159 = vld [vmem:[%s804] sm:$0xf]
        %v2161 = vlaneseq
        %v2162 = vshrl.u32 %v2161, 7
        %v2163 = vsub.s32 0, %v2162
        %v2164 = vrot.slane %v2159, %v2163
        %v2165 = vlaneseq
        %v2166 = vshrl.u32 %v2165, 7
        %v2167 = vsub.s32 1, %v2166
        %v2168 = vrot.slane %v2159, %v2167
        %v2169 = vlaneseq
        %v2170 = vshrl.u32 %v2169, 7
        %v2171 = vsub.s32 2, %v2170
        %v2172 = vrot.slane %v2159, %v2171
        %v2173 = vlaneseq
        %v2174 = vshrl.u32 %v2173, 7
        %v2175 = vsub.s32 3, %v2174
        %v2176 = vrot.slane %v2159, %v2175
        %v2213 = vunpack.c.l.b16 %v2127
        %v2214 = vunpack.c.h.b16 %v2127
        %v2215 = vunpack.c.l.b16 %v2128
        %v2216 = vunpack.c.h.b16 %v2128
        %v2217 = vunpack.c.l.b16 %v2129
        %v2218 = vunpack.c.h.b16 %v2129
        %v2219 = vunpack.c.l.b16 %v2130
        %v2220 = vunpack.c.h.b16 %v2130
        %v2221 = vunpack.c.l.b16 %v2131
        %v2222 = vunpack.c.h.b16 %v2131
        %v2223 = vunpack.c.l.b16 %v2132
        %v2224 = vunpack.c.h.b16 %v2132
        %v2225 = vunpack.c.l.b16 %v2133
        %v2226 = vunpack.c.h.b16 %v2133
        %v2227 = vunpack.c.l.b16 %v2134
        %v2228 = vunpack.c.h.b16 %v2134
        %v2229 = vunpack.c.l.b16 %v2135
        %v2230 = vunpack.c.h.b16 %v2135
        %v2231 = vunpack.c.l.b16 %v2136
        %v2232 = vunpack.c.h.b16 %v2136
        %v2233 = vunpack.c.l.b16 %v2137
        %v2234 = vunpack.c.h.b16 %v2137
        %v2235 = vunpack.c.l.b16 %v2138
        %v2236 = vunpack.c.h.b16 %v2138
        %v2237 = vunpack.c.l.b16 %v2139
        %v2238 = vunpack.c.h.b16 %v2139
        %v2239 = vunpack.c.l.b16 %v2140
        %v2240 = vunpack.c.h.b16 %v2140
        %v2241 = vunpack.c.l.b16 %v2141
        %v2242 = vunpack.c.h.b16 %v2141
        %v2243 = vunpack.c.l.b16 %v2142
        %v2244 = vunpack.c.h.b16 %v2142
        %v2245 = vunpack.c.l.b16 %v2143
        %v2246 = vunpack.c.h.b16 %v2143
        %v2247 = vunpack.c.l.b16 %v2144
        %v2248 = vunpack.c.h.b16 %v2144
        %v2249 = vunpack.c.l.b16 %v2145
        %v2250 = vunpack.c.h.b16 %v2145
        %v2251 = vunpack.c.l.b16 %v2146
        %v2252 = vunpack.c.h.b16 %v2146
        %v2253 = vunpack.c.l.b16 %v2147
        %v2254 = vunpack.c.h.b16 %v2147
        %v2255 = vunpack.c.l.b16 %v2148
        %v2256 = vunpack.c.h.b16 %v2148
        %v2257 = vunpack.c.l.b16 %v2149
        %v2258 = vunpack.c.h.b16 %v2149
        %v2259 = vunpack.c.l.b16 %v2150
        %v2260 = vunpack.c.h.b16 %v2150
        %v2261 = vunpack.c.l.b16 %v2151
        %v2262 = vunpack.c.h.b16 %v2151
        %v2263 = vunpack.c.l.b16 %v2152
        %v2264 = vunpack.c.h.b16 %v2152
        %v2265 = vunpack.c.l.b16 %v2153
        %v2266 = vunpack.c.h.b16 %v2153
        %v2267 = vunpack.c.l.b16 %v2154
        %v2268 = vunpack.c.h.b16 %v2154
        %v2269 = vunpack.c.l.b16 %v2155
        %v2270 = vunpack.c.h.b16 %v2155
        %v2271 = vunpack.c.l.b16 %v2156
        %v2272 = vunpack.c.h.b16 %v2156
        %v2273 = vunpack.c.l.b16 %v2157
        %v2274 = vunpack.c.h.b16 %v2157
        %v2275 = vunpack.c.l.b16 %v2158
        %v2276 = vunpack.c.h.b16 %v2158
        %v2277 = vpack.c.b16 %v2217, %v2213
        %v2278 = vpack.c.b16 %v2218, %v2214
        %v2279 = vpack.c.b16 %v2219, %v2215
        %v2280 = vpack.c.b16 %v2220, %v2216
        %v2281 = vpack.c.b16 %v2225, %v2221
        %v2282 = vpack.c.b16 %v2226, %v2222
        %v2283 = vpack.c.b16 %v2227, %v2223
        %v2284 = vpack.c.b16 %v2228, %v2224
        %v2285 = vpack.c.b16 %v2233, %v2229
        %v2286 = vpack.c.b16 %v2234, %v2230
        %v2287 = vpack.c.b16 %v2235, %v2231
        %v2288 = vpack.c.b16 %v2236, %v2232
        %v2289 = vpack.c.b16 %v2241, %v2237
        %v2290 = vpack.c.b16 %v2242, %v2238
        %v2291 = vpack.c.b16 %v2243, %v2239
        %v2292 = vpack.c.b16 %v2244, %v2240
        %v2293 = vpack.c.b16 %v2249, %v2245
        %v2294 = vpack.c.b16 %v2250, %v2246
        %v2295 = vpack.c.b16 %v2251, %v2247
        %v2296 = vpack.c.b16 %v2252, %v2248
        %v2297 = vpack.c.b16 %v2257, %v2253
        %v2298 = vpack.c.b16 %v2258, %v2254
        %v2299 = vpack.c.b16 %v2259, %v2255
        %v2300 = vpack.c.b16 %v2260, %v2256
        %v2301 = vpack.c.b16 %v2265, %v2261
        %v2302 = vpack.c.b16 %v2266, %v2262
        %v2303 = vpack.c.b16 %v2267, %v2263
        %v2304 = vpack.c.b16 %v2268, %v2264
        %v2305 = vpack.c.b16 %v2273, %v2269
        %v2306 = vpack.c.b16 %v2274, %v2270
        %v2307 = vpack.c.b16 %v2275, %v2271
        %v2308 = vpack.c.b16 %v2276, %v2272
        %2341 = vmatprep.subr.bf16.mxu0 %v2278
        %2342 = vmatpush1.bf16.msra.mxu0 %v2277
        %2343 = vmatprep.subr.bf16.mxu0 %v2282
        %2344 = vmatpush1.bf16.msra.mxu0 %v2281
        %2345 = vmatprep.subr.bf16.mxu0 %v2286
        %2346 = vmatpush1.bf16.msra.mxu0 %v2285
        %2347 = vmatprep.subr.bf16.mxu0 %v2290
        %2348 = vmatpush1.bf16.msra.mxu0 %v2289
        %2349 = vmatprep.subr.bf16.mxu0 %v2294
        %2350 = vmatpush1.bf16.msra.mxu0 %v2293
        %2351 = vmatprep.subr.bf16.mxu0 %v2298
        %2352 = vmatpush1.bf16.msra.mxu0 %v2297
        %2353 = vmatprep.subr.bf16.mxu0 %v2302
        %2354 = vmatpush1.bf16.msra.mxu0 %v2301
        %2355 = vmatprep.subr.bf16.mxu0 %v2306
        %2356 = vmatpush1.bf16.msra.mxu0 %v2305
        %2357 = vmatprep.subr.bf16.mxu0 0
        %2358 = vmatpush1.bf16.msra.mxu0 0
        %2359 = vmatprep.subr.bf16.mxu0 0
        %2360 = vmatpush1.bf16.msra.mxu0 0
        %2361 = vmatprep.subr.bf16.mxu0 0
        %2362 = vmatpush1.bf16.msra.mxu0 0
        %2363 = vmatprep.subr.bf16.mxu0 0
        %2364 = vmatpush1.bf16.msra.mxu0 0
        %2365 = vmatprep.subr.bf16.mxu0 0
        %2366 = vmatpush1.bf16.msra.mxu0 0
        %2367 = vmatprep.subr.bf16.mxu0 0
        %2368 = vmatpush1.bf16.msra.mxu0 0
        %2369 = vmatprep.subr.bf16.mxu0 0
        %2370 = vmatpush1.bf16.msra.mxu0 0
        %2371 = vmatprep.subr.bf16.mxu0 0
        %2372 = vmatpush1.bf16.msra.mxu0 0
        %2373 = vmatprep.mubr.bf16.mxu0 0
        %2374 = vmatmul.mubr.bf16.gmra.mrb[0].mxu0 %v2125
        %v2375 = vpop.f32.mrb[0].mxu0
        %v2376 = vadd.f32 %v2164, %v2375
        %v2377 = vpop.f32.mrb[0].mxu0
        %v2378 = vadd.f32 %v2168, %v2377
        %v2379 = vpop.f32.mrb[0].mxu0
        %v2380 = vadd.f32 %v2164, %v2379
        %v2381 = vpop.f32.mrb[0].mxu0
        %v2382 = vadd.f32 %v2168, %v2381
        %2383 = vmatprep.mubr.bf16.mxu0 0
        %2384 = vmatmul.mubr.bf16.gmra.mrb[0].mxu0 %v2126
        %v2385 = vpop.f32.mrb[0].mxu0
        %v2386 = vadd.f32 %v2164, %v2385
        %v2387 = vpop.f32.mrb[0].mxu0
        %v2388 = vadd.f32 %v2168, %v2387
        %v2389 = vpop.f32.mrb[0].mxu0
        %v2390 = vadd.f32 %v2164, %v2389
        %v2391 = vpop.f32.mrb[0].mxu0
        %v2392 = vadd.f32 %v2168, %v2391
        %2393 = vdwg.mxu0
        %2394 = vmatprep.subr.bf16.mxu0 %v2280
        %2395 = vmatpush1.bf16.msra.mxu0 %v2279
        %2396 = vmatprep.subr.bf16.mxu0 %v2284
        %2397 = vmatpush1.bf16.msra.mxu0 %v2283
        %2398 = vmatprep.subr.bf16.mxu0 %v2288
        %2399 = vmatpush1.bf16.msra.mxu0 %v2287
        %2400 = vmatprep.subr.bf16.mxu0 %v2292
        %2401 = vmatpush1.bf16.msra.mxu0 %v2291
        %2402 = vmatprep.subr.bf16.mxu0 %v2296
        %2403 = vmatpush1.bf16.msra.mxu0 %v2295
        %2404 = vmatprep.subr.bf16.mxu0 %v2300
        %2405 = vmatpush1.bf16.msra.mxu0 %v2299
        %2406 = vmatprep.subr.bf16.mxu0 %v2304
        %2407 = vmatpush1.bf16.msra.mxu0 %v2303
        %2408 = vmatprep.subr.bf16.mxu0 %v2308
        %2409 = vmatpush1.bf16.msra.mxu0 %v2307
        %2410 = vmatprep.subr.bf16.mxu0 0
        %2411 = vmatpush1.bf16.msra.mxu0 0
        %2412 = vmatprep.subr.bf16.mxu0 0
        %2413 = vmatpush1.bf16.msra.mxu0 0
        %2414 = vmatprep.subr.bf16.mxu0 0
        %2415 = vmatpush1.bf16.msra.mxu0 0
        %2416 = vmatprep.subr.bf16.mxu0 0
        %2417 = vmatpush1.bf16.msra.mxu0 0
        %2418 = vmatprep.subr.bf16.mxu0 0
        %2419 = vmatpush1.bf16.msra.mxu0 0
        %2420 = vmatprep.subr.bf16.mxu0 0
        %2421 = vmatpush1.bf16.msra.mxu0 0
        %2422 = vmatprep.subr.bf16.mxu0 0
        %2423 = vmatpush1.bf16.msra.mxu0 0
        %2424 = vmatprep.subr.bf16.mxu0 0
        %2425 = vmatpush1.bf16.msra.mxu0 0
        %2426 = vmatprep.mubr.bf16.mxu0 0
        %2427 = vmatmul.mubr.bf16.gmra.mrb[0].mxu0 %v2125
        %v2428 = vpop.f32.mrb[0].mxu0
        %v2429 = vadd.f32 %v2172, %v2428
        %v2430 = vpop.f32.mrb[0].mxu0
        %v2431 = vadd.f32 %v2176, %v2430
        %v2432 = vpop.f32.mrb[0].mxu0
        %v2433 = vadd.f32 %v2172, %v2432
        %v2434 = vpop.f32.mrb[0].mxu0
        %v2435 = vadd.f32 %v2176, %v2434
        %2436 = vmatprep.mubr.bf16.mxu0 0
        %2437 = vmatmul.mubr.bf16.gmra.mrb[0].mxu0 %v2126
        %v2438 = vpop.f32.mrb[0].mxu0
        %v2439 = vadd.f32 %v2172, %v2438
        %v2440 = vpop.f32.mrb[0].mxu0
        %v2441 = vadd.f32 %v2176, %v2440
        %v2442 = vpop.f32.mrb[0].mxu0
        %v2443 = vadd.f32 %v2172, %v2442
        %v2444 = vpop.f32.mrb[0].mxu0
        %v2445 = vadd.f32 %v2176, %v2444
        %2446 = vdwg.mxu0
        %v2447 = vmax.f32 %v2376, 0.0
        %v2448 = vmax.f32 %v2378, 0.0
        %v2449 = vmax.f32 %v2429, 0.0
        %v2450 = vmax.f32 %v2431, 0.0
        %v2451 = vmax.f32 %v2380, 0.0
        %v2452 = vmax.f32 %v2382, 0.0
        %v2453 = vmax.f32 %v2433, 0.0
        %v2454 = vmax.f32 %v2435, 0.0
        %v2455 = vmax.f32 %v2386, 0.0
        %v2456 = vmax.f32 %v2388, 0.0
        %v2457 = vmax.f32 %v2439, 0.0
        %v2458 = vmax.f32 %v2441, 0.0
        %v2459 = vmax.f32 %v2390, 0.0
        %v2460 = vmax.f32 %v2392, 0.0
        %v2461 = vmax.f32 %v2443, 0.0
        %v2462 = vmax.f32 %v2445, 0.0
        %v2463 = vpack.c.bf16 %v2451, %v2447
        %v2464 = vpack.c.bf16 %v2452, %v2448
        %v2465 = vpack.c.bf16 %v2453, %v2449
        %v2466 = vpack.c.bf16 %v2454, %v2450
        %v2467 = vpack.c.bf16 %v2459, %v2455
        %v2468 = vpack.c.bf16 %v2460, %v2456
        %v2469 = vpack.c.bf16 %v2461, %v2457
        %v2470 = vpack.c.bf16 %v2462, %v2458
        %v2471 = vld [vmem:[%s699] sm:$0xf]
        %v2472 = vld [vmem:[%s699 + $0x4] sm:$0xf]
        %v2473 = vld [vmem:[%s699 + $0x8] sm:$0xf]
        %v2474 = vld [vmem:[%s699 + $0xc] sm:$0xf]
        %v2475 = vld [vmem:[%s699 + $0x10] sm:$0xf]
        %v2476 = vld [vmem:[%s699 + $0x14] sm:$0xf]
        %v2477 = vld [vmem:[%s699 + $0x18] sm:$0xf]
        %v2478 = vld [vmem:[%s699 + $0x1c] sm:$0xf]
        %v2479 = vld [vmem:[%s699 + $0x20] sm:$0xf]
        %v2480 = vld [vmem:[%s699 + $0x24] sm:$0xf]
        %v2481 = vld [vmem:[%s699 + $0x28] sm:$0xf]
        %v2482 = vld [vmem:[%s699 + $0x2c] sm:$0xf]
        %v2483 = vld [vmem:[%s699 + $0x30] sm:$0xf]
        %v2484 = vld [vmem:[%s699 + $0x34] sm:$0xf]
        %v2485 = vld [vmem:[%s699 + $0x38] sm:$0xf]
        %v2486 = vld [vmem:[%s699 + $0x3c] sm:$0xf]
        %v2487 = vld [vmem:[%s699 + $0x40] sm:$0xf]
        %v2488 = vld [vmem:[%s699 + $0x44] sm:$0xf]
        %v2489 = vld [vmem:[%s699 + $0x48] sm:$0xf]
        %v2490 = vld [vmem:[%s699 + $0x4c] sm:$0xf]
        %v2491 = vld [vmem:[%s699 + $0x50] sm:$0xf]
        %v2492 = vld [vmem:[%s699 + $0x54] sm:$0xf]
        %v2493 = vld [vmem:[%s699 + $0x58] sm:$0xf]
        %v2494 = vld [vmem:[%s699 + $0x5c] sm:$0xf]
        %v2495 = vld [vmem:[%s699 + $0x60] sm:$0xf]
        %v2496 = vld [vmem:[%s699 + $0x64] sm:$0xf]
        %v2497 = vld [vmem:[%s699 + $0x68] sm:$0xf]
        %v2498 = vld [vmem:[%s699 + $0x6c] sm:$0xf]
        %v2499 = vld [vmem:[%s699 + $0x70] sm:$0xf]
        %v2500 = vld [vmem:[%s699 + $0x74] sm:$0xf]
        %v2501 = vld [vmem:[%s699 + $0x78] sm:$0xf]
        %v2502 = vld [vmem:[%s699 + $0x7c] sm:$0xf]
        %v2503 = vld [vmem:[%s699 + $0x80] sm:$0xf]
        %v2504 = vld [vmem:[%s699 + $0x84] sm:$0xf]
        %v2505 = vld [vmem:[%s699 + $0x88] sm:$0xf]
        %v2506 = vld [vmem:[%s699 + $0x8c] sm:$0xf]
        %v2507 = vld [vmem:[%s699 + $0x90] sm:$0xf]
        %v2508 = vld [vmem:[%s699 + $0x94] sm:$0xf]
        %v2509 = vld [vmem:[%s699 + $0x98] sm:$0xf]
        %v2510 = vld [vmem:[%s699 + $0x9c] sm:$0xf]
        %v2511 = vld [vmem:[%s699 + $0xa0] sm:$0xf]
        %v2512 = vld [vmem:[%s699 + $0xa4] sm:$0xf]
        %v2513 = vld [vmem:[%s699 + $0xa8] sm:$0xf]
        %v2514 = vld [vmem:[%s699 + $0xac] sm:$0xf]
        %v2515 = vld [vmem:[%s699 + $0xb0] sm:$0xf]
        %v2516 = vld [vmem:[%s699 + $0xb4] sm:$0xf]
        %v2517 = vld [vmem:[%s699 + $0xb8] sm:$0xf]
        %v2518 = vld [vmem:[%s699 + $0xbc] sm:$0xf]
        %v2519 = vld [vmem:[%s699 + $0xc0] sm:$0xf]
        %v2520 = vld [vmem:[%s699 + $0xc4] sm:$0xf]
        %v2521 = vld [vmem:[%s699 + $0xc8] sm:$0xf]
        %v2522 = vld [vmem:[%s699 + $0xcc] sm:$0xf]
        %v2523 = vld [vmem:[%s699 + $0xd0] sm:$0xf]
        %v2524 = vld [vmem:[%s699 + $0xd4] sm:$0xf]
        %v2525 = vld [vmem:[%s699 + $0xd8] sm:$0xf]
        %v2526 = vld [vmem:[%s699 + $0xdc] sm:$0xf]
        %v2527 = vld [vmem:[%s699 + $0xe0] sm:$0xf]
        %v2528 = vld [vmem:[%s699 + $0xe4] sm:$0xf]
        %v2529 = vld [vmem:[%s699 + $0xe8] sm:$0xf]
        %v2530 = vld [vmem:[%s699 + $0xec] sm:$0xf]
        %v2531 = vld [vmem:[%s699 + $0xf0] sm:$0xf]
        %v2532 = vld [vmem:[%s699 + $0xf4] sm:$0xf]
        %v2533 = vld [vmem:[%s699 + $0xf8] sm:$0xf]
        %v2534 = vld [vmem:[%s699 + $0xfc] sm:$0xf]
        %v2599 = vunpack.c.l.b16 %v2471
        %v2600 = vunpack.c.l.b16 %v2472
        %v2601 = vunpack.c.l.b16 %v2473
        %v2602 = vunpack.c.l.b16 %v2474
        %v2603 = vunpack.c.l.b16 %v2475
        %v2604 = vunpack.c.l.b16 %v2476
        %v2605 = vunpack.c.l.b16 %v2477
        %v2606 = vunpack.c.l.b16 %v2478
        %v2607 = vunpack.c.l.b16 %v2479
        %v2608 = vunpack.c.l.b16 %v2480
        %v2609 = vunpack.c.l.b16 %v2481
        %v2610 = vunpack.c.l.b16 %v2482
        %v2611 = vunpack.c.l.b16 %v2483
        %v2612 = vunpack.c.l.b16 %v2484
        %v2613 = vunpack.c.l.b16 %v2485
        %v2614 = vunpack.c.l.b16 %v2486
        %v2615 = vunpack.c.l.b16 %v2487
        %v2616 = vunpack.c.l.b16 %v2488
        %v2617 = vunpack.c.l.b16 %v2489
        %v2618 = vunpack.c.l.b16 %v2490
        %v2619 = vunpack.c.l.b16 %v2491
        %v2620 = vunpack.c.l.b16 %v2492
        %v2621 = vunpack.c.l.b16 %v2493
        %v2622 = vunpack.c.l.b16 %v2494
        %v2623 = vunpack.c.l.b16 %v2495
        %v2624 = vunpack.c.l.b16 %v2496
        %v2625 = vunpack.c.l.b16 %v2497
        %v2626 = vunpack.c.l.b16 %v2498
        %v2627 = vunpack.c.l.b16 %v2499
        %v2628 = vunpack.c.l.b16 %v2500
        %v2629 = vunpack.c.l.b16 %v2501
        %v2630 = vunpack.c.l.b16 %v2502
        %v2631 = vunpack.c.l.b16 %v2503
        %v2632 = vunpack.c.l.b16 %v2504
        %v2633 = vunpack.c.l.b16 %v2505
        %v2634 = vunpack.c.l.b16 %v2506
        %v2635 = vunpack.c.l.b16 %v2507
        %v2636 = vunpack.c.l.b16 %v2508
        %v2637 = vunpack.c.l.b16 %v2509
        %v2638 = vunpack.c.l.b16 %v2510
        %v2639 = vunpack.c.l.b16 %v2511
        %v2640 = vunpack.c.l.b16 %v2512
        %v2641 = vunpack.c.l.b16 %v2513
        %v2642 = vunpack.c.l.b16 %v2514
        %v2643 = vunpack.c.l.b16 %v2515
        %v2644 = vunpack.c.l.b16 %v2516
        %v2645 = vunpack.c.l.b16 %v2517
        %v2646 = vunpack.c.l.b16 %v2518
        %v2647 = vunpack.c.l.b16 %v2519
        %v2648 = vunpack.c.l.b16 %v2520
        %v2649 = vunpack.c.l.b16 %v2521
        %v2650 = vunpack.c.l.b16 %v2522
        %v2651 = vunpack.c.l.b16 %v2523
        %v2652 = vunpack.c.l.b16 %v2524
        %v2653 = vunpack.c.l.b16 %v2525
        %v2654 = vunpack.c.l.b16 %v2526
        %v2655 = vunpack.c.l.b16 %v2527
        %v2656 = vunpack.c.l.b16 %v2528
        %v2657 = vunpack.c.l.b16 %v2529
        %v2658 = vunpack.c.l.b16 %v2530
        %v2659 = vunpack.c.l.b16 %v2531
        %v2660 = vunpack.c.l.b16 %v2532
        %v2661 = vunpack.c.l.b16 %v2533
        %v2662 = vunpack.c.l.b16 %v2534
        %v2663 = vpack.c.b16 %v2600, %v2599
        %v2664 = vpack.c.b16 %v2602, %v2601
        %v2665 = vpack.c.b16 %v2604, %v2603
        %v2666 = vpack.c.b16 %v2606, %v2605
        %v2667 = vpack.c.b16 %v2608, %v2607
        %v2668 = vpack.c.b16 %v2610, %v2609
        %v2669 = vpack.c.b16 %v2612, %v2611
        %v2670 = vpack.c.b16 %v2614, %v2613
        %v2671 = vpack.c.b16 %v2616, %v2615
        %v2672 = vpack.c.b16 %v2618, %v2617
        %v2673 = vpack.c.b16 %v2620, %v2619
        %v2674 = vpack.c.b16 %v2622, %v2621
        %v2675 = vpack.c.b16 %v2624, %v2623
        %v2676 = vpack.c.b16 %v2626, %v2625
        %v2677 = vpack.c.b16 %v2628, %v2627
        %v2678 = vpack.c.b16 %v2630, %v2629
        %v2679 = vpack.c.b16 %v2632, %v2631
        %v2680 = vpack.c.b16 %v2634, %v2633
        %v2681 = vpack.c.b16 %v2636, %v2635
        %v2682 = vpack.c.b16 %v2638, %v2637
        %v2683 = vpack.c.b16 %v2640, %v2639
        %v2684 = vpack.c.b16 %v2642, %v2641
        %v2685 = vpack.c.b16 %v2644, %v2643
        %v2686 = vpack.c.b16 %v2646, %v2645
        %v2687 = vpack.c.b16 %v2648, %v2647
        %v2688 = vpack.c.b16 %v2650, %v2649
        %v2689 = vpack.c.b16 %v2652, %v2651
        %v2690 = vpack.c.b16 %v2654, %v2653
        %v2691 = vpack.c.b16 %v2656, %v2655
        %v2692 = vpack.c.b16 %v2658, %v2657
        %v2693 = vpack.c.b16 %v2660, %v2659
        %v2694 = vpack.c.b16 %v2662, %v2661
        %2727 = vmatprep.subr.bf16.mxu0 0
        %2728 = vmatpush1.bf16.msra.mxu0 %v2663
        %2729 = vmatprep.subr.bf16.mxu0 0
        %2730 = vmatpush1.bf16.msra.mxu0 %v2664
        %2731 = vmatprep.subr.bf16.mxu0 0
        %2732 = vmatpush1.bf16.msra.mxu0 %v2665
        %2733 = vmatprep.subr.bf16.mxu0 0
        %2734 = vmatpush1.bf16.msra.mxu0 %v2666
        %2735 = vmatprep.subr.bf16.mxu0 0
        %2736 = vmatpush1.bf16.msra.mxu0 %v2667
        %2737 = vmatprep.subr.bf16.mxu0 0
        %2738 = vmatpush1.bf16.msra.mxu0 %v2668
        %2739 = vmatprep.subr.bf16.mxu0 0
        %2740 = vmatpush1.bf16.msra.mxu0 %v2669
        %2741 = vmatprep.subr.bf16.mxu0 0
        %2742 = vmatpush1.bf16.msra.mxu0 %v2670
        %2743 = vmatprep.subr.bf16.mxu0 0
        %2744 = vmatpush1.bf16.msra.mxu0 %v2671
        %2745 = vmatprep.subr.bf16.mxu0 0
        %2746 = vmatpush1.bf16.msra.mxu0 %v2672
        %2747 = vmatprep.subr.bf16.mxu0 0
        %2748 = vmatpush1.bf16.msra.mxu0 %v2673
        %2749 = vmatprep.subr.bf16.mxu0 0
        %2750 = vmatpush1.bf16.msra.mxu0 %v2674
        %2751 = vmatprep.subr.bf16.mxu0 0
        %2752 = vmatpush1.bf16.msra.mxu0 %v2675
        %2753 = vmatprep.subr.bf16.mxu0 0
        %2754 = vmatpush1.bf16.msra.mxu0 %v2676
        %2755 = vmatprep.subr.bf16.mxu0 0
        %2756 = vmatpush1.bf16.msra.mxu0 %v2677
        %2757 = vmatprep.subr.bf16.mxu0 0
        %2758 = vmatpush1.bf16.msra.mxu0 %v2678
        %2759 = vmatprep.mubr.bf16.mxu0 %v2464
        %2760 = vmatmul.mubr.bf16.gmra.mrb[0].mxu0 %v2463
        %v2761 = vpop.f32.mrb[0].mxu0
        %v2762 = vadd.f32 0.0, %v2761
        %v2763 = vpop.f32.mrb[0].mxu0
        %v2764 = vpop.f32.mrb[0].mxu0
        %v2765 = vadd.f32 0.0, %v2764
        %v2766 = vpop.f32.mrb[0].mxu0
        %2767 = vmatprep.mubr.bf16.mxu0 %v2468
        %2768 = vmatmul.mubr.bf16.gmra.mrb[0].mxu0 %v2467
        %v2769 = vpop.f32.mrb[0].mxu0
        %v2770 = vadd.f32 0.0, %v2769
        %v2771 = vpop.f32.mrb[0].mxu0
        %v2772 = vpop.f32.mrb[0].mxu0
        %v2773 = vadd.f32 0.0, %v2772
        %v2774 = vpop.f32.mrb[0].mxu0
        %2775 = vdwg.mxu0
        %2776 = vmatprep.subr.bf16.mxu0 0
        %2777 = vmatpush1.bf16.msra.mxu0 %v2679
        %2778 = vmatprep.subr.bf16.mxu0 0
        %2779 = vmatpush1.bf16.msra.mxu0 %v2680
        %2780 = vmatprep.subr.bf16.mxu0 0
        %2781 = vmatpush1.bf16.msra.mxu0 %v2681
        %2782 = vmatprep.subr.bf16.mxu0 0
        %2783 = vmatpush1.bf16.msra.mxu0 %v2682
        %2784 = vmatprep.subr.bf16.mxu0 0
        %2785 = vmatpush1.bf16.msra.mxu0 %v2683
        %2786 = vmatprep.subr.bf16.mxu0 0
        %2787 = vmatpush1.bf16.msra.mxu0 %v2684
        %2788 = vmatprep.subr.bf16.mxu0 0
        %2789 = vmatpush1.bf16.msra.mxu0 %v2685
        %2790 = vmatprep.subr.bf16.mxu0 0
        %2791 = vmatpush1.bf16.msra.mxu0 %v2686
        %2792 = vmatprep.subr.bf16.mxu0 0
        %2793 = vmatpush1.bf16.msra.mxu0 %v2687
        %2794 = vmatprep.subr.bf16.mxu0 0
        %2795 = vmatpush1.bf16.msra.mxu0 %v2688
        %2796 = vmatprep.subr.bf16.mxu0 0
        %2797 = vmatpush1.bf16.msra.mxu0 %v2689
        %2798 = vmatprep.subr.bf16.mxu0 0
        %2799 = vmatpush1.bf16.msra.mxu0 %v2690
        %2800 = vmatprep.subr.bf16.mxu0 0
        %2801 = vmatpush1.bf16.msra.mxu0 %v2691
        %2802 = vmatprep.subr.bf16.mxu0 0
        %2803 = vmatpush1.bf16.msra.mxu0 %v2692
        %2804 = vmatprep.subr.bf16.mxu0 0
        %2805 = vmatpush1.bf16.msra.mxu0 %v2693
        %2806 = vmatprep.subr.bf16.mxu0 0
        %2807 = vmatpush1.bf16.msra.mxu0 %v2694
        %2808 = vmatprep.mubr.bf16.mxu0 %v2466
        %2809 = vmatmul.mubr.bf16.gmra.mrb[0].mxu0 %v2465
        %v2810 = vpop.f32.mrb[0].mxu0
        %v2811 = vadd.f32 %v2762, %v2810
        %v2812 = vpop.f32.mrb[0].mxu0
        %v2813 = vpop.f32.mrb[0].mxu0
        %v2814 = vadd.f32 %v2765, %v2813
        %v2815 = vpop.f32.mrb[0].mxu0
        %2816 = vmatprep.mubr.bf16.mxu0 %v2470
        %2817 = vmatmul.mubr.bf16.gmra.mrb[0].mxu0 %v2469
        %v2818 = vpop.f32.mrb[0].mxu0
        %v2819 = vadd.f32 %v2770, %v2818
        %v2820 = vpop.f32.mrb[0].mxu0
        %v2821 = vpop.f32.mrb[0].mxu0
        %v2822 = vadd.f32 %v2773, %v2821
        %v2823 = vpop.f32.mrb[0].mxu0
        %2824 = vdwg.mxu0
        %v2825 = vadd.f32 %v2055, %v2811
        %v2826 = vadd.f32 %v2056, %v2814
        %v2827 = vadd.f32 %v2057, %v2819
        %v2828 = vadd.f32 %v2058, %v2822
        %v2829 = vld [vmem:[%s807] sm:$0x1]
        %v2831 = vlaneseq
        %v2832 = vshrl.u32 %v2831, 7
        %v2833 = vsub.s32 0, %v2832
        %v2834 = vrot.slane %v2829, %v2833
        %v2836 = vadd.f32 %v2825, %v2834
        %v2837 = vadd.f32 %v2826, %v2834
        %v2838 = vadd.f32 %v2827, %v2834
        %v2839 = vadd.f32 %v2828, %v2834
        %2840 = vst [vmem:[#allocation2] sm:$0xff] %v2836
        %2841 = vst [vmem:[#allocation2 + $0x8] sm:$0xff] %v2837
        %2842 = vst [vmem:[#allocation2 + $0x10] sm:$0xff] %v2838
        %2843 = vst [vmem:[#allocation2 + $0x18] sm:$0xff] %v2839
        %p2844 = scmp.eq.s32.totalorder %s31, 1
        // Predicated region
        $region121: #{tpu_custom_call.1} parent=87 // pred_check
          %p2845 = pneg %p2844
        $region122: #{tpu_custom_call.1} parent=87 // pred_check_branch
          %2847 = sbr.rel (%p2845) target = $region124
        $region123: #{tpu_custom_call.1} parent=87 // pred_region
          %v2848 = vld [vmem:[%s13] sm:$0x1]
          %v2849 = vld [vmem:[%s14] sm:$0x1]
          %2850 = vadd.xlane.f32.xlu0 %v2836
          %v2851 = vpop.xlane.xlu0 %2850
          %2852 = vadd.xlane.f32.xlu0 %v2837
          %v2853 = vpop.xlane.xlu0 %2852
          %2854 = vadd.xlane.f32.xlu0 %v2838
          %v2855 = vpop.xlane.xlu0 %2854
          %2856 = vadd.xlane.f32.xlu0 %v2839
          %v2857 = vpop.xlane.xlu0 %2856
          %v2858 = vmul.f32 %v2851, %v839
          %v2859 = vmul.f32 %v2853, %v839
          %v2860 = vmul.f32 %v2855, %v839
          %v2861 = vmul.f32 %v2857, %v839
          %v2862 = vsub.f32 %v2836, %v2858
          %v2863 = vsub.f32 %v2837, %v2859
          %v2864 = vsub.f32 %v2838, %v2860
          %v2865 = vsub.f32 %v2839, %v2861
          %v2866 = vmul.f32 %v2862, %v2862
          %v2867 = vmul.f32 %v2863, %v2863
          %v2868 = vmul.f32 %v2864, %v2864
          %v2869 = vmul.f32 %v2865, %v2865
          %2870 = vadd.xlane.f32.xlu0 %v2866
          %v2871 = vpop.xlane.xlu0 %2870
          %2872 = vadd.xlane.f32.xlu0 %v2867
          %v2873 = vpop.xlane.xlu0 %2872
          %2874 = vadd.xlane.f32.xlu0 %v2868
          %v2875 = vpop.xlane.xlu0 %2874
          %2876 = vadd.xlane.f32.xlu0 %v2869
          %v2877 = vpop.xlane.xlu0 %2876
          %v2878 = vmul.f32 %v2871, %v839
          %v2879 = vmul.f32 %v2873, %v839
          %v2880 = vmul.f32 %v2875, %v839
          %v2881 = vmul.f32 %v2877, %v839
          %v2882 = vadd.f32 %v2878, 1e-05
          %v2883 = vadd.f32 %v2879, 1e-05
          %v2884 = vadd.f32 %v2880, 1e-05
          %v2885 = vadd.f32 %v2881, 1e-05
          %v2886 = vrsqrt.pop %v2882
          %v2887 = vrsqrt.pop %v2883
          %v2888 = vrsqrt.pop %v2884
          %v2889 = vrsqrt.pop %v2885
          %v2890 = vmul.f32 %v2862, %v2886
          %v2891 = vmul.f32 %v2863, %v2887
          %v2892 = vmul.f32 %v2864, %v2888
          %v2893 = vmul.f32 %v2865, %v2889
          %v2895 = vlaneseq
          %v2896 = vshrl.u32 %v2895, 7
          %v2897 = vsub.s32 0, %v2896
          %v2898 = vrot.slane %v2848, %v2897
          %v2900 = vmul.f32 %v2890, %v2898
          %v2901 = vmul.f32 %v2891, %v2898
          %v2902 = vmul.f32 %v2892, %v2898
          %v2903 = vmul.f32 %v2893, %v2898
          %v2905 = vlaneseq
          %v2906 = vshrl.u32 %v2905, 7
          %v2907 = vsub.s32 0, %v2906
          %v2908 = vrot.slane %v2849, %v2907
          %v2910 = vadd.f32 %v2900, %v2908
          %v2911 = vadd.f32 %v2901, %v2908
          %v2912 = vadd.f32 %v2902, %v2908
          %v2913 = vadd.f32 %v2903, %v2908
          %v2914 = vpack.c.bf16 %v2911, %v2910
          %v2915 = vpack.c.bf16 %v2913, %v2912
          %v2916 = vld [vmem:[#allocation12] sm:$0xf]
          %v2917 = vld [vmem:[#allocation12 + $0x4] sm:$0xf]
          %v2918 = vld [vmem:[#allocation12 + $0x8] sm:$0xf]
          %v2919 = vld [vmem:[#allocation12 + $0xc] sm:$0xf]
          %v2920 = vld [vmem:[#allocation12 + $0x10] sm:$0xf]
          %v2921 = vld [vmem:[#allocation12 + $0x14] sm:$0xf]
          %v2922 = vld [vmem:[#allocation12 + $0x18] sm:$0xf]
          %v2923 = vld [vmem:[#allocation12 + $0x1c] sm:$0xf]
          %v2924 = vld [vmem:[#allocation12 + $0x20] sm:$0xf]
          %v2925 = vld [vmem:[#allocation12 + $0x24] sm:$0xf]
          %v2926 = vld [vmem:[#allocation12 + $0x28] sm:$0xf]
          %v2927 = vld [vmem:[#allocation12 + $0x2c] sm:$0xf]
          %v2928 = vld [vmem:[#allocation12 + $0x30] sm:$0xf]
          %v2929 = vld [vmem:[#allocation12 + $0x34] sm:$0xf]
          %v2930 = vld [vmem:[#allocation12 + $0x38] sm:$0xf]
          %v2931 = vld [vmem:[#allocation12 + $0x3c] sm:$0xf]
          %v2932 = vld [vmem:[%s16] sm:$0x1]
          %v2934 = vlaneseq
          %v2935 = vshrl.u32 %v2934, 7
          %v2936 = vsub.s32 0, %v2935
          %v2937 = vrot.slane %v2932, %v2936
          %v2955 = vunpack.c.l.b16 %v2916
          %v2956 = vunpack.c.l.b16 %v2917
          %v2957 = vunpack.c.l.b16 %v2918
          %v2958 = vunpack.c.l.b16 %v2919
          %v2959 = vunpack.c.l.b16 %v2920
          %v2960 = vunpack.c.l.b16 %v2921
          %v2961 = vunpack.c.l.b16 %v2922
          %v2962 = vunpack.c.l.b16 %v2923
          %v2963 = vunpack.c.l.b16 %v2924
          %v2964 = vunpack.c.l.b16 %v2925
          %v2965 = vunpack.c.l.b16 %v2926
          %v2966 = vunpack.c.l.b16 %v2927
          %v2967 = vunpack.c.l.b16 %v2928
          %v2968 = vunpack.c.l.b16 %v2929
          %v2969 = vunpack.c.l.b16 %v2930
          %v2970 = vunpack.c.l.b16 %v2931
          %v2971 = vpack.c.b16 %v2956, %v2955
          %v2972 = vpack.c.b16 %v2958, %v2957
          %v2973 = vpack.c.b16 %v2960, %v2959
          %v2974 = vpack.c.b16 %v2962, %v2961
          %v2975 = vpack.c.b16 %v2964, %v2963
          %v2976 = vpack.c.b16 %v2966, %v2965
          %v2977 = vpack.c.b16 %v2968, %v2967
          %v2978 = vpack.c.b16 %v2970, %v2969
          %2987 = vmatprep.subr.bf16.mxu0 0
          %2988 = vmatpush1.bf16.msra.mxu0 %v2971
          %2989 = vmatprep.subr.bf16.mxu0 0
          %2990 = vmatpush1.bf16.msra.mxu0 %v2972
          %2991 = vmatprep.subr.bf16.mxu0 0
          %2992 = vmatpush1.bf16.msra.mxu0 %v2973
          %2993 = vmatprep.subr.bf16.mxu0 0
          %2994 = vmatpush1.bf16.msra.mxu0 %v2974
          %2995 = vmatprep.subr.bf16.mxu0 0
          %2996 = vmatpush1.bf16.msra.mxu0 %v2975
          %2997 = vmatprep.subr.bf16.mxu0 0
          %2998 = vmatpush1.bf16.msra.mxu0 %v2976
          %2999 = vmatprep.subr.bf16.mxu0 0
          %3000 = vmatpush1.bf16.msra.mxu0 %v2977
          %3001 = vmatprep.subr.bf16.mxu0 0
          %3002 = vmatpush1.bf16.msra.mxu0 %v2978
          %3003 = vmatprep.subr.bf16.mxu0 0
          %3004 = vmatpush1.bf16.msra.mxu0 0
          %3005 = vmatprep.subr.bf16.mxu0 0
          %3006 = vmatpush1.bf16.msra.mxu0 0
          %3007 = vmatprep.subr.bf16.mxu0 0
          %3008 = vmatpush1.bf16.msra.mxu0 0
          %3009 = vmatprep.subr.bf16.mxu0 0
          %3010 = vmatpush1.bf16.msra.mxu0 0
          %3011 = vmatprep.subr.bf16.mxu0 0
          %3012 = vmatpush1.bf16.msra.mxu0 0
          %3013 = vmatprep.subr.bf16.mxu0 0
          %3014 = vmatpush1.bf16.msra.mxu0 0
          %3015 = vmatprep.subr.bf16.mxu0 0
          %3016 = vmatpush1.bf16.msra.mxu0 0
          %3017 = vmatprep.subr.bf16.mxu0 0
          %3018 = vmatpush1.bf16.msra.mxu0 0
          %3019 = vmatprep.mubr.bf16.mxu0 0
          %3020 = vmatmul.mubr.bf16.gmra.mrb[0].mxu0 %v2914
          %v3021 = vpop.f32.mrb[0].mxu0
          %v3022 = vadd.f32 %v2937, %v3021
          %v3023 = vpop.f32.mrb[0].mxu0
          %v3024 = vpop.f32.mrb[0].mxu0
          %v3025 = vadd.f32 %v2937, %v3024
          %v3026 = vpop.f32.mrb[0].mxu0
          %3027 = vmatprep.mubr.bf16.mxu0 0
          %3028 = vmatmul.mubr.bf16.gmra.mrb[0].mxu0 %v2915
          %v3029 = vpop.f32.mrb[0].mxu0
          %v3030 = vadd.f32 %v2937, %v3029
          %v3031 = vpop.f32.mrb[0].mxu0
          %v3032 = vpop.f32.mrb[0].mxu0
          %v3033 = vadd.f32 %v2937, %v3032
          %v3034 = vpop.f32.mrb[0].mxu0
          %3035 = vdwg.mxu0
          %3036 = vst [vmem:[#allocation13] sm:$0xff] %v3022
          %3037 = vst [vmem:[#allocation13 + $0x8] sm:$0xff] %v3025
          %3038 = vst [vmem:[#allocation13 + $0x10] sm:$0xff] %v3030
          %3039 = vst [vmem:[#allocation13 + $0x18] sm:$0xff] %v3033
        $region124: #{tpu_custom_call.1} parent=87 // pred_fallthru
          _
        // Predicated region
        $region125: #{tpu_custom_call.1} parent=87 // pred_check
          %p3040 = pneg %p456
        $region126: #{tpu_custom_call.1} parent=87 // pred_check_branch
          %3042 = sbr.rel (%p3040) target = $region128
        $region127: #{tpu_custom_call.1} parent=87 // pred_region
          %s3044 = ssub.s32 512, 512
          %3045 = vsyncadd [#allocation5], %s3044
          %s3046 = sshll.u32 [#allocation13], 4
          %s3047 = int_to_ptr.vmem [resolvable:$true] %s3046
          %3052 = dma.vmem_to_hbm [thread:$0]  %s3047, 512, %s17, [#allocation5], 128, 128, 8
        $region128: #{tpu_custom_call.1} parent=87 // pred_fallthru
          _
        // Predicated region
        $region129: #{tpu_custom_call.1} parent=87 // pred_check
          %p3053 = pneg %p456
        $region130: #{tpu_custom_call.1} parent=87 // pred_check_branch
          %3055 = sbr.rel (%p3053) target = $region132
        $region131: #{tpu_custom_call.1} parent=87 // pred_region
          %3056 = dma.done [#allocation5], 512
        $region132: #{tpu_custom_call.1} parent=87 // pred_fallthru
          _
      $region88: #{tpu_custom_call.1} parent=5 // pred_fallthru
        _
      %p3057 = scmp.le.s32.totalorder 2, %s26
      // Predicated region
      $region133: #{tpu_custom_call.1} parent=5 // pred_check
        %p3058 = pneg %p3057
      $region134: #{tpu_custom_call.1} parent=5 // pred_check_branch
        %3060 = sbr.rel (%p3058) target = $region136
      $region135: #{tpu_custom_call.1} parent=5 // pred_region
        %s3061 = ssub.s32 %s26, 2
      $region136: #{tpu_custom_call.1} parent=5 // pred_fallthru
        _
    $region6: #{tpu_custom_call.1} parent=1 // loop_footer
      %s30 = sadd.s32 1, %s26
    $region7: #{tpu_custom_call.1} parent=1 // loop_footer_branch
      %25 = sbr.rel target = $region3
    $region8: #{tpu_custom_call.1} parent=1 // loop_exit
      _
    %3062 = vsyncpa [#allocation4], 1
    %s3063 = scalar_lea.sflag [#allocation4], 1
    %3064 = vsyncpa %s3063, 1
    %3065 = vsyncpa [#allocation7], 1
    %3066 = vsyncpa [#allocation5], 1
    %s3067 = scalar_lea.sflag [#allocation5], 1
    %3068 = vsyncpa %s3067, 1

</llo_original>
